<compile_context>
chip_gen: v6e
topology: v6e:2x2x1
jax: 0.10.0
libtpu: 0.0.40
codegen_flags: <defaults>
</compile_context>

<pallas_src>
from functools import partial

import jax
import jax.numpy as jnp
from jax import lax
from jax.experimental import pallas as pl
from jax.experimental.pallas import tpu as pltpu

NODES = 9        # nodes per graph (fixed by the module: reshape(B*9, d_model))
NUM_OPS = 7      # Embedding(7, d_model)


# ---------------------------------------------------------------------------
# Single fused Pallas kernel: embedding -> GCN stack -> linear head + sigmoid
# One grid step processes GB graphs (their 9x9 adjacency blocks).
# ---------------------------------------------------------------------------
def backbone_kernel(idx_ref, a_ref, emb_ref, dev_ref,
                    gcn_w_ref, w1_ref, w2_ref, fc_w_ref, fc_b_ref,
                    o_ref):
    gb = a_ref.shape[0]            # graphs per grid step
    d = emb_ref.shape[1]           # d_model
    num_layers = gcn_w_ref.shape[0]
    f32, bf16 = jnp.float32, jnp.bfloat16

    # ---- op-embedding gather: 7 VPU selects, + device embedding ----
    idx = idx_ref[...]                                   # (GB, 9, 1) int32
    emb = emb_ref[...].reshape(1, NUM_OPS, d)            # (1, 7, D) f32
    h = jnp.zeros((gb, NODES, d), f32)
    for k in range(NUM_OPS):                             # static 7-way select
        h = jnp.where(idx == k, emb[:, k:k + 1, :], h)   # (GB,9,1)x(1,1,D)
    h = h + dev_ref[...].reshape(1, 1, d)                # device embedding

    # ---- adjacency row-sum reciprocal: loop-invariant, EUP approx recip ----
    a = a_ref[...]                                       # (GB, 9, 9) bf16
    row_sum = jnp.sum(a.astype(f32), axis=-1, keepdims=True)
    inv_row = pl.reciprocal(row_sum + 1e-6, approx=True) # (GB, 9, 1)

    # ---- GCN stack, fully resident H; weights indexed from stacked refs ----
    def layer(l, h):
        w = jnp.broadcast_to(gcn_w_ref[l], (gb, d, d))   # bf16 (GB, D, D)
        w1 = jnp.broadcast_to(w1_ref[l], (gb, d, d))
        w2 = jnp.broadcast_to(w2_ref[l], (gb, d, d))
        # message passing on raw 0/1 adjacency; row-norm applied to the result
        agg = jnp.einsum('bij,bjd->bid', a, h.astype(bf16),
                         preferred_element_type=f32) * inv_row
        msg = jnp.einsum('bnd,bde->bne', agg.astype(bf16), w,
                         preferred_element_type=f32)
        h = jnp.maximum(msg, 0.0) + h                    # ReLU + residual
        mean = jnp.mean(h, axis=-1, keepdims=True)       # LayerNorm (f32)
        c = h - mean
        var = jnp.mean(c * c, axis=-1, keepdims=True)
        h = c * lax.rsqrt(var + 1e-5)
        z = jnp.maximum(jnp.einsum('bnd,bde->bne', h.astype(bf16), w1,
                                   preferred_element_type=f32), 0.0)
        ffn = jnp.einsum('bnd,bde->bne', z.astype(bf16), w2,
                         preferred_element_type=f32)
        return h + ffn                                   # residual FFN

    h = lax.fori_loop(0, num_layers, layer, h, unroll=True)

    # ---- head: Linear(D, 1) + sigmoid as a lane reduce (bias in SMEM) ----
    logits = jnp.sum(h * fc_w_ref[...].reshape(1, 1, d), axis=-1,
                     keepdims=True) + fc_b_ref[0]
    o_ref[...] = jax.nn.sigmoid(logits)


# ---------------------------------------------------------------------------
# Wrapper: one pallas_call for the whole forward, grid over graph tiles.
# ---------------------------------------------------------------------------
def _resident(shape):
    # Full-array block with a constant index_map: resident in VMEM across steps.
    nd = len(shape)
    return pl.BlockSpec(shape, lambda i, _nd=nd: (0,) * _nd)


@partial(jax.jit, static_argnames=("graphs_per_step",))
def backbone_forward(params, graph, op_idx, *, graphs_per_step=64):
    """graph: (B, 9, 9) per-graph adjacency blocks; op_idx: (B, 9) int."""
    op_emb, dev_emb, gcn_w, ffn_w1, ffn_w2, fc_w, fc_b = params
    b = op_idx.shape[0]
    d = op_emb.shape[1]

    gb = max(1, min(graphs_per_step, b))
    bp = ((b + gb - 1) // gb) * gb                      # pad to multiple of gb

    idx = op_idx.reshape(b, NODES, 1).astype(jnp.int32)
    a = graph.astype(jnp.bfloat16)                      # 0/1 exact in bf16
    if bp != b:
        idx = jnp.pad(idx, ((0, bp - b), (0, 0), (0, 0)))
        a = jnp.pad(a, ((0, bp - b), (0, 0), (0, 0)))

    out = pl.pallas_call(
        backbone_kernel,
        out_shape=jax.ShapeDtypeStruct((bp, NODES, 1), jnp.float32),
        grid=(bp // gb,),
        in_specs=[
            pl.BlockSpec((gb, NODES, 1), lambda i: (i, 0, 0)),      # op indices
            pl.BlockSpec((gb, NODES, NODES), lambda i: (i, 0, 0)),  # adjacency
            _resident(op_emb.shape),                                # (7, D)
            _resident(dev_emb.shape),                               # (1, D)
            _resident(gcn_w.shape),                                 # (L, D, D)
            _resident(ffn_w1.shape),                                # (L, D, D)
            _resident(ffn_w2.shape),                                # (L, D, D)
            _resident((1, d)),                                      # fc_w row
            pl.BlockSpec(memory_space=pltpu.MemorySpace.SMEM),      # (1,) bias
        ],
        out_specs=pl.BlockSpec((gb, NODES, 1), lambda i: (i, 0, 0)),
        compiler_params=pltpu.CompilerParams(
            dimension_semantics=("parallel",)),
    )(idx, a, op_emb, dev_emb,
      gcn_w.astype(jnp.bfloat16), ffn_w1.astype(jnp.bfloat16),
      ffn_w2.astype(jnp.bfloat16), fc_w.reshape(1, d), fc_b)

    return out[:b].reshape(b * NODES, 1)


# ---------------------------------------------------------------------------
# Pure-JAX reference (f32, exact division) for validation
# ---------------------------------------------------------------------------
def backbone_reference(params, graph, op_idx):
    op_emb, dev_emb, gcn_w, ffn_w1, ffn_w2, fc_w, fc_b = params
    b = op_idx.shape[0]
    h = op_emb[op_idx.reshape(-1)].reshape(b, NODES, -1) + dev_emb
    a_norm = graph / (jnp.sum(graph, axis=-1, keepdims=True) + 1e-6)
    for l in range(gcn_w.shape[0]):
        msg = jnp.einsum('bij,bjd->bid', a_norm, h) @ gcn_w[l]
        h = jnp.maximum(msg, 0.0) + h
        mean = jnp.mean(h, axis=-1, keepdims=True)
        c = h - mean
        var = jnp.mean(c * c, axis=-1, keepdims=True)
        h = c * lax.rsqrt(var + 1e-5)
        h = h + jnp.maximum(h @ ffn_w1[l], 0.0) @ ffn_w2[l]
    y = jax.nn.sigmoid(h @ fc_w + fc_b)
    return y.reshape(b * NODES, 1)


if __name__ == "__main__":
    batch = 8          # graphs
    d_model = 32
    num_layers = 2

    key = jax.random.PRNGKey(0)
    ks = jax.random.split(key, 8)
    s = 1.0 / float(d_model) ** 0.5

    op_emb = jax.random.normal(ks[0], (NUM_OPS, d_model), jnp.float32)
    dev_emb = jax.random.normal(ks[1], (1, d_model), jnp.float32)
    gcn_w = jax.random.normal(ks[2], (num_layers, d_model, d_model), jnp.float32) * s
    ffn_w1 = jax.random.normal(ks[3], (num_layers, d_model, d_model), jnp.float32) * s
    ffn_w2 = jax.random.normal(ks[4], (num_layers, d_model, d_model), jnp.float32) * s
    fc_w = jax.random.normal(ks[5], (d_model, 1), jnp.float32) * 0.1
    fc_b = jnp.zeros((1,), jnp.float32)
    params = (op_emb, dev_emb, gcn_w, ffn_w1, ffn_w2, fc_w, fc_b)

    # op indices in [0, 7), shape (batch, 9)
    op_idx = jax.random.randint(ks[6], (batch, NODES), 0, NUM_OPS, dtype=jnp.int32)

    # per-graph symmetric 9x9 adjacency blocks with self-loops, float32 (B, 9, 9)
    rnd = (jax.random.uniform(ks[7], (batch, NODES, NODES)) > 0.6).astype(jnp.float32)
    graph = jnp.clip(rnd + jnp.swapaxes(rnd, -1, -2)
                     + jnp.eye(NODES, dtype=jnp.float32)[None], 0.0, 1.0)

    y = backbone_forward(params, graph, op_idx, graphs_per_step=4)  # 2 grid steps
    y = jax.block_until_ready(y)

    y_ref = backbone_reference(params, graph, op_idx)
    assert y.shape == (batch * NODES, 1), y.shape
    assert bool(jnp.all(jnp.isfinite(y)))
    assert bool(jnp.all((y >= 0.0) & (y <= 1.0)))
    # bf16 matmul operands + approx row-sum reciprocal vs. exact f32 reference.
    err = float(jnp.max(jnp.abs(y - y_ref)))
    assert err < 3e-2, err
    print("KERNEL_OK")
</pallas_src>

<mosaic_0001>
module attributes {stable_mosaic.version = 11 : i64} {
  func.func @backbone_kernel(%arg0: i32, %arg1: memref<4x9x1xi32, #tpu.memory_space<vmem>>, %arg2: memref<4x9x9xbf16, #tpu.memory_space<vmem>>, %arg3: memref<7x32xf32, #tpu.memory_space<vmem>>, %arg4: memref<1x32xf32, #tpu.memory_space<vmem>>, %arg5: memref<2x32x32xbf16, #tpu.memory_space<vmem>>, %arg6: memref<2x32x32xbf16, #tpu.memory_space<vmem>>, %arg7: memref<2x32x32xbf16, #tpu.memory_space<vmem>>, %arg8: memref<1x32xf32, #tpu.memory_space<vmem>>, %arg9: memref<1xf32, #tpu.memory_space<smem>>, %arg10: memref<4x9x1xf32, #tpu.memory_space<vmem>>) attributes {dimension_semantics = [#tpu.dimension_semantics<parallel>], iteration_bounds = array<i64: 2>, scalar_prefetch = 0 : i64, scratch_operands = 0 : i64, tpu.core_type = #tpu.core_type<tc>, window_params = [{transform_indices = @transform_0, window_bounds = array<i64: 4, 9, 1>}, {transform_indices = @transform_1, window_bounds = array<i64: 4, 9, 9>}, {pipeline_mode = #tpu.pipeline_mode<synchronous>, transform_indices = @transform_2, window_bounds = array<i64: 7, 32>}, {pipeline_mode = #tpu.pipeline_mode<synchronous>, transform_indices = @transform_3, window_bounds = array<i64: 1, 32>}, {pipeline_mode = #tpu.pipeline_mode<synchronous>, transform_indices = @transform_4, window_bounds = array<i64: 2, 32, 32>}, {pipeline_mode = #tpu.pipeline_mode<synchronous>, transform_indices = @transform_5, window_bounds = array<i64: 2, 32, 32>}, {pipeline_mode = #tpu.pipeline_mode<synchronous>, transform_indices = @transform_6, window_bounds = array<i64: 2, 32, 32>}, {pipeline_mode = #tpu.pipeline_mode<synchronous>, transform_indices = @transform_7, window_bounds = array<i64: 1, 32>}, {transform_indices = @transform_8, window_bounds = array<i64: 1>}, {transform_indices = @transform_9, window_bounds = array<i64: 4, 9, 1>}]} {
    %c0 = arith.constant 0 : index
    %c0_0 = arith.constant 0 : index
    %c0_1 = arith.constant 0 : index
    %0 = vector.load %arg1[%c0, %c0_0, %c0_1] : memref<4x9x1xi32, #tpu.memory_space<vmem>>, vector<4x9x1xi32>
    %c0_2 = arith.constant 0 : index
    %c0_3 = arith.constant 0 : index
    %1 = vector.load %arg3[%c0_2, %c0_3] : memref<7x32xf32, #tpu.memory_space<vmem>>, vector<7x32xf32>
    %2 = vector.shape_cast %1 : vector<7x32xf32> to vector<1x7x32xf32>
    %cst = arith.constant 0.000000e+00 : f32
    %3 = vector.broadcast %cst : f32 to vector<4x9x32xf32>
    %c0_i32 = arith.constant 0 : i32
    %4 = vector.broadcast %c0_i32 : i32 to vector<4x9x1xi32>
    %5 = arith.cmpi eq, %0, %4 : vector<4x9x1xi32>
    %6 = vector.extract_strided_slice %2 {offsets = [0, 0, 0], sizes = [1, 1, 32], strides = [1, 1, 1]} : vector<1x7x32xf32> to vector<1x1x32xf32>
    %7 = vector.shape_cast %5 : vector<4x9x1xi1> to vector<4x9x1xi1>
    %8 = vector.broadcast %7 : vector<4x9x1xi1> to vector<4x9x32xi1>
    %9 = vector.shape_cast %6 : vector<1x1x32xf32> to vector<1x1x32xf32>
    %10 = vector.broadcast %9 : vector<1x1x32xf32> to vector<4x9x32xf32>
    %11 = arith.select %8, %10, %3 : vector<4x9x32xi1>, vector<4x9x32xf32>
    %c1_i32 = arith.constant 1 : i32
    %12 = vector.broadcast %c1_i32 : i32 to vector<4x9x1xi32>
    %13 = arith.cmpi eq, %0, %12 : vector<4x9x1xi32>
    %14 = vector.extract_strided_slice %2 {offsets = [0, 1, 0], sizes = [1, 1, 32], strides = [1, 1, 1]} : vector<1x7x32xf32> to vector<1x1x32xf32>
    %15 = vector.shape_cast %13 : vector<4x9x1xi1> to vector<4x9x1xi1>
    %16 = vector.broadcast %15 : vector<4x9x1xi1> to vector<4x9x32xi1>
    %17 = vector.shape_cast %14 : vector<1x1x32xf32> to vector<1x1x32xf32>
    %18 = vector.broadcast %17 : vector<1x1x32xf32> to vector<4x9x32xf32>
    %19 = arith.select %16, %18, %11 : vector<4x9x32xi1>, vector<4x9x32xf32>
    %c2_i32 = arith.constant 2 : i32
    %20 = vector.broadcast %c2_i32 : i32 to vector<4x9x1xi32>
    %21 = arith.cmpi eq, %0, %20 : vector<4x9x1xi32>
    %22 = vector.extract_strided_slice %2 {offsets = [0, 2, 0], sizes = [1, 1, 32], strides = [1, 1, 1]} : vector<1x7x32xf32> to vector<1x1x32xf32>
    %23 = vector.shape_cast %21 : vector<4x9x1xi1> to vector<4x9x1xi1>
    %24 = vector.broadcast %23 : vector<4x9x1xi1> to vector<4x9x32xi1>
    %25 = vector.shape_cast %22 : vector<1x1x32xf32> to vector<1x1x32xf32>
    %26 = vector.broadcast %25 : vector<1x1x32xf32> to vector<4x9x32xf32>
    %27 = arith.select %24, %26, %19 : vector<4x9x32xi1>, vector<4x9x32xf32>
    %c3_i32 = arith.constant 3 : i32
    %28 = vector.broadcast %c3_i32 : i32 to vector<4x9x1xi32>
    %29 = arith.cmpi eq, %0, %28 : vector<4x9x1xi32>
    %30 = vector.extract_strided_slice %2 {offsets = [0, 3, 0], sizes = [1, 1, 32], strides = [1, 1, 1]} : vector<1x7x32xf32> to vector<1x1x32xf32>
    %31 = vector.shape_cast %29 : vector<4x9x1xi1> to vector<4x9x1xi1>
    %32 = vector.broadcast %31 : vector<4x9x1xi1> to vector<4x9x32xi1>
    %33 = vector.shape_cast %30 : vector<1x1x32xf32> to vector<1x1x32xf32>
    %34 = vector.broadcast %33 : vector<1x1x32xf32> to vector<4x9x32xf32>
    %35 = arith.select %32, %34, %27 : vector<4x9x32xi1>, vector<4x9x32xf32>
    %c4_i32 = arith.constant 4 : i32
    %36 = vector.broadcast %c4_i32 : i32 to vector<4x9x1xi32>
    %37 = arith.cmpi eq, %0, %36 : vector<4x9x1xi32>
    %38 = vector.extract_strided_slice %2 {offsets = [0, 4, 0], sizes = [1, 1, 32], strides = [1, 1, 1]} : vector<1x7x32xf32> to vector<1x1x32xf32>
    %39 = vector.shape_cast %37 : vector<4x9x1xi1> to vector<4x9x1xi1>
    %40 = vector.broadcast %39 : vector<4x9x1xi1> to vector<4x9x32xi1>
    %41 = vector.shape_cast %38 : vector<1x1x32xf32> to vector<1x1x32xf32>
    %42 = vector.broadcast %41 : vector<1x1x32xf32> to vector<4x9x32xf32>
    %43 = arith.select %40, %42, %35 : vector<4x9x32xi1>, vector<4x9x32xf32>
    %c5_i32 = arith.constant 5 : i32
    %44 = vector.broadcast %c5_i32 : i32 to vector<4x9x1xi32>
    %45 = arith.cmpi eq, %0, %44 : vector<4x9x1xi32>
    %46 = vector.extract_strided_slice %2 {offsets = [0, 5, 0], sizes = [1, 1, 32], strides = [1, 1, 1]} : vector<1x7x32xf32> to vector<1x1x32xf32>
    %47 = vector.shape_cast %45 : vector<4x9x1xi1> to vector<4x9x1xi1>
    %48 = vector.broadcast %47 : vector<4x9x1xi1> to vector<4x9x32xi1>
    %49 = vector.shape_cast %46 : vector<1x1x32xf32> to vector<1x1x32xf32>
    %50 = vector.broadcast %49 : vector<1x1x32xf32> to vector<4x9x32xf32>
    %51 = arith.select %48, %50, %43 : vector<4x9x32xi1>, vector<4x9x32xf32>
    %c6_i32 = arith.constant 6 : i32
    %52 = vector.broadcast %c6_i32 : i32 to vector<4x9x1xi32>
    %53 = arith.cmpi eq, %0, %52 : vector<4x9x1xi32>
    %54 = vector.extract_strided_slice %2 {offsets = [0, 6, 0], sizes = [1, 1, 32], strides = [1, 1, 1]} : vector<1x7x32xf32> to vector<1x1x32xf32>
    %55 = vector.shape_cast %53 : vector<4x9x1xi1> to vector<4x9x1xi1>
    %56 = vector.broadcast %55 : vector<4x9x1xi1> to vector<4x9x32xi1>
    %57 = vector.shape_cast %54 : vector<1x1x32xf32> to vector<1x1x32xf32>
    %58 = vector.broadcast %57 : vector<1x1x32xf32> to vector<4x9x32xf32>
    %59 = arith.select %56, %58, %51 : vector<4x9x32xi1>, vector<4x9x32xf32>
    %c0_4 = arith.constant 0 : index
    %c0_5 = arith.constant 0 : index
    %60 = vector.load %arg4[%c0_4, %c0_5] : memref<1x32xf32, #tpu.memory_space<vmem>>, vector<1x32xf32>
    %61 = vector.shape_cast %60 : vector<1x32xf32> to vector<1x1x32xf32>
    %62 = vector.broadcast %61 : vector<1x1x32xf32> to vector<4x9x32xf32>
    %63 = arith.addf %59, %62 : vector<4x9x32xf32>
    %c0_6 = arith.constant 0 : index
    %c0_7 = arith.constant 0 : index
    %c0_8 = arith.constant 0 : index
    %64 = vector.load %arg2[%c0_6, %c0_7, %c0_8] : memref<4x9x9xbf16, #tpu.memory_space<vmem>>, vector<4x9x9xbf16>
    %65 = arith.extf %64 : vector<4x9x9xbf16> to vector<4x9x9xf32>
    %cst_9 = arith.constant dense<0.000000e+00> : vector<4x9xf32>
    %66 = vector.multi_reduction <add>, %65, %cst_9 [2] : vector<4x9x9xf32> to vector<4x9xf32>
    %67 = vector.shape_cast %66 : vector<4x9xf32> to vector<4x9x1xf32>
    %cst_10 = arith.constant 9.99999997E-7 : f32
    %68 = vector.broadcast %cst_10 : f32 to vector<4x9x1xf32>
    %69 = arith.addf %67, %68 : vector<4x9x1xf32>
    %70 = tpu.reciprocal %69 {approx = true} : vector<4x9x1xf32> -> vector<4x9x1xf32>
    %c0_i32_11 = arith.constant 0 : i32
    %71 = arith.index_cast %c0_i32_11 : i32 to index
    %c0_12 = arith.constant 0 : index
    %c0_13 = arith.constant 0 : index
    %72 = vector.load %arg5[%71, %c0_12, %c0_13] : memref<2x32x32xbf16, #tpu.memory_space<vmem>>, vector<1x32x32xbf16>
    %73 = vector.shape_cast %72 : vector<1x32x32xbf16> to vector<32x32xbf16>
    %74 = vector.shape_cast %73 : vector<32x32xbf16> to vector<1x32x32xbf16>
    %75 = vector.broadcast %74 : vector<1x32x32xbf16> to vector<4x32x32xbf16>
    %76 = arith.index_cast %c0_i32_11 : i32 to index
    %c0_14 = arith.constant 0 : index
    %c0_15 = arith.constant 0 : index
    %77 = vector.load %arg6[%76, %c0_14, %c0_15] : memref<2x32x32xbf16, #tpu.memory_space<vmem>>, vector<1x32x32xbf16>
    %78 = vector.shape_cast %77 : vector<1x32x32xbf16> to vector<32x32xbf16>
    %79 = vector.shape_cast %78 : vector<32x32xbf16> to vector<1x32x32xbf16>
    %80 = vector.broadcast %79 : vector<1x32x32xbf16> to vector<4x32x32xbf16>
    %81 = arith.index_cast %c0_i32_11 : i32 to index
    %c0_16 = arith.constant 0 : index
    %c0_17 = arith.constant 0 : index
    %82 = vector.load %arg7[%81, %c0_16, %c0_17] : memref<2x32x32xbf16, #tpu.memory_space<vmem>>, vector<1x32x32xbf16>
    %83 = vector.shape_cast %82 : vector<1x32x32xbf16> to vector<32x32xbf16>
    %84 = vector.shape_cast %83 : vector<32x32xbf16> to vector<1x32x32xbf16>
    %85 = vector.broadcast %84 : vector<1x32x32xbf16> to vector<4x32x32xbf16>
    %86 = arith.truncf %63 : vector<4x9x32xf32> to vector<4x9x32xbf16>
    "tpu.trace_start"() <{level = 10 : i32, message = "bij,bjd->bid"}> : () -> ()
    %cst_18 = arith.constant dense<0.000000e+00> : vector<4x9x32xf32>
    %87 = tpu.matmul %64, %86, %cst_18 {dimension_numbers = #tpu.dot_dimension_numbers<[2], [1], [1], [2], [0, 0, 0, 1, 1, 2], [0], [0]>} : vector<4x9x9xbf16>, vector<4x9x32xbf16>, vector<4x9x32xf32> -> vector<4x9x32xf32>
    "tpu.trace_stop"() : () -> ()
    %88 = vector.broadcast %70 : vector<4x9x1xf32> to vector<4x9x32xf32>
    %89 = arith.mulf %87, %88 : vector<4x9x32xf32>
    %90 = arith.truncf %89 : vector<4x9x32xf32> to vector<4x9x32xbf16>
    "tpu.trace_start"() <{level = 10 : i32, message = "bnd,bde->bne"}> : () -> ()
    %cst_19 = arith.constant dense<0.000000e+00> : vector<4x9x32xf32>
    %91 = tpu.matmul %90, %75, %cst_19 {dimension_numbers = #tpu.dot_dimension_numbers<[2], [1], [1], [2], [0, 0, 0, 1, 1, 2], [0], [0]>} : vector<4x9x32xbf16>, vector<4x32x32xbf16>, vector<4x9x32xf32> -> vector<4x9x32xf32>
    "tpu.trace_stop"() : () -> ()
    %cst_20 = arith.constant 0.000000e+00 : f32
    %92 = vector.broadcast %cst_20 : f32 to vector<4x9x32xf32>
    %93 = arith.maximumf %91, %92 : vector<4x9x32xf32>
    %94 = arith.addf %93, %63 : vector<4x9x32xf32>
    %cst_21 = arith.constant dense<0.000000e+00> : vector<4x9xf32>
    %95 = vector.multi_reduction <add>, %94, %cst_21 [2] : vector<4x9x32xf32> to vector<4x9xf32>
    %96 = vector.shape_cast %95 : vector<4x9xf32> to vector<4x9x1xf32>
    %cst_22 = arith.constant 3.200000e+01 : f32
    %97 = vector.broadcast %cst_22 : f32 to vector<4x9x1xf32>
    %98 = arith.divf %96, %97 : vector<4x9x1xf32>
    %99 = vector.broadcast %98 : vector<4x9x1xf32> to vector<4x9x32xf32>
    %100 = arith.subf %94, %99 : vector<4x9x32xf32>
    %101 = arith.mulf %100, %100 : vector<4x9x32xf32>
    %cst_23 = arith.constant dense<0.000000e+00> : vector<4x9xf32>
    %102 = vector.multi_reduction <add>, %101, %cst_23 [2] : vector<4x9x32xf32> to vector<4x9xf32>
    %103 = vector.shape_cast %102 : vector<4x9xf32> to vector<4x9x1xf32>
    %cst_24 = arith.constant 3.200000e+01 : f32
    %104 = vector.broadcast %cst_24 : f32 to vector<4x9x1xf32>
    %105 = arith.divf %103, %104 : vector<4x9x1xf32>
    %cst_25 = arith.constant 9.99999974E-6 : f32
    %106 = vector.broadcast %cst_25 : f32 to vector<4x9x1xf32>
    %107 = arith.addf %105, %106 : vector<4x9x1xf32>
    %108 = math.rsqrt %107 : vector<4x9x1xf32>
    %109 = vector.broadcast %108 : vector<4x9x1xf32> to vector<4x9x32xf32>
    %110 = arith.mulf %100, %109 : vector<4x9x32xf32>
    %111 = arith.truncf %110 : vector<4x9x32xf32> to vector<4x9x32xbf16>
    "tpu.trace_start"() <{level = 10 : i32, message = "bnd,bde->bne"}> : () -> ()
    %cst_26 = arith.constant dense<0.000000e+00> : vector<4x9x32xf32>
    %112 = tpu.matmul %111, %80, %cst_26 {dimension_numbers = #tpu.dot_dimension_numbers<[2], [1], [1], [2], [0, 0, 0, 1, 1, 2], [0], [0]>} : vector<4x9x32xbf16>, vector<4x32x32xbf16>, vector<4x9x32xf32> -> vector<4x9x32xf32>
    "tpu.trace_stop"() : () -> ()
    %cst_27 = arith.constant 0.000000e+00 : f32
    %113 = vector.broadcast %cst_27 : f32 to vector<4x9x32xf32>
    %114 = arith.maximumf %112, %113 : vector<4x9x32xf32>
    %115 = arith.truncf %114 : vector<4x9x32xf32> to vector<4x9x32xbf16>
    "tpu.trace_start"() <{level = 10 : i32, message = "bnd,bde->bne"}> : () -> ()
    %cst_28 = arith.constant dense<0.000000e+00> : vector<4x9x32xf32>
    %116 = tpu.matmul %115, %85, %cst_28 {dimension_numbers = #tpu.dot_dimension_numbers<[2], [1], [1], [2], [0, 0, 0, 1, 1, 2], [0], [0]>} : vector<4x9x32xbf16>, vector<4x32x32xbf16>, vector<4x9x32xf32> -> vector<4x9x32xf32>
    "tpu.trace_stop"() : () -> ()
    %117 = arith.addf %110, %116 : vector<4x9x32xf32>
    %c1_i32_29 = arith.constant 1 : i32
    %118 = arith.index_cast %c1_i32_29 : i32 to index
    %c0_30 = arith.constant 0 : index
    %c0_31 = arith.constant 0 : index
    %119 = vector.load %arg5[%118, %c0_30, %c0_31] : memref<2x32x32xbf16, #tpu.memory_space<vmem>>, vector<1x32x32xbf16>
    %120 = vector.shape_cast %119 : vector<1x32x32xbf16> to vector<32x32xbf16>
    %121 = vector.shape_cast %120 : vector<32x32xbf16> to vector<1x32x32xbf16>
    %122 = vector.broadcast %121 : vector<1x32x32xbf16> to vector<4x32x32xbf16>
    %123 = arith.index_cast %c1_i32_29 : i32 to index
    %c0_32 = arith.constant 0 : index
    %c0_33 = arith.constant 0 : index
    %124 = vector.load %arg6[%123, %c0_32, %c0_33] : memref<2x32x32xbf16, #tpu.memory_space<vmem>>, vector<1x32x32xbf16>
    %125 = vector.shape_cast %124 : vector<1x32x32xbf16> to vector<32x32xbf16>
    %126 = vector.shape_cast %125 : vector<32x32xbf16> to vector<1x32x32xbf16>
    %127 = vector.broadcast %126 : vector<1x32x32xbf16> to vector<4x32x32xbf16>
    %128 = arith.index_cast %c1_i32_29 : i32 to index
    %c0_34 = arith.constant 0 : index
    %c0_35 = arith.constant 0 : index
    %129 = vector.load %arg7[%128, %c0_34, %c0_35] : memref<2x32x32xbf16, #tpu.memory_space<vmem>>, vector<1x32x32xbf16>
    %130 = vector.shape_cast %129 : vector<1x32x32xbf16> to vector<32x32xbf16>
    %131 = vector.shape_cast %130 : vector<32x32xbf16> to vector<1x32x32xbf16>
    %132 = vector.broadcast %131 : vector<1x32x32xbf16> to vector<4x32x32xbf16>
    %133 = arith.truncf %117 : vector<4x9x32xf32> to vector<4x9x32xbf16>
    "tpu.trace_start"() <{level = 10 : i32, message = "bij,bjd->bid"}> : () -> ()
    %cst_36 = arith.constant dense<0.000000e+00> : vector<4x9x32xf32>
    %134 = tpu.matmul %64, %133, %cst_36 {dimension_numbers = #tpu.dot_dimension_numbers<[2], [1], [1], [2], [0, 0, 0, 1, 1, 2], [0], [0]>} : vector<4x9x9xbf16>, vector<4x9x32xbf16>, vector<4x9x32xf32> -> vector<4x9x32xf32>
    "tpu.trace_stop"() : () -> ()
    %135 = vector.broadcast %70 : vector<4x9x1xf32> to vector<4x9x32xf32>
    %136 = arith.mulf %134, %135 : vector<4x9x32xf32>
    %137 = arith.truncf %136 : vector<4x9x32xf32> to vector<4x9x32xbf16>
    "tpu.trace_start"() <{level = 10 : i32, message = "bnd,bde->bne"}> : () -> ()
    %cst_37 = arith.constant dense<0.000000e+00> : vector<4x9x32xf32>
    %138 = tpu.matmul %137, %122, %cst_37 {dimension_numbers = #tpu.dot_dimension_numbers<[2], [1], [1], [2], [0, 0, 0, 1, 1, 2], [0], [0]>} : vector<4x9x32xbf16>, vector<4x32x32xbf16>, vector<4x9x32xf32> -> vector<4x9x32xf32>
    "tpu.trace_stop"() : () -> ()
    %cst_38 = arith.constant 0.000000e+00 : f32
    %139 = vector.broadcast %cst_38 : f32 to vector<4x9x32xf32>
    %140 = arith.maximumf %138, %139 : vector<4x9x32xf32>
    %141 = arith.addf %140, %117 : vector<4x9x32xf32>
    %cst_39 = arith.constant dense<0.000000e+00> : vector<4x9xf32>
    %142 = vector.multi_reduction <add>, %141, %cst_39 [2] : vector<4x9x32xf32> to vector<4x9xf32>
    %143 = vector.shape_cast %142 : vector<4x9xf32> to vector<4x9x1xf32>
    %cst_40 = arith.constant 3.200000e+01 : f32
    %144 = vector.broadcast %cst_40 : f32 to vector<4x9x1xf32>
    %145 = arith.divf %143, %144 : vector<4x9x1xf32>
    %146 = vector.broadcast %145 : vector<4x9x1xf32> to vector<4x9x32xf32>
    %147 = arith.subf %141, %146 : vector<4x9x32xf32>
    %148 = arith.mulf %147, %147 : vector<4x9x32xf32>
    %cst_41 = arith.constant dense<0.000000e+00> : vector<4x9xf32>
    %149 = vector.multi_reduction <add>, %148, %cst_41 [2] : vector<4x9x32xf32> to vector<4x9xf32>
    %150 = vector.shape_cast %149 : vector<4x9xf32> to vector<4x9x1xf32>
    %cst_42 = arith.constant 3.200000e+01 : f32
    %151 = vector.broadcast %cst_42 : f32 to vector<4x9x1xf32>
    %152 = arith.divf %150, %151 : vector<4x9x1xf32>
    %cst_43 = arith.constant 9.99999974E-6 : f32
    %153 = vector.broadcast %cst_43 : f32 to vector<4x9x1xf32>
    %154 = arith.addf %152, %153 : vector<4x9x1xf32>
    %155 = math.rsqrt %154 : vector<4x9x1xf32>
    %156 = vector.broadcast %155 : vector<4x9x1xf32> to vector<4x9x32xf32>
    %157 = arith.mulf %147, %156 : vector<4x9x32xf32>
    %158 = arith.truncf %157 : vector<4x9x32xf32> to vector<4x9x32xbf16>
    "tpu.trace_start"() <{level = 10 : i32, message = "bnd,bde->bne"}> : () -> ()
    %cst_44 = arith.constant dense<0.000000e+00> : vector<4x9x32xf32>
    %159 = tpu.matmul %158, %127, %cst_44 {dimension_numbers = #tpu.dot_dimension_numbers<[2], [1], [1], [2], [0, 0, 0, 1, 1, 2], [0], [0]>} : vector<4x9x32xbf16>, vector<4x32x32xbf16>, vector<4x9x32xf32> -> vector<4x9x32xf32>
    "tpu.trace_stop"() : () -> ()
    %cst_45 = arith.constant 0.000000e+00 : f32
    %160 = vector.broadcast %cst_45 : f32 to vector<4x9x32xf32>
    %161 = arith.maximumf %159, %160 : vector<4x9x32xf32>
    %162 = arith.truncf %161 : vector<4x9x32xf32> to vector<4x9x32xbf16>
    "tpu.trace_start"() <{level = 10 : i32, message = "bnd,bde->bne"}> : () -> ()
    %cst_46 = arith.constant dense<0.000000e+00> : vector<4x9x32xf32>
    %163 = tpu.matmul %162, %132, %cst_46 {dimension_numbers = #tpu.dot_dimension_numbers<[2], [1], [1], [2], [0, 0, 0, 1, 1, 2], [0], [0]>} : vector<4x9x32xbf16>, vector<4x32x32xbf16>, vector<4x9x32xf32> -> vector<4x9x32xf32>
    "tpu.trace_stop"() : () -> ()
    %164 = arith.addf %157, %163 : vector<4x9x32xf32>
    %c2_i32_47 = arith.constant 2 : i32
    %c0_48 = arith.constant 0 : index
    %c0_49 = arith.constant 0 : index
    %165 = vector.load %arg8[%c0_48, %c0_49] : memref<1x32xf32, #tpu.memory_space<vmem>>, vector<1x32xf32>
    %166 = vector.shape_cast %165 : vector<1x32xf32> to vector<1x1x32xf32>
    %167 = vector.broadcast %166 : vector<1x1x32xf32> to vector<4x9x32xf32>
    %168 = arith.mulf %164, %167 : vector<4x9x32xf32>
    %cst_50 = arith.constant dense<0.000000e+00> : vector<4x9xf32>
    %169 = vector.multi_reduction <add>, %168, %cst_50 [2] : vector<4x9x32xf32> to vector<4x9xf32>
    %170 = vector.shape_cast %169 : vector<4x9xf32> to vector<4x9x1xf32>
    %c0_51 = arith.constant 0 : index
    %171 = memref.load %arg9[%c0_51] : memref<1xf32, #tpu.memory_space<smem>>
    %172 = vector.broadcast %171 : f32 to vector<4x9x1xf32>
    %173 = arith.addf %170, %172 : vector<4x9x1xf32>
    %174 = arith.negf %173 : vector<4x9x1xf32>
    %175 = math.exp %174 : vector<4x9x1xf32>
    %cst_52 = arith.constant 1.000000e+00 : f32
    %176 = vector.broadcast %cst_52 : f32 to vector<4x9x1xf32>
    %177 = arith.addf %176, %175 : vector<4x9x1xf32>
    %178 = arith.divf %176, %177 : vector<4x9x1xf32>
    %c0_53 = arith.constant 0 : index
    %c0_54 = arith.constant 0 : index
    %c0_55 = arith.constant 0 : index
    %179 = vector.load %arg10[%c0_53, %c0_54, %c0_55] : memref<4x9x1xf32, #tpu.memory_space<vmem>>, vector<4x9x1xf32>
    tpu.vector_store %arg10[%c0_53, %c0_54, %c0_55], %178 {strides = array<i32>} : memref<4x9x1xf32, #tpu.memory_space<vmem>>, vector<4x9x1xf32>,
    return
  }
  func.func @transform_0(%arg0: i32) -> (i32, i32, i32) {
    %c0_i32 = arith.constant 0 : i32
    %c0_i32_0 = arith.constant 0 : i32
    %c0_i32_1 = arith.constant 0 : i32
    return %arg0, %c0_i32, %c0_i32_0 : i32, i32, i32
  }
  func.func @transform_1(%arg0: i32) -> (i32, i32, i32) {
    %c0_i32 = arith.constant 0 : i32
    %c0_i32_0 = arith.constant 0 : i32
    %c0_i32_1 = arith.constant 0 : i32
    return %arg0, %c0_i32, %c0_i32_0 : i32, i32, i32
  }
  func.func @transform_2(%arg0: i32) -> (i32, i32) {
    %c0_i32 = arith.constant 0 : i32
    %c0_i32_0 = arith.constant 0 : i32
    %c0_i32_1 = arith.constant 0 : i32
    return %c0_i32, %c0_i32_0 : i32, i32
  }
  func.func @transform_3(%arg0: i32) -> (i32, i32) {
    %c0_i32 = arith.constant 0 : i32
    %c0_i32_0 = arith.constant 0 : i32
    %c0_i32_1 = arith.constant 0 : i32
    return %c0_i32, %c0_i32_0 : i32, i32
  }
  func.func @transform_4(%arg0: i32) -> (i32, i32, i32) {
    %c0_i32 = arith.constant 0 : i32
    %c0_i32_0 = arith.constant 0 : i32
    %c0_i32_1 = arith.constant 0 : i32
    %c0_i32_2 = arith.constant 0 : i32
    return %c0_i32, %c0_i32_0, %c0_i32_1 : i32, i32, i32
  }
  func.func @transform_5(%arg0: i32) -> (i32, i32, i32) {
    %c0_i32 = arith.constant 0 : i32
    %c0_i32_0 = arith.constant 0 : i32
    %c0_i32_1 = arith.constant 0 : i32
    %c0_i32_2 = arith.constant 0 : i32
    return %c0_i32, %c0_i32_0, %c0_i32_1 : i32, i32, i32
  }
  func.func @transform_6(%arg0: i32) -> (i32, i32, i32) {
    %c0_i32 = arith.constant 0 : i32
    %c0_i32_0 = arith.constant 0 : i32
    %c0_i32_1 = arith.constant 0 : i32
    %c0_i32_2 = arith.constant 0 : i32
    return %c0_i32, %c0_i32_0, %c0_i32_1 : i32, i32, i32
  }
  func.func @transform_7(%arg0: i32) -> (i32, i32) {
    %c0_i32 = arith.constant 0 : i32
    %c0_i32_0 = arith.constant 0 : i32
    %c0_i32_1 = arith.constant 0 : i32
    return %c0_i32, %c0_i32_0 : i32, i32
  }
  func.func @transform_8(%arg0: i32) -> i32 {
    %c0_i32 = arith.constant 0 : i32
    %c0_i32_0 = arith.constant 0 : i32
    return %c0_i32 : i32
  }
  func.func @transform_9(%arg0: i32) -> (i32, i32, i32) {
    %c0_i32 = arith.constant 0 : i32
    %c0_i32_0 = arith.constant 0 : i32
    %c0_i32_1 = arith.constant 0 : i32
    return %arg0, %c0_i32, %c0_i32_0 : i32, i32, i32
  }
}

</mosaic_0001>

<llo_original>
// kernel: backbone_forward.1
$region0: #{backbone_forward.1}
  #allocation0 [shape = 'u32[]', space=smem, size = 0x4, offset = 0x4, fixed_abs, tag = 'smem constant byte address 0x4 - core index']
  #allocation1 [shape = 'u32[144,128]{1,0:T(1,128)}', space=vmem, size = 0x12000, scoped, tag = 'internal scratch']
  #allocation2 [shape = 'f32[1]{0:T(128)S(6)}', space=smem, size = 0x200, scoped, tag = 'scoped memory for backbone_forward.1']
  %s0 = inlined_call_operand.vmem [shape: s32[8,9,1], index: 0, kind: input, shape index: {}]
  %s1 = inlined_call_operand.vmem [shape: bf16[8,9,9], index: 1, kind: input, shape index: {}]
  %s2 = inlined_call_operand.vmem [shape: f32[7,32], index: 2, kind: input, shape index: {}]
  %s3 = inlined_call_operand.vmem [shape: f32[1,32], index: 3, kind: input, shape index: {}]
  %s4 = inlined_call_operand.vmem [shape: bf16[2,32,32], index: 4, kind: input, shape index: {}]
  %s5 = inlined_call_operand.vmem [shape: bf16[2,32,32], index: 5, kind: input, shape index: {}]
  %s6 = inlined_call_operand.vmem [shape: bf16[2,32,32], index: 6, kind: input, shape index: {}]
  %s7 = inlined_call_operand.vmem [shape: f32[1,32], index: 7, kind: input, shape index: {}]
  %s8 = inlined_call_operand.<no memory space> [shape: f32[1], index: 8, kind: input, shape index: {}]
  %s9 = inlined_call_operand.vmem [shape: f32[8,9,1], index: 9, kind: output, shape index: {}]
  %s10 = sld [smem:[#allocation0]]
  $region69: #{backbone_forward.1} parent=0
    _
  %s12 = ssub.s32 1, %s10
  %s13 = scalar_select 0, %s12, %s10
  %14 = sst [smem:[#allocation2]] %s8
  loop: start=0, step=1, limit=4
  $region2: #{backbone_forward.1} parent=0 // loop_pre_header
    _
  $region3: #{backbone_forward.1} parent=0 // loop_header
    %s16 = sphi 0, %s20
    %p17 = scmp.ge.s32.totalorder %s16, 4
    %s26 = sphi 0, %s28
    %s29 = sphi 0, %s26
    %s30 = sphi 0, %s29
    %s46 = sphi 0, %s30
    %s52 = sphi 0, %s54
    %s55 = sphi 0, %s52
    %s56 = sphi 0, %s55
    %s72 = sphi 0, %s56
    %s76 = sphi 0, %s76
    %s78 = sphi 0, %s76
    %s79 = sphi 0, %s78
    %s93 = sphi 0, %s79
    %s97 = sphi 0, %s97
    %s99 = sphi 0, %s97
    %s100 = sphi 0, %s99
    %s114 = sphi 0, %s100
    %s118 = sphi 0, %s118
    %s120 = sphi 0, %s118
    %s121 = sphi 0, %s120
    %s135 = sphi 0, %s121
    %s139 = sphi 0, %s139
    %s141 = sphi 0, %s139
    %s142 = sphi 0, %s141
    %s156 = sphi 0, %s142
    %s160 = sphi 0, %s160
    %s162 = sphi 0, %s160
    %s163 = sphi 0, %s162
    %s177 = sphi 0, %s163
    %s181 = sphi 0, %s181
    %s183 = sphi 0, %s181
    %s184 = sphi 0, %s183
    %s198 = sphi 0, %s184
    %s202 = sphi 0, %s202
    %s204 = sphi 0, %s202
    %s205 = sphi 0, %s204
    %s219 = sphi 0, %s205
    %s225 = sphi 0, %s227
    %s228 = sphi 0, %s225
    %s229 = sphi 0, %s228
    %s245 = sphi 0, %s229
  $region4: #{backbone_forward.1} parent=0 // loop_header_branch
    %19 = sbr.rel (%p17) target = $region8
  $region5: #{backbone_forward.1} parent=0 // loop_body
    %s21 = ssub.s32 %s16, 1
    %s22 = ssub.s32 %s16, 2
    %s23 = sadd.s32 %s16, 1
    %s24 = ssub.s32 %s16, %s23
    %p25 = scmp.eq.s32.totalorder %s24, 0
    %s27 = sadd.s32 %s26, 1
    %s28 = scalar_select %p25, %s26, %s27
    %p31 = pneg %p25
    %p32 = scmp.eq.s32.totalorder %s16, 1
    %p33 = por %p31, %p32
    %p34 = scmp.ne.s32.totalorder %s26, %s29
    %p35 = scmp.eq.s32.totalorder %s16, 0
    %p36 = por %p34, %p35
    %p37 = scmp.ne.s32.totalorder %s26, %s29
    %p38 = scmp.eq.s32.totalorder %s21, 1
    %p39 = por %p37, %p38
    %p40 = scmp.ne.s32.totalorder %s29, %s30
    %p41 = scmp.eq.s32.totalorder %s21, 0
    %p42 = por %p40, %p41
    %p43 = scmp.ne.s32.totalorder %s29, %s30
    %p44 = scmp.eq.s32.totalorder %s22, 1
    %p45 = por %p43, %p44
    %p47 = scmp.ne.s32.totalorder %s30, %s46
    %p48 = scmp.eq.s32.totalorder %s22, 0
    %p49 = por %p47, %p48
    %s50 = ssub.s32 %s16, %s23
    %p51 = scmp.eq.s32.totalorder %s50, 0
    %s53 = sadd.s32 %s52, 1
    %s54 = scalar_select %p51, %s52, %s53
    %p57 = pneg %p51
    %p58 = scmp.eq.s32.totalorder %s16, 1
    %p59 = por %p57, %p58
    %p60 = scmp.ne.s32.totalorder %s52, %s55
    %p61 = scmp.eq.s32.totalorder %s16, 0
    %p62 = por %p60, %p61
    %p63 = scmp.ne.s32.totalorder %s52, %s55
    %p64 = scmp.eq.s32.totalorder %s21, 1
    %p65 = por %p63, %p64
    %p66 = scmp.ne.s32.totalorder %s55, %s56
    %p67 = scmp.eq.s32.totalorder %s21, 0
    %p68 = por %p66, %p67
    %p69 = scmp.ne.s32.totalorder %s55, %s56
    %p70 = scmp.eq.s32.totalorder %s22, 1
    %p71 = por %p69, %p70
    %p73 = scmp.ne.s32.totalorder %s56, %s72
    %p74 = scmp.eq.s32.totalorder %s22, 0
    %p75 = por %p73, %p74
    %s77 = sadd.s32 %s76, 1
    %p80 = scmp.eq.s32.totalorder %s16, 1
    %p81 = scmp.ne.s32.totalorder %s76, %s78
    %p82 = scmp.eq.s32.totalorder %s16, 0
    %p83 = por %p81, %p82
    %p84 = scmp.ne.s32.totalorder %s76, %s78
    %p85 = scmp.eq.s32.totalorder %s21, 1
    %p86 = por %p84, %p85
    %p87 = scmp.ne.s32.totalorder %s78, %s79
    %p88 = scmp.eq.s32.totalorder %s21, 0
    %p89 = por %p87, %p88
    %p90 = scmp.ne.s32.totalorder %s78, %s79
    %p91 = scmp.eq.s32.totalorder %s22, 1
    %p92 = por %p90, %p91
    %p94 = scmp.ne.s32.totalorder %s79, %s93
    %p95 = scmp.eq.s32.totalorder %s22, 0
    %p96 = por %p94, %p95
    %s98 = sadd.s32 %s97, 1
    %p101 = scmp.eq.s32.totalorder %s16, 1
    %p102 = scmp.ne.s32.totalorder %s97, %s99
    %p103 = scmp.eq.s32.totalorder %s16, 0
    %p104 = por %p102, %p103
    %p105 = scmp.ne.s32.totalorder %s97, %s99
    %p106 = scmp.eq.s32.totalorder %s21, 1
    %p107 = por %p105, %p106
    %p108 = scmp.ne.s32.totalorder %s99, %s100
    %p109 = scmp.eq.s32.totalorder %s21, 0
    %p110 = por %p108, %p109
    %p111 = scmp.ne.s32.totalorder %s99, %s100
    %p112 = scmp.eq.s32.totalorder %s22, 1
    %p113 = por %p111, %p112
    %p115 = scmp.ne.s32.totalorder %s100, %s114
    %p116 = scmp.eq.s32.totalorder %s22, 0
    %p117 = por %p115, %p116
    %s119 = sadd.s32 %s118, 1
    %p122 = scmp.eq.s32.totalorder %s16, 1
    %p123 = scmp.ne.s32.totalorder %s118, %s120
    %p124 = scmp.eq.s32.totalorder %s16, 0
    %p125 = por %p123, %p124
    %p126 = scmp.ne.s32.totalorder %s118, %s120
    %p127 = scmp.eq.s32.totalorder %s21, 1
    %p128 = por %p126, %p127
    %p129 = scmp.ne.s32.totalorder %s120, %s121
    %p130 = scmp.eq.s32.totalorder %s21, 0
    %p131 = por %p129, %p130
    %p132 = scmp.ne.s32.totalorder %s120, %s121
    %p133 = scmp.eq.s32.totalorder %s22, 1
    %p134 = por %p132, %p133
    %p136 = scmp.ne.s32.totalorder %s121, %s135
    %p137 = scmp.eq.s32.totalorder %s22, 0
    %p138 = por %p136, %p137
    %s140 = sadd.s32 %s139, 1
    %p143 = scmp.eq.s32.totalorder %s16, 1
    %p144 = scmp.ne.s32.totalorder %s139, %s141
    %p145 = scmp.eq.s32.totalorder %s16, 0
    %p146 = por %p144, %p145
    %p147 = scmp.ne.s32.totalorder %s139, %s141
    %p148 = scmp.eq.s32.totalorder %s21, 1
    %p149 = por %p147, %p148
    %p150 = scmp.ne.s32.totalorder %s141, %s142
    %p151 = scmp.eq.s32.totalorder %s21, 0
    %p152 = por %p150, %p151
    %p153 = scmp.ne.s32.totalorder %s141, %s142
    %p154 = scmp.eq.s32.totalorder %s22, 1
    %p155 = por %p153, %p154
    %p157 = scmp.ne.s32.totalorder %s142, %s156
    %p158 = scmp.eq.s32.totalorder %s22, 0
    %p159 = por %p157, %p158
    %s161 = sadd.s32 %s160, 1
    %p164 = scmp.eq.s32.totalorder %s16, 1
    %p165 = scmp.ne.s32.totalorder %s160, %s162
    %p166 = scmp.eq.s32.totalorder %s16, 0
    %p167 = por %p165, %p166
    %p168 = scmp.ne.s32.totalorder %s160, %s162
    %p169 = scmp.eq.s32.totalorder %s21, 1
    %p170 = por %p168, %p169
    %p171 = scmp.ne.s32.totalorder %s162, %s163
    %p172 = scmp.eq.s32.totalorder %s21, 0
    %p173 = por %p171, %p172
    %p174 = scmp.ne.s32.totalorder %s162, %s163
    %p175 = scmp.eq.s32.totalorder %s22, 1
    %p176 = por %p174, %p175
    %p178 = scmp.ne.s32.totalorder %s163, %s177
    %p179 = scmp.eq.s32.totalorder %s22, 0
    %p180 = por %p178, %p179
    %s182 = sadd.s32 %s181, 1
    %p185 = scmp.eq.s32.totalorder %s16, 1
    %p186 = scmp.ne.s32.totalorder %s181, %s183
    %p187 = scmp.eq.s32.totalorder %s16, 0
    %p188 = por %p186, %p187
    %p189 = scmp.ne.s32.totalorder %s181, %s183
    %p190 = scmp.eq.s32.totalorder %s21, 1
    %p191 = por %p189, %p190
    %p192 = scmp.ne.s32.totalorder %s183, %s184
    %p193 = scmp.eq.s32.totalorder %s21, 0
    %p194 = por %p192, %p193
    %p195 = scmp.ne.s32.totalorder %s183, %s184
    %p196 = scmp.eq.s32.totalorder %s22, 1
    %p197 = por %p195, %p196
    %p199 = scmp.ne.s32.totalorder %s184, %s198
    %p200 = scmp.eq.s32.totalorder %s22, 0
    %p201 = por %p199, %p200
    %s203 = sadd.s32 %s202, 1
    %p206 = scmp.eq.s32.totalorder %s16, 1
    %p207 = scmp.ne.s32.totalorder %s202, %s204
    %p208 = scmp.eq.s32.totalorder %s16, 0
    %p209 = por %p207, %p208
    %p210 = scmp.ne.s32.totalorder %s202, %s204
    %p211 = scmp.eq.s32.totalorder %s21, 1
    %p212 = por %p210, %p211
    %p213 = scmp.ne.s32.totalorder %s204, %s205
    %p214 = scmp.eq.s32.totalorder %s21, 0
    %p215 = por %p213, %p214
    %p216 = scmp.ne.s32.totalorder %s204, %s205
    %p217 = scmp.eq.s32.totalorder %s22, 1
    %p218 = por %p216, %p217
    %p220 = scmp.ne.s32.totalorder %s205, %s219
    %p221 = scmp.eq.s32.totalorder %s22, 0
    %p222 = por %p220, %p221
    %s223 = ssub.s32 %s16, %s23
    %p224 = scmp.eq.s32.totalorder %s223, 0
    %s226 = sadd.s32 %s225, 1
    %s227 = scalar_select %p224, %s225, %s226
    %p230 = pneg %p224
    %p231 = scmp.eq.s32.totalorder %s16, 1
    %p232 = por %p230, %p231
    %p233 = scmp.ne.s32.totalorder %s225, %s228
    %p234 = scmp.eq.s32.totalorder %s16, 0
    %p235 = por %p233, %p234
    %p236 = scmp.ne.s32.totalorder %s225, %s228
    %p237 = scmp.eq.s32.totalorder %s21, 1
    %p238 = por %p236, %p237
    %p239 = scmp.ne.s32.totalorder %s228, %s229
    %p240 = scmp.eq.s32.totalorder %s21, 0
    %p241 = por %p239, %p240
    %p242 = scmp.ne.s32.totalorder %s228, %s229
    %p243 = scmp.eq.s32.totalorder %s22, 1
    %p244 = por %p242, %p243
    %p246 = scmp.ne.s32.totalorder %s229, %s245
    %p247 = scmp.eq.s32.totalorder %s22, 0
    %p248 = por %p246, %p247
    %p249 = scmp.le.s32.totalorder 1, %s16
    %p250 = scmp.lt.s32.totalorder %s16, 3
    %p251 = pnand %p249, %p250
    %p252 = pneg %p251
    // Predicated region
    $region9: #{backbone_forward.1} parent=5 // pred_check
      _
    $region10: #{backbone_forward.1} parent=5 // pred_check_branch
      %254 = sbr.rel (%p251) target = $region12
    $region11: #{backbone_forward.1} parent=5 // pred_region
      %s255 = ssub.s32 %s16, 1
      // Predicated region
      $region13: #{backbone_forward.1} parent=11 // pred_check
        %p256 = pneg %p89
      $region14: #{backbone_forward.1} parent=11 // pred_check_branch
        %258 = sbr.rel (%p256) target = $region16
      $region15: #{backbone_forward.1} parent=11 // pred_region
        _
      $region16: #{backbone_forward.1} parent=11 // pred_fallthru
        _
      // Predicated region
      $region17: #{backbone_forward.1} parent=11 // pred_check
        %p259 = pneg %p110
      $region18: #{backbone_forward.1} parent=11 // pred_check_branch
        %261 = sbr.rel (%p259) target = $region20
      $region19: #{backbone_forward.1} parent=11 // pred_region
        _
      $region20: #{backbone_forward.1} parent=11 // pred_fallthru
        _
      // Predicated region
      $region21: #{backbone_forward.1} parent=11 // pred_check
        %p262 = pneg %p131
      $region22: #{backbone_forward.1} parent=11 // pred_check_branch
        %264 = sbr.rel (%p262) target = $region24
      $region23: #{backbone_forward.1} parent=11 // pred_region
        _
      $region24: #{backbone_forward.1} parent=11 // pred_fallthru
        _
      // Predicated region
      $region25: #{backbone_forward.1} parent=11 // pred_check
        %p265 = pneg %p152
      $region26: #{backbone_forward.1} parent=11 // pred_check_branch
        %267 = sbr.rel (%p265) target = $region28
      $region27: #{backbone_forward.1} parent=11 // pred_region
        _
      $region28: #{backbone_forward.1} parent=11 // pred_fallthru
        _
      // Predicated region
      $region29: #{backbone_forward.1} parent=11 // pred_check
        %p268 = pneg %p173
      $region30: #{backbone_forward.1} parent=11 // pred_check_branch
        %270 = sbr.rel (%p268) target = $region32
      $region31: #{backbone_forward.1} parent=11 // pred_region
        _
      $region32: #{backbone_forward.1} parent=11 // pred_fallthru
        _
      // Predicated region
      $region33: #{backbone_forward.1} parent=11 // pred_check
        %p271 = pneg %p194
      $region34: #{backbone_forward.1} parent=11 // pred_check_branch
        %273 = sbr.rel (%p271) target = $region36
      $region35: #{backbone_forward.1} parent=11 // pred_region
        _
      $region36: #{backbone_forward.1} parent=11 // pred_fallthru
        _
      // Predicated region
      $region37: #{backbone_forward.1} parent=11 // pred_check
        %p274 = pneg %p215
      $region38: #{backbone_forward.1} parent=11 // pred_check_branch
        %276 = sbr.rel (%p274) target = $region40
      $region39: #{backbone_forward.1} parent=11 // pred_region
        _
      $region40: #{backbone_forward.1} parent=11 // pred_fallthru
        _
    $region12: #{backbone_forward.1} parent=5 // pred_fallthru
      _
    %p277 = scmp.lt.s32.totalorder %s16, 2
    // Predicated region
    $region41: #{backbone_forward.1} parent=5 // pred_check
      %p278 = pneg %p277
    $region42: #{backbone_forward.1} parent=5 // pred_check_branch
      %280 = sbr.rel (%p278) target = $region44
    $region43: #{backbone_forward.1} parent=5 // pred_region
      // Predicated region
      $region45: #{backbone_forward.1} parent=43 // pred_check
        %p281 = pneg %p36
      $region46: #{backbone_forward.1} parent=43 // pred_check_branch
        %283 = sbr.rel (%p281) target = $region48
      $region47: #{backbone_forward.1} parent=43 // pred_region
        %s284 = smul.u32 4, %s16
        %p285 = scmp.lt.s32.totalorder %s284, 7
        %s286 = scalar_select %p285, %s284, 7
        %s287 = smul.addr %s286, 2
        %s288 = smul.addr %s287, 8
        %s289 = scalar_lea.vmem %s0, %s288
        %s290 = smul.u32 4, %s16
      $region48: #{backbone_forward.1} parent=43 // pred_fallthru
        _
      // Predicated region
      $region49: #{backbone_forward.1} parent=43 // pred_check
        %p291 = pneg %p62
      $region50: #{backbone_forward.1} parent=43 // pred_check_branch
        %293 = sbr.rel (%p291) target = $region52
      $region51: #{backbone_forward.1} parent=43 // pred_region
        %s294 = smul.u32 4, %s16
        %p295 = scmp.lt.s32.totalorder %s294, 7
        %s296 = scalar_select %p295, %s294, 7
        %s297 = smul.addr %s296, 2
        %s298 = smul.addr %s297, 4
        %s299 = scalar_lea.vmem %s1, %s298
        %s300 = smul.u32 4, %s16
      $region52: #{backbone_forward.1} parent=43 // pred_fallthru
        _
    $region44: #{backbone_forward.1} parent=5 // pred_fallthru
      _
    %p301 = scmp.le.s32.totalorder 1, %s16
    %p302 = scmp.lt.s32.totalorder %s16, 3
    %p303 = pnand %p301, %p302
    %p304 = pneg %p303
    // Predicated region
    $region53: #{backbone_forward.1} parent=5 // pred_check
      _
    $region54: #{backbone_forward.1} parent=5 // pred_check_branch
      %306 = sbr.rel (%p303) target = $region56
    $region55: #{backbone_forward.1} parent=5 // pred_region
      %s307 = ssub.s32 %s16, 1
      %s308 = smul.u32 4, %s21
      %p309 = scmp.lt.s32.totalorder %s308, 7
      %s310 = scalar_select %p309, %s308, 7
      %s311 = smul.addr %s310, 2
      %s312 = smul.addr %s311, 8
      %s313 = scalar_lea.vmem %s0, %s312
      %p314 = pneg %p42
      %p315 = pneg %p39
      %s316 = smul.u32 4, %s21
      %p317 = scmp.lt.s32.totalorder %s316, 7
      %s318 = scalar_select %p317, %s316, 7
      %s319 = smul.addr %s318, 2
      %s320 = smul.addr %s319, 4
      %s321 = scalar_lea.vmem %s1, %s320
      %p322 = pneg %p68
      %p323 = pneg %p65
      %p324 = pneg %p89
      %p325 = pneg %p86
      %p326 = pneg %p110
      %p327 = pneg %p107
      %p328 = pneg %p131
      %p329 = pneg %p128
      %p330 = pneg %p152
      %p331 = pneg %p149
      %p332 = pneg %p173
      %p333 = pneg %p170
      %p334 = pneg %p194
      %p335 = pneg %p191
      %p336 = pneg %p215
      %p337 = pneg %p212
      %p338 = pneg %p241
      %p339 = pneg %p238
      %s340 = smul.u32 4, %s21
      %p341 = scmp.lt.s32.totalorder %s340, 7
      %s342 = scalar_select %p341, %s340, 7
      %s343 = smul.addr %s342, 2
      %s344 = smul.addr %s343, 8
      %s345 = scalar_lea.vmem %s9, %s344
      %s346 = smul.u32 4, %s21
      %p347 = scmp.lt.s32.totalorder %s346, 7
      %s348 = scalar_select %p347, %s346, 7
      %s349 = smul.addr %s348, 2
      %s350 = smul.addr %s349, 8
      %s351 = scalar_lea.vmem %s0, %s350
      %s352 = smul.u32 4, %s21
      %s353 = smul.u32 4, %s21
      %p354 = scmp.lt.s32.totalorder %s353, 7
      %s355 = scalar_select %p354, %s353, 7
      %s356 = smul.addr %s355, 2
      %s357 = smul.addr %s356, 4
      %s358 = scalar_lea.vmem %s1, %s357
      %s359 = smul.u32 4, %s21
      %s360 = smul.u32 4, %s21
      %p361 = scmp.lt.s32.totalorder %s360, 7
      %s362 = scalar_select %p361, %s360, 7
      %s363 = smul.addr %s362, 2
      %s364 = smul.addr %s363, 8
      %s365 = scalar_lea.vmem %s9, %s364
      %s366 = smul.u32 4, %s21
      %v368 = vld [vmem:[%s351] sm:$0xff]
      %v369 = vld [vmem:[%s351 + $0x8] sm:$0x1]
      %v370 = vld [vmem:[%s351 + $0x10] sm:$0xff]
      %v371 = vld [vmem:[%s351 + $0x18] sm:$0x1]
      %v372 = vld [vmem:[%s351 + $0x20] sm:$0xff]
      %v373 = vld [vmem:[%s351 + $0x28] sm:$0x1]
      %v374 = vld [vmem:[%s351 + $0x30] sm:$0xff]
      %v375 = vld [vmem:[%s351 + $0x38] sm:$0x1]
      %v376 = vld [vmem:[%s2] sm:$0x7f]
      %vm377 = vcmp.eq.s32.totalorder %v368, 0
      %vm378 = vcmp.eq.s32.totalorder %v369, 0
      %vm379 = vcmp.eq.s32.totalorder %v370, 0
      %vm380 = vcmp.eq.s32.totalorder %v371, 0
      %vm381 = vcmp.eq.s32.totalorder %v372, 0
      %vm382 = vcmp.eq.s32.totalorder %v373, 0
      %vm383 = vcmp.eq.s32.totalorder %v374, 0
      %vm384 = vcmp.eq.s32.totalorder %v375, 0
      %v385 = vsel %vm377, 1, 0
      %v386 = vsel %vm378, 1, 0
      %v387 = vsel %vm379, 1, 0
      %v388 = vsel %vm380, 1, 0
      %v389 = vsel %vm381, 1, 0
      %v390 = vsel %vm382, 1, 0
      %v391 = vsel %vm383, 1, 0
      %v392 = vsel %vm384, 1, 0
      %393 = vset.pattern.permute.xlu0 0
      %394 = vperm.xlu0 %393, %v385
      %v395 = vpop.permute.xlu0 %394
      %396 = vset.pattern.permute.xlu0 0
      %397 = vperm.xlu0 %396, %v386
      %v398 = vpop.permute.xlu0 %397
      %399 = vset.pattern.permute.xlu0 0
      %400 = vperm.xlu0 %399, %v387
      %v401 = vpop.permute.xlu0 %400
      %402 = vset.pattern.permute.xlu0 0
      %403 = vperm.xlu0 %402, %v388
      %v404 = vpop.permute.xlu0 %403
      %405 = vset.pattern.permute.xlu0 0
      %406 = vperm.xlu0 %405, %v389
      %v407 = vpop.permute.xlu0 %406
      %408 = vset.pattern.permute.xlu0 0
      %409 = vperm.xlu0 %408, %v390
      %v410 = vpop.permute.xlu0 %409
      %411 = vset.pattern.permute.xlu0 0
      %412 = vperm.xlu0 %411, %v391
      %v413 = vpop.permute.xlu0 %412
      %414 = vset.pattern.permute.xlu0 0
      %415 = vperm.xlu0 %414, %v392
      %v416 = vpop.permute.xlu0 %415
      %vm417 = vcmp.eq.s32.totalorder %v395, 1
      %vm418 = vcmp.eq.s32.totalorder %v398, 1
      %vm419 = vcmp.eq.s32.totalorder %v401, 1
      %vm420 = vcmp.eq.s32.totalorder %v404, 1
      %vm421 = vcmp.eq.s32.totalorder %v407, 1
      %vm422 = vcmp.eq.s32.totalorder %v410, 1
      %vm423 = vcmp.eq.s32.totalorder %v413, 1
      %vm424 = vcmp.eq.s32.totalorder %v416, 1
      %v425 = vlaneseq
      %v426 = vshrl.u32 %v425, 7
      %v427 = vsub.s32 0, %v426
      %v428 = vrot.slane %v376, %v427
      %v429 = vsel %vm417, %v428, 0.0
      %v430 = vsel %vm418, %v428, 0.0
      %v431 = vsel %vm419, %v428, 0.0
      %v432 = vsel %vm420, %v428, 0.0
      %v433 = vsel %vm421, %v428, 0.0
      %v434 = vsel %vm422, %v428, 0.0
      %v435 = vsel %vm423, %v428, 0.0
      %v436 = vsel %vm424, %v428, 0.0
      %vm437 = vcmp.eq.s32.totalorder %v368, 1
      %vm438 = vcmp.eq.s32.totalorder %v369, 1
      %vm439 = vcmp.eq.s32.totalorder %v370, 1
      %vm440 = vcmp.eq.s32.totalorder %v371, 1
      %vm441 = vcmp.eq.s32.totalorder %v372, 1
      %vm442 = vcmp.eq.s32.totalorder %v373, 1
      %vm443 = vcmp.eq.s32.totalorder %v374, 1
      %vm444 = vcmp.eq.s32.totalorder %v375, 1
      %v445 = vsel %vm437, 1, 0
      %v446 = vsel %vm438, 1, 0
      %v447 = vsel %vm439, 1, 0
      %v448 = vsel %vm440, 1, 0
      %v449 = vsel %vm441, 1, 0
      %v450 = vsel %vm442, 1, 0
      %v451 = vsel %vm443, 1, 0
      %v452 = vsel %vm444, 1, 0
      %453 = vset.pattern.permute.xlu0 0
      %454 = vperm.xlu0 %453, %v445
      %v455 = vpop.permute.xlu0 %454
      %456 = vset.pattern.permute.xlu0 0
      %457 = vperm.xlu0 %456, %v446
      %v458 = vpop.permute.xlu0 %457
      %459 = vset.pattern.permute.xlu0 0
      %460 = vperm.xlu0 %459, %v447
      %v461 = vpop.permute.xlu0 %460
      %462 = vset.pattern.permute.xlu0 0
      %463 = vperm.xlu0 %462, %v448
      %v464 = vpop.permute.xlu0 %463
      %465 = vset.pattern.permute.xlu0 0
      %466 = vperm.xlu0 %465, %v449
      %v467 = vpop.permute.xlu0 %466
      %468 = vset.pattern.permute.xlu0 0
      %469 = vperm.xlu0 %468, %v450
      %v470 = vpop.permute.xlu0 %469
      %471 = vset.pattern.permute.xlu0 0
      %472 = vperm.xlu0 %471, %v451
      %v473 = vpop.permute.xlu0 %472
      %474 = vset.pattern.permute.xlu0 0
      %475 = vperm.xlu0 %474, %v452
      %v476 = vpop.permute.xlu0 %475
      %vm477 = vcmp.eq.s32.totalorder %v455, 1
      %vm478 = vcmp.eq.s32.totalorder %v458, 1
      %vm479 = vcmp.eq.s32.totalorder %v461, 1
      %vm480 = vcmp.eq.s32.totalorder %v464, 1
      %vm481 = vcmp.eq.s32.totalorder %v467, 1
      %vm482 = vcmp.eq.s32.totalorder %v470, 1
      %vm483 = vcmp.eq.s32.totalorder %v473, 1
      %vm484 = vcmp.eq.s32.totalorder %v476, 1
      %v485 = vlaneseq
      %v486 = vshrl.u32 %v485, 7
      %v487 = vsub.s32 1, %v486
      %v488 = vrot.slane %v376, %v487
      %v489 = vsel %vm477, %v488, %v429
      %v490 = vsel %vm478, %v488, %v430
      %v491 = vsel %vm479, %v488, %v431
      %v492 = vsel %vm480, %v488, %v432
      %v493 = vsel %vm481, %v488, %v433
      %v494 = vsel %vm482, %v488, %v434
      %v495 = vsel %vm483, %v488, %v435
      %v496 = vsel %vm484, %v488, %v436
      %vm497 = vcmp.eq.s32.totalorder %v368, 2
      %vm498 = vcmp.eq.s32.totalorder %v369, 2
      %vm499 = vcmp.eq.s32.totalorder %v370, 2
      %vm500 = vcmp.eq.s32.totalorder %v371, 2
      %vm501 = vcmp.eq.s32.totalorder %v372, 2
      %vm502 = vcmp.eq.s32.totalorder %v373, 2
      %vm503 = vcmp.eq.s32.totalorder %v374, 2
      %vm504 = vcmp.eq.s32.totalorder %v375, 2
      %v505 = vsel %vm497, 1, 0
      %v506 = vsel %vm498, 1, 0
      %v507 = vsel %vm499, 1, 0
      %v508 = vsel %vm500, 1, 0
      %v509 = vsel %vm501, 1, 0
      %v510 = vsel %vm502, 1, 0
      %v511 = vsel %vm503, 1, 0
      %v512 = vsel %vm504, 1, 0
      %513 = vset.pattern.permute.xlu0 0
      %514 = vperm.xlu0 %513, %v505
      %v515 = vpop.permute.xlu0 %514
      %516 = vset.pattern.permute.xlu0 0
      %517 = vperm.xlu0 %516, %v506
      %v518 = vpop.permute.xlu0 %517
      %519 = vset.pattern.permute.xlu0 0
      %520 = vperm.xlu0 %519, %v507
      %v521 = vpop.permute.xlu0 %520
      %522 = vset.pattern.permute.xlu0 0
      %523 = vperm.xlu0 %522, %v508
      %v524 = vpop.permute.xlu0 %523
      %525 = vset.pattern.permute.xlu0 0
      %526 = vperm.xlu0 %525, %v509
      %v527 = vpop.permute.xlu0 %526
      %528 = vset.pattern.permute.xlu0 0
      %529 = vperm.xlu0 %528, %v510
      %v530 = vpop.permute.xlu0 %529
      %531 = vset.pattern.permute.xlu0 0
      %532 = vperm.xlu0 %531, %v511
      %v533 = vpop.permute.xlu0 %532
      %534 = vset.pattern.permute.xlu0 0
      %535 = vperm.xlu0 %534, %v512
      %v536 = vpop.permute.xlu0 %535
      %vm537 = vcmp.eq.s32.totalorder %v515, 1
      %vm538 = vcmp.eq.s32.totalorder %v518, 1
      %vm539 = vcmp.eq.s32.totalorder %v521, 1
      %vm540 = vcmp.eq.s32.totalorder %v524, 1
      %vm541 = vcmp.eq.s32.totalorder %v527, 1
      %vm542 = vcmp.eq.s32.totalorder %v530, 1
      %vm543 = vcmp.eq.s32.totalorder %v533, 1
      %vm544 = vcmp.eq.s32.totalorder %v536, 1
      %v545 = vlaneseq
      %v546 = vshrl.u32 %v545, 7
      %v547 = vsub.s32 2, %v546
      %v548 = vrot.slane %v376, %v547
      %v549 = vsel %vm537, %v548, %v489
      %v550 = vsel %vm538, %v548, %v490
      %v551 = vsel %vm539, %v548, %v491
      %v552 = vsel %vm540, %v548, %v492
      %v553 = vsel %vm541, %v548, %v493
      %v554 = vsel %vm542, %v548, %v494
      %v555 = vsel %vm543, %v548, %v495
      %v556 = vsel %vm544, %v548, %v496
      %vm557 = vcmp.eq.s32.totalorder %v368, 3
      %vm558 = vcmp.eq.s32.totalorder %v369, 3
      %vm559 = vcmp.eq.s32.totalorder %v370, 3
      %vm560 = vcmp.eq.s32.totalorder %v371, 3
      %vm561 = vcmp.eq.s32.totalorder %v372, 3
      %vm562 = vcmp.eq.s32.totalorder %v373, 3
      %vm563 = vcmp.eq.s32.totalorder %v374, 3
      %vm564 = vcmp.eq.s32.totalorder %v375, 3
      %v565 = vsel %vm557, 1, 0
      %v566 = vsel %vm558, 1, 0
      %v567 = vsel %vm559, 1, 0
      %v568 = vsel %vm560, 1, 0
      %v569 = vsel %vm561, 1, 0
      %v570 = vsel %vm562, 1, 0
      %v571 = vsel %vm563, 1, 0
      %v572 = vsel %vm564, 1, 0
      %573 = vset.pattern.permute.xlu0 0
      %574 = vperm.xlu0 %573, %v565
      %v575 = vpop.permute.xlu0 %574
      %576 = vset.pattern.permute.xlu0 0
      %577 = vperm.xlu0 %576, %v566
      %v578 = vpop.permute.xlu0 %577
      %579 = vset.pattern.permute.xlu0 0
      %580 = vperm.xlu0 %579, %v567
      %v581 = vpop.permute.xlu0 %580
      %582 = vset.pattern.permute.xlu0 0
      %583 = vperm.xlu0 %582, %v568
      %v584 = vpop.permute.xlu0 %583
      %585 = vset.pattern.permute.xlu0 0
      %586 = vperm.xlu0 %585, %v569
      %v587 = vpop.permute.xlu0 %586
      %588 = vset.pattern.permute.xlu0 0
      %589 = vperm.xlu0 %588, %v570
      %v590 = vpop.permute.xlu0 %589
      %591 = vset.pattern.permute.xlu0 0
      %592 = vperm.xlu0 %591, %v571
      %v593 = vpop.permute.xlu0 %592
      %594 = vset.pattern.permute.xlu0 0
      %595 = vperm.xlu0 %594, %v572
      %v596 = vpop.permute.xlu0 %595
      %vm597 = vcmp.eq.s32.totalorder %v575, 1
      %vm598 = vcmp.eq.s32.totalorder %v578, 1
      %vm599 = vcmp.eq.s32.totalorder %v581, 1
      %vm600 = vcmp.eq.s32.totalorder %v584, 1
      %vm601 = vcmp.eq.s32.totalorder %v587, 1
      %vm602 = vcmp.eq.s32.totalorder %v590, 1
      %vm603 = vcmp.eq.s32.totalorder %v593, 1
      %vm604 = vcmp.eq.s32.totalorder %v596, 1
      %v605 = vlaneseq
      %v606 = vshrl.u32 %v605, 7
      %v607 = vsub.s32 3, %v606
      %v608 = vrot.slane %v376, %v607
      %v609 = vsel %vm597, %v608, %v549
      %v610 = vsel %vm598, %v608, %v550
      %v611 = vsel %vm599, %v608, %v551
      %v612 = vsel %vm600, %v608, %v552
      %v613 = vsel %vm601, %v608, %v553
      %v614 = vsel %vm602, %v608, %v554
      %v615 = vsel %vm603, %v608, %v555
      %v616 = vsel %vm604, %v608, %v556
      %vm617 = vcmp.eq.s32.totalorder %v368, 4
      %vm618 = vcmp.eq.s32.totalorder %v369, 4
      %vm619 = vcmp.eq.s32.totalorder %v370, 4
      %vm620 = vcmp.eq.s32.totalorder %v371, 4
      %vm621 = vcmp.eq.s32.totalorder %v372, 4
      %vm622 = vcmp.eq.s32.totalorder %v373, 4
      %vm623 = vcmp.eq.s32.totalorder %v374, 4
      %vm624 = vcmp.eq.s32.totalorder %v375, 4
      %v625 = vsel %vm617, 1, 0
      %v626 = vsel %vm618, 1, 0
      %v627 = vsel %vm619, 1, 0
      %v628 = vsel %vm620, 1, 0
      %v629 = vsel %vm621, 1, 0
      %v630 = vsel %vm622, 1, 0
      %v631 = vsel %vm623, 1, 0
      %v632 = vsel %vm624, 1, 0
      %633 = vset.pattern.permute.xlu0 0
      %634 = vperm.xlu0 %633, %v625
      %v635 = vpop.permute.xlu0 %634
      %636 = vset.pattern.permute.xlu0 0
      %637 = vperm.xlu0 %636, %v626
      %v638 = vpop.permute.xlu0 %637
      %639 = vset.pattern.permute.xlu0 0
      %640 = vperm.xlu0 %639, %v627
      %v641 = vpop.permute.xlu0 %640
      %642 = vset.pattern.permute.xlu0 0
      %643 = vperm.xlu0 %642, %v628
      %v644 = vpop.permute.xlu0 %643
      %645 = vset.pattern.permute.xlu0 0
      %646 = vperm.xlu0 %645, %v629
      %v647 = vpop.permute.xlu0 %646
      %648 = vset.pattern.permute.xlu0 0
      %649 = vperm.xlu0 %648, %v630
      %v650 = vpop.permute.xlu0 %649
      %651 = vset.pattern.permute.xlu0 0
      %652 = vperm.xlu0 %651, %v631
      %v653 = vpop.permute.xlu0 %652
      %654 = vset.pattern.permute.xlu0 0
      %655 = vperm.xlu0 %654, %v632
      %v656 = vpop.permute.xlu0 %655
      %vm657 = vcmp.eq.s32.totalorder %v635, 1
      %vm658 = vcmp.eq.s32.totalorder %v638, 1
      %vm659 = vcmp.eq.s32.totalorder %v641, 1
      %vm660 = vcmp.eq.s32.totalorder %v644, 1
      %vm661 = vcmp.eq.s32.totalorder %v647, 1
      %vm662 = vcmp.eq.s32.totalorder %v650, 1
      %vm663 = vcmp.eq.s32.totalorder %v653, 1
      %vm664 = vcmp.eq.s32.totalorder %v656, 1
      %v665 = vlaneseq
      %v666 = vshrl.u32 %v665, 7
      %v667 = vsub.s32 4, %v666
      %v668 = vrot.slane %v376, %v667
      %v669 = vsel %vm657, %v668, %v609
      %v670 = vsel %vm658, %v668, %v610
      %v671 = vsel %vm659, %v668, %v611
      %v672 = vsel %vm660, %v668, %v612
      %v673 = vsel %vm661, %v668, %v613
      %v674 = vsel %vm662, %v668, %v614
      %v675 = vsel %vm663, %v668, %v615
      %v676 = vsel %vm664, %v668, %v616
      %vm677 = vcmp.eq.s32.totalorder %v368, 5
      %vm678 = vcmp.eq.s32.totalorder %v369, 5
      %vm679 = vcmp.eq.s32.totalorder %v370, 5
      %vm680 = vcmp.eq.s32.totalorder %v371, 5
      %vm681 = vcmp.eq.s32.totalorder %v372, 5
      %vm682 = vcmp.eq.s32.totalorder %v373, 5
      %vm683 = vcmp.eq.s32.totalorder %v374, 5
      %vm684 = vcmp.eq.s32.totalorder %v375, 5
      %v685 = vsel %vm677, 1, 0
      %v686 = vsel %vm678, 1, 0
      %v687 = vsel %vm679, 1, 0
      %v688 = vsel %vm680, 1, 0
      %v689 = vsel %vm681, 1, 0
      %v690 = vsel %vm682, 1, 0
      %v691 = vsel %vm683, 1, 0
      %v692 = vsel %vm684, 1, 0
      %693 = vset.pattern.permute.xlu0 0
      %694 = vperm.xlu0 %693, %v685
      %v695 = vpop.permute.xlu0 %694
      %696 = vset.pattern.permute.xlu0 0
      %697 = vperm.xlu0 %696, %v686
      %v698 = vpop.permute.xlu0 %697
      %699 = vset.pattern.permute.xlu0 0
      %700 = vperm.xlu0 %699, %v687
      %v701 = vpop.permute.xlu0 %700
      %702 = vset.pattern.permute.xlu0 0
      %703 = vperm.xlu0 %702, %v688
      %v704 = vpop.permute.xlu0 %703
      %705 = vset.pattern.permute.xlu0 0
      %706 = vperm.xlu0 %705, %v689
      %v707 = vpop.permute.xlu0 %706
      %708 = vset.pattern.permute.xlu0 0
      %709 = vperm.xlu0 %708, %v690
      %v710 = vpop.permute.xlu0 %709
      %711 = vset.pattern.permute.xlu0 0
      %712 = vperm.xlu0 %711, %v691
      %v713 = vpop.permute.xlu0 %712
      %714 = vset.pattern.permute.xlu0 0
      %715 = vperm.xlu0 %714, %v692
      %v716 = vpop.permute.xlu0 %715
      %vm717 = vcmp.eq.s32.totalorder %v695, 1
      %vm718 = vcmp.eq.s32.totalorder %v698, 1
      %vm719 = vcmp.eq.s32.totalorder %v701, 1
      %vm720 = vcmp.eq.s32.totalorder %v704, 1
      %vm721 = vcmp.eq.s32.totalorder %v707, 1
      %vm722 = vcmp.eq.s32.totalorder %v710, 1
      %vm723 = vcmp.eq.s32.totalorder %v713, 1
      %vm724 = vcmp.eq.s32.totalorder %v716, 1
      %v725 = vlaneseq
      %v726 = vshrl.u32 %v725, 7
      %v727 = vsub.s32 5, %v726
      %v728 = vrot.slane %v376, %v727
      %v729 = vsel %vm717, %v728, %v669
      %v730 = vsel %vm718, %v728, %v670
      %v731 = vsel %vm719, %v728, %v671
      %v732 = vsel %vm720, %v728, %v672
      %v733 = vsel %vm721, %v728, %v673
      %v734 = vsel %vm722, %v728, %v674
      %v735 = vsel %vm723, %v728, %v675
      %v736 = vsel %vm724, %v728, %v676
      %vm737 = vcmp.eq.s32.totalorder %v368, 6
      %vm738 = vcmp.eq.s32.totalorder %v369, 6
      %vm739 = vcmp.eq.s32.totalorder %v370, 6
      %vm740 = vcmp.eq.s32.totalorder %v371, 6
      %vm741 = vcmp.eq.s32.totalorder %v372, 6
      %vm742 = vcmp.eq.s32.totalorder %v373, 6
      %vm743 = vcmp.eq.s32.totalorder %v374, 6
      %vm744 = vcmp.eq.s32.totalorder %v375, 6
      %v745 = vsel %vm737, 1, 0
      %v746 = vsel %vm738, 1, 0
      %v747 = vsel %vm739, 1, 0
      %v748 = vsel %vm740, 1, 0
      %v749 = vsel %vm741, 1, 0
      %v750 = vsel %vm742, 1, 0
      %v751 = vsel %vm743, 1, 0
      %v752 = vsel %vm744, 1, 0
      %753 = vset.pattern.permute.xlu0 0
      %754 = vperm.xlu0 %753, %v745
      %v755 = vpop.permute.xlu0 %754
      %756 = vset.pattern.permute.xlu0 0
      %757 = vperm.xlu0 %756, %v746
      %v758 = vpop.permute.xlu0 %757
      %759 = vset.pattern.permute.xlu0 0
      %760 = vperm.xlu0 %759, %v747
      %v761 = vpop.permute.xlu0 %760
      %762 = vset.pattern.permute.xlu0 0
      %763 = vperm.xlu0 %762, %v748
      %v764 = vpop.permute.xlu0 %763
      %765 = vset.pattern.permute.xlu0 0
      %766 = vperm.xlu0 %765, %v749
      %v767 = vpop.permute.xlu0 %766
      %768 = vset.pattern.permute.xlu0 0
      %769 = vperm.xlu0 %768, %v750
      %v770 = vpop.permute.xlu0 %769
      %771 = vset.pattern.permute.xlu0 0
      %772 = vperm.xlu0 %771, %v751
      %v773 = vpop.permute.xlu0 %772
      %774 = vset.pattern.permute.xlu0 0
      %775 = vperm.xlu0 %774, %v752
      %v776 = vpop.permute.xlu0 %775
      %vm777 = vcmp.eq.s32.totalorder %v755, 1
      %vm778 = vcmp.eq.s32.totalorder %v758, 1
      %vm779 = vcmp.eq.s32.totalorder %v761, 1
      %vm780 = vcmp.eq.s32.totalorder %v764, 1
      %vm781 = vcmp.eq.s32.totalorder %v767, 1
      %vm782 = vcmp.eq.s32.totalorder %v770, 1
      %vm783 = vcmp.eq.s32.totalorder %v773, 1
      %vm784 = vcmp.eq.s32.totalorder %v776, 1
      %v785 = vlaneseq
      %v786 = vshrl.u32 %v785, 7
      %v787 = vsub.s32 6, %v786
      %v788 = vrot.slane %v376, %v787
      %v789 = vsel %vm777, %v788, %v729
      %v790 = vsel %vm778, %v788, %v730
      %v791 = vsel %vm779, %v788, %v731
      %v792 = vsel %vm780, %v788, %v732
      %v793 = vsel %vm781, %v788, %v733
      %v794 = vsel %vm782, %v788, %v734
      %v795 = vsel %vm783, %v788, %v735
      %v796 = vsel %vm784, %v788, %v736
      %v797 = vld [vmem:[%s3] sm:$0x1]
      %v799 = vlaneseq
      %v800 = vshrl.u32 %v799, 7
      %v801 = vsub.s32 0, %v800
      %v802 = vrot.slane %v797, %v801
      %v804 = vadd.f32 %v789, %v802
      %v805 = vadd.f32 %v790, %v802
      %v806 = vadd.f32 %v791, %v802
      %v807 = vadd.f32 %v792, %v802
      %v808 = vadd.f32 %v793, %v802
      %v809 = vadd.f32 %v794, %v802
      %v810 = vadd.f32 %v795, %v802
      %v811 = vadd.f32 %v796, %v802
      %v812 = vld [vmem:[%s358] sm:$0xf]
      %v813 = vld [vmem:[%s358 + $0x4] sm:$0x1]
      %v814 = vld [vmem:[%s358 + $0x8] sm:$0xf]
      %v815 = vld [vmem:[%s358 + $0xc] sm:$0x1]
      %v816 = vld [vmem:[%s358 + $0x10] sm:$0xf]
      %v817 = vld [vmem:[%s358 + $0x14] sm:$0x1]
      %v818 = vld [vmem:[%s358 + $0x18] sm:$0xf]
      %v819 = vld [vmem:[%s358 + $0x1c] sm:$0x1]
      %v820 = vunpack.c.l.bf16 %v812
      %v821 = vunpack.c.l.bf16 %v813
      %v822 = vunpack.c.l.bf16 %v814
      %v823 = vunpack.c.l.bf16 %v815
      %v824 = vunpack.c.l.bf16 %v816
      %v825 = vunpack.c.l.bf16 %v817
      %v826 = vunpack.c.l.bf16 %v818
      %v827 = vunpack.c.l.bf16 %v819
      %vm828 = vcmask 72704
      %v829 = vsel %vm828, %v820, 0.0
      %830 = vadd.xlane.f32.xlu0 %v829
      %v831 = vpop.xlane.xlu0 %830
      %vm832 = vcmask 65536
      %v833 = vsel %vm832, %v821, 0.0
      %834 = vadd.xlane.f32.xlu0 %v833
      %v835 = vpop.xlane.xlu0 %834
      %v836 = vsel %vm828, %v822, 0.0
      %837 = vadd.xlane.f32.xlu0 %v836
      %v838 = vpop.xlane.xlu0 %837
      %v839 = vsel %vm832, %v823, 0.0
      %840 = vadd.xlane.f32.xlu0 %v839
      %v841 = vpop.xlane.xlu0 %840
      %v842 = vsel %vm828, %v824, 0.0
      %843 = vadd.xlane.f32.xlu0 %v842
      %v844 = vpop.xlane.xlu0 %843
      %v845 = vsel %vm832, %v825, 0.0
      %846 = vadd.xlane.f32.xlu0 %v845
      %v847 = vpop.xlane.xlu0 %846
      %v848 = vsel %vm828, %v826, 0.0
      %849 = vadd.xlane.f32.xlu0 %v848
      %v850 = vpop.xlane.xlu0 %849
      %v851 = vsel %vm832, %v827, 0.0
      %852 = vadd.xlane.f32.xlu0 %v851
      %v853 = vpop.xlane.xlu0 %852
      %v854 = vadd.f32 %v831, 1e-06
      %v855 = vadd.f32 %v835, 1e-06
      %v856 = vadd.f32 %v838, 1e-06
      %v857 = vadd.f32 %v841, 1e-06
      %v858 = vadd.f32 %v844, 1e-06
      %v859 = vadd.f32 %v847, 1e-06
      %v860 = vadd.f32 %v850, 1e-06
      %v861 = vadd.f32 %v853, 1e-06
      %v862 = vrcp.pop %v854
      %v863 = vrcp.pop %v855
      %v864 = vrcp.pop %v856
      %v865 = vrcp.pop %v857
      %v866 = vrcp.pop %v858
      %v867 = vrcp.pop %v859
      %v868 = vrcp.pop %v860
      %v869 = vrcp.pop %v861
      %v870 = vld [vmem:[%s4] sm:$0xf]
      %v871 = vld [vmem:[%s4 + $0x4] sm:$0xf]
      %v872 = vld [vmem:[%s4 + $0x8] sm:$0xf]
      %v873 = vld [vmem:[%s4 + $0xc] sm:$0xf]
      %v874 = vld [vmem:[%s5] sm:$0xf]
      %v875 = vld [vmem:[%s5 + $0x4] sm:$0xf]
      %v876 = vld [vmem:[%s5 + $0x8] sm:$0xf]
      %v877 = vld [vmem:[%s5 + $0xc] sm:$0xf]
      %v878 = vld [vmem:[%s6] sm:$0xf]
      %v879 = vld [vmem:[%s6 + $0x4] sm:$0xf]
      %v880 = vld [vmem:[%s6 + $0x8] sm:$0xf]
      %v881 = vld [vmem:[%s6 + $0xc] sm:$0xf]
      %v882 = vpack.c.bf16 %v805, %v804
      %v883 = vpack.c.bf16 %v807, %v806
      %v884 = vpack.c.bf16 %v809, %v808
      %v885 = vpack.c.bf16 %v811, %v810
      %v888 = vunpack.c.l.b16 %v812
      %v889 = vunpack.c.l.b16 %v813
      %v890 = vpack.c.b16 %v889, %v888
      %v892 = vsel %vm828, %v890, 0
      %vm894 = vcmask 1043456
      %vm895 = vcmask 1044480
      %v896 = vsel %vm894, 4294967295, 65535
      %v897 = vsel %vm895, %v896, 0
      %v899 = vand.u32 %v882, %v897
      %901 = vmatprep.subr.bf16.mxu0 0
      %902 = vmatpush1.bf16.msra.mxu0 0
      %903 = vmatprep.subr.bf16.mxu0 0
      %904 = vmatpush1.bf16.msra.mxu0 0
      %905 = vmatprep.subr.bf16.mxu0 0
      %906 = vmatpush1.bf16.msra.mxu0 0
      %907 = vmatprep.subr.bf16.mxu0 0
      %908 = vmatpush1.bf16.msra.mxu0 0
      %909 = vmatprep.subr.bf16.mxu0 0
      %910 = vmatpush1.bf16.msra.mxu0 0
      %911 = vmatprep.subr.bf16.mxu0 0
      %912 = vmatpush1.bf16.msra.mxu0 0
      %913 = vmatprep.subr.bf16.mxu0 0
      %914 = vmatpush1.bf16.msra.mxu0 0
      %915 = vmatprep.subr.bf16.mxu0 0
      %916 = vmatpush1.bf16.msra.mxu0 %v899
      %917 = vmatprep.subr.bf16.mxu0 0
      %918 = vmatpush2.bf16.msra.mxu0 0
      %919 = vmatprep.subr.bf16.mxu0 0
      %920 = vmatpush2.bf16.msra.mxu0 0
      %921 = vmatprep.subr.bf16.mxu0 0
      %922 = vmatpush2.bf16.msra.mxu0 0
      %923 = vmatprep.subr.bf16.mxu0 0
      %924 = vmatpush2.bf16.msra.mxu0 0
      %925 = vmatprep.subr.bf16.mxu0 0
      %926 = vmatpush2.bf16.msra.mxu0 0
      %927 = vmatprep.subr.bf16.mxu0 0
      %928 = vmatpush2.bf16.msra.mxu0 0
      %929 = vmatprep.subr.bf16.mxu0 0
      %930 = vmatpush2.bf16.msra.mxu0 0
      %931 = vmatprep.subr.bf16.mxu0 0
      %932 = vmatpush2.bf16.msra.mxu0 0
      %933 = vmatprep.mubr.bf16.mxu0 0
      %934 = vmatmul.mubr.bf16.gmra.mxu0 %v892
      %v935 = vpop.f32.mrf.mxu0
      %v936 = vadd.f32 0.0, %v935
      %v937 = vpop.f32.mrf.mxu0
      %v938 = vpop.f32.mrf.mxu0
      %v939 = vadd.f32 0.0, %v938
      %v940 = vpop.f32.mrf.mxu0
      %941 = vdwg.mxu0
      %v944 = vunpack.c.l.b16 %v814
      %v945 = vunpack.c.l.b16 %v815
      %v946 = vpack.c.b16 %v945, %v944
      %v948 = vsel %vm828, %v946, 0
      %v951 = vand.u32 %v883, %v897
      %953 = vmatprep.subr.bf16.mxu0 0
      %954 = vmatpush1.bf16.msra.mxu0 0
      %955 = vmatprep.subr.bf16.mxu0 0
      %956 = vmatpush1.bf16.msra.mxu0 0
      %957 = vmatprep.subr.bf16.mxu0 0
      %958 = vmatpush1.bf16.msra.mxu0 0
      %959 = vmatprep.subr.bf16.mxu0 0
      %960 = vmatpush1.bf16.msra.mxu0 0
      %961 = vmatprep.subr.bf16.mxu0 0
      %962 = vmatpush1.bf16.msra.mxu0 0
      %963 = vmatprep.subr.bf16.mxu0 0
      %964 = vmatpush1.bf16.msra.mxu0 0
      %965 = vmatprep.subr.bf16.mxu0 0
      %966 = vmatpush1.bf16.msra.mxu0 0
      %967 = vmatprep.subr.bf16.mxu0 0
      %968 = vmatpush1.bf16.msra.mxu0 %v951
      %969 = vmatprep.subr.bf16.mxu0 0
      %970 = vmatpush2.bf16.msra.mxu0 0
      %971 = vmatprep.subr.bf16.mxu0 0
      %972 = vmatpush2.bf16.msra.mxu0 0
      %973 = vmatprep.subr.bf16.mxu0 0
      %974 = vmatpush2.bf16.msra.mxu0 0
      %975 = vmatprep.subr.bf16.mxu0 0
      %976 = vmatpush2.bf16.msra.mxu0 0
      %977 = vmatprep.subr.bf16.mxu0 0
      %978 = vmatpush2.bf16.msra.mxu0 0
      %979 = vmatprep.subr.bf16.mxu0 0
      %980 = vmatpush2.bf16.msra.mxu0 0
      %981 = vmatprep.subr.bf16.mxu0 0
      %982 = vmatpush2.bf16.msra.mxu0 0
      %983 = vmatprep.subr.bf16.mxu0 0
      %984 = vmatpush2.bf16.msra.mxu0 0
      %985 = vmatprep.mubr.bf16.mxu0 0
      %986 = vmatmul.mubr.bf16.gmra.mxu0 %v948
      %v987 = vpop.f32.mrf.mxu0
      %v988 = vadd.f32 0.0, %v987
      %v989 = vpop.f32.mrf.mxu0
      %v990 = vpop.f32.mrf.mxu0
      %v991 = vadd.f32 0.0, %v990
      %v992 = vpop.f32.mrf.mxu0
      %993 = vdwg.mxu0
      %v996 = vunpack.c.l.b16 %v816
      %v997 = vunpack.c.l.b16 %v817
      %v998 = vpack.c.b16 %v997, %v996
      %v1000 = vsel %vm828, %v998, 0
      %v1003 = vand.u32 %v884, %v897
      %1005 = vmatprep.subr.bf16.mxu0 0
      %1006 = vmatpush1.bf16.msra.mxu0 0
      %1007 = vmatprep.subr.bf16.mxu0 0
      %1008 = vmatpush1.bf16.msra.mxu0 0
      %1009 = vmatprep.subr.bf16.mxu0 0
      %1010 = vmatpush1.bf16.msra.mxu0 0
      %1011 = vmatprep.subr.bf16.mxu0 0
      %1012 = vmatpush1.bf16.msra.mxu0 0
      %1013 = vmatprep.subr.bf16.mxu0 0
      %1014 = vmatpush1.bf16.msra.mxu0 0
      %1015 = vmatprep.subr.bf16.mxu0 0
      %1016 = vmatpush1.bf16.msra.mxu0 0
      %1017 = vmatprep.subr.bf16.mxu0 0
      %1018 = vmatpush1.bf16.msra.mxu0 0
      %1019 = vmatprep.subr.bf16.mxu0 0
      %1020 = vmatpush1.bf16.msra.mxu0 %v1003
      %1021 = vmatprep.subr.bf16.mxu0 0
      %1022 = vmatpush2.bf16.msra.mxu0 0
      %1023 = vmatprep.subr.bf16.mxu0 0
      %1024 = vmatpush2.bf16.msra.mxu0 0
      %1025 = vmatprep.subr.bf16.mxu0 0
      %1026 = vmatpush2.bf16.msra.mxu0 0
      %1027 = vmatprep.subr.bf16.mxu0 0
      %1028 = vmatpush2.bf16.msra.mxu0 0
      %1029 = vmatprep.subr.bf16.mxu0 0
      %1030 = vmatpush2.bf16.msra.mxu0 0
      %1031 = vmatprep.subr.bf16.mxu0 0
      %1032 = vmatpush2.bf16.msra.mxu0 0
      %1033 = vmatprep.subr.bf16.mxu0 0
      %1034 = vmatpush2.bf16.msra.mxu0 0
      %1035 = vmatprep.subr.bf16.mxu0 0
      %1036 = vmatpush2.bf16.msra.mxu0 0
      %1037 = vmatprep.mubr.bf16.mxu0 0
      %1038 = vmatmul.mubr.bf16.gmra.mxu0 %v1000
      %v1039 = vpop.f32.mrf.mxu0
      %v1040 = vadd.f32 0.0, %v1039
      %v1041 = vpop.f32.mrf.mxu0
      %v1042 = vpop.f32.mrf.mxu0
      %v1043 = vadd.f32 0.0, %v1042
      %v1044 = vpop.f32.mrf.mxu0
      %1045 = vdwg.mxu0
      %v1048 = vunpack.c.l.b16 %v818
      %v1049 = vunpack.c.l.b16 %v819
      %v1050 = vpack.c.b16 %v1049, %v1048
      %v1052 = vsel %vm828, %v1050, 0
      %v1055 = vand.u32 %v885, %v897
      %1057 = vmatprep.subr.bf16.mxu0 0
      %1058 = vmatpush1.bf16.msra.mxu0 0
      %1059 = vmatprep.subr.bf16.mxu0 0
      %1060 = vmatpush1.bf16.msra.mxu0 0
      %1061 = vmatprep.subr.bf16.mxu0 0
      %1062 = vmatpush1.bf16.msra.mxu0 0
      %1063 = vmatprep.subr.bf16.mxu0 0
      %1064 = vmatpush1.bf16.msra.mxu0 0
      %1065 = vmatprep.subr.bf16.mxu0 0
      %1066 = vmatpush1.bf16.msra.mxu0 0
      %1067 = vmatprep.subr.bf16.mxu0 0
      %1068 = vmatpush1.bf16.msra.mxu0 0
      %1069 = vmatprep.subr.bf16.mxu0 0
      %1070 = vmatpush1.bf16.msra.mxu0 0
      %1071 = vmatprep.subr.bf16.mxu0 0
      %1072 = vmatpush1.bf16.msra.mxu0 %v1055
      %1073 = vmatprep.subr.bf16.mxu0 0
      %1074 = vmatpush2.bf16.msra.mxu0 0
      %1075 = vmatprep.subr.bf16.mxu0 0
      %1076 = vmatpush2.bf16.msra.mxu0 0
      %1077 = vmatprep.subr.bf16.mxu0 0
      %1078 = vmatpush2.bf16.msra.mxu0 0
      %1079 = vmatprep.subr.bf16.mxu0 0
      %1080 = vmatpush2.bf16.msra.mxu0 0
      %1081 = vmatprep.subr.bf16.mxu0 0
      %1082 = vmatpush2.bf16.msra.mxu0 0
      %1083 = vmatprep.subr.bf16.mxu0 0
      %1084 = vmatpush2.bf16.msra.mxu0 0
      %1085 = vmatprep.subr.bf16.mxu0 0
      %1086 = vmatpush2.bf16.msra.mxu0 0
      %1087 = vmatprep.subr.bf16.mxu0 0
      %1088 = vmatpush2.bf16.msra.mxu0 0
      %1089 = vmatprep.mubr.bf16.mxu0 0
      %1090 = vmatmul.mubr.bf16.gmra.mxu0 %v1052
      %v1091 = vpop.f32.mrf.mxu0
      %v1092 = vadd.f32 0.0, %v1091
      %v1093 = vpop.f32.mrf.mxu0
      %v1094 = vpop.f32.mrf.mxu0
      %v1095 = vadd.f32 0.0, %v1094
      %v1096 = vpop.f32.mrf.mxu0
      %1097 = vdwg.mxu0
      %v1098 = vmul.f32 %v936, %v862
      %v1099 = vmul.f32 %v939, %v863
      %v1100 = vmul.f32 %v988, %v864
      %v1101 = vmul.f32 %v991, %v865
      %v1102 = vmul.f32 %v1040, %v866
      %v1103 = vmul.f32 %v1043, %v867
      %v1104 = vmul.f32 %v1092, %v868
      %v1105 = vmul.f32 %v1095, %v869
      %v1106 = vpack.c.bf16 %v1099, %v1098
      %v1107 = vpack.c.bf16 %v1101, %v1100
      %v1108 = vpack.c.bf16 %v1103, %v1102
      %v1109 = vpack.c.bf16 %v1105, %v1104
      %v1114 = vunpack.c.l.b16 %v870
      %v1115 = vunpack.c.l.b16 %v871
      %v1116 = vunpack.c.l.b16 %v872
      %v1117 = vunpack.c.l.b16 %v873
      %v1118 = vpack.c.b16 %v1115, %v1114
      %v1119 = vpack.c.b16 %v1117, %v1116
      %vm1122 = vcmask 261120
      %v1124 = vsel %vm1122, %v1106, 0
      %1126 = vmatprep.subr.bf16.mxu0 0
      %1127 = vmatpush1.bf16.msra.mxu0 0
      %1128 = vmatprep.subr.bf16.mxu0 0
      %1129 = vmatpush1.bf16.msra.mxu0 0
      %1130 = vmatprep.subr.bf16.mxu0 0
      %1131 = vmatpush1.bf16.msra.mxu0 0
      %1132 = vmatprep.subr.bf16.mxu0 0
      %1133 = vmatpush1.bf16.msra.mxu0 0
      %1134 = vmatprep.subr.bf16.mxu0 0
      %1135 = vmatpush1.bf16.msra.mxu0 0
      %1136 = vmatprep.subr.bf16.mxu0 0
      %1137 = vmatpush1.bf16.msra.mxu0 0
      %1138 = vmatprep.subr.bf16.mxu0 0
      %1139 = vmatpush1.bf16.msra.mxu0 %v1119
      %1140 = vmatprep.subr.bf16.mxu0 0
      %1141 = vmatpush1.bf16.msra.mxu0 %v1118
      %1142 = vmatprep.subr.bf16.mxu0 0
      %1143 = vmatpush2.bf16.msra.mxu0 0
      %1144 = vmatprep.subr.bf16.mxu0 0
      %1145 = vmatpush2.bf16.msra.mxu0 0
      %1146 = vmatprep.subr.bf16.mxu0 0
      %1147 = vmatpush2.bf16.msra.mxu0 0
      %1148 = vmatprep.subr.bf16.mxu0 0
      %1149 = vmatpush2.bf16.msra.mxu0 0
      %1150 = vmatprep.subr.bf16.mxu0 0
      %1151 = vmatpush2.bf16.msra.mxu0 0
      %1152 = vmatprep.subr.bf16.mxu0 0
      %1153 = vmatpush2.bf16.msra.mxu0 0
      %1154 = vmatprep.subr.bf16.mxu0 0
      %1155 = vmatpush2.bf16.msra.mxu0 0
      %1156 = vmatprep.subr.bf16.mxu0 0
      %1157 = vmatpush2.bf16.msra.mxu0 0
      %1158 = vmatprep.mubr.bf16.mxu0 0
      %1159 = vmatmul.mubr.bf16.gmra.mxu0 %v1124
      %v1160 = vpop.f32.mrf.mxu0
      %v1161 = vadd.f32 0.0, %v1160
      %v1162 = vpop.f32.mrf.mxu0
      %v1163 = vpop.f32.mrf.mxu0
      %v1164 = vadd.f32 0.0, %v1163
      %v1165 = vpop.f32.mrf.mxu0
      %1166 = vdwg.mxu0
      %v1168 = vsel %vm1122, %v1107, 0
      %1170 = vmatprep.subr.bf16.mxu0 0
      %1171 = vmatpush1.bf16.msra.mxu0 0
      %1172 = vmatprep.subr.bf16.mxu0 0
      %1173 = vmatpush1.bf16.msra.mxu0 0
      %1174 = vmatprep.subr.bf16.mxu0 0
      %1175 = vmatpush1.bf16.msra.mxu0 0
      %1176 = vmatprep.subr.bf16.mxu0 0
      %1177 = vmatpush1.bf16.msra.mxu0 0
      %1178 = vmatprep.subr.bf16.mxu0 0
      %1179 = vmatpush1.bf16.msra.mxu0 0
      %1180 = vmatprep.subr.bf16.mxu0 0
      %1181 = vmatpush1.bf16.msra.mxu0 0
      %1182 = vmatprep.subr.bf16.mxu0 0
      %1183 = vmatpush1.bf16.msra.mxu0 %v1119
      %1184 = vmatprep.subr.bf16.mxu0 0
      %1185 = vmatpush1.bf16.msra.mxu0 %v1118
      %1186 = vmatprep.subr.bf16.mxu0 0
      %1187 = vmatpush2.bf16.msra.mxu0 0
      %1188 = vmatprep.subr.bf16.mxu0 0
      %1189 = vmatpush2.bf16.msra.mxu0 0
      %1190 = vmatprep.subr.bf16.mxu0 0
      %1191 = vmatpush2.bf16.msra.mxu0 0
      %1192 = vmatprep.subr.bf16.mxu0 0
      %1193 = vmatpush2.bf16.msra.mxu0 0
      %1194 = vmatprep.subr.bf16.mxu0 0
      %1195 = vmatpush2.bf16.msra.mxu0 0
      %1196 = vmatprep.subr.bf16.mxu0 0
      %1197 = vmatpush2.bf16.msra.mxu0 0
      %1198 = vmatprep.subr.bf16.mxu0 0
      %1199 = vmatpush2.bf16.msra.mxu0 0
      %1200 = vmatprep.subr.bf16.mxu0 0
      %1201 = vmatpush2.bf16.msra.mxu0 0
      %1202 = vmatprep.mubr.bf16.mxu0 0
      %1203 = vmatmul.mubr.bf16.gmra.mxu0 %v1168
      %v1204 = vpop.f32.mrf.mxu0
      %v1205 = vadd.f32 0.0, %v1204
      %v1206 = vpop.f32.mrf.mxu0
      %v1207 = vpop.f32.mrf.mxu0
      %v1208 = vadd.f32 0.0, %v1207
      %v1209 = vpop.f32.mrf.mxu0
      %1210 = vdwg.mxu0
      %v1212 = vsel %vm1122, %v1108, 0
      %1214 = vmatprep.subr.bf16.mxu0 0
      %1215 = vmatpush1.bf16.msra.mxu0 0
      %1216 = vmatprep.subr.bf16.mxu0 0
      %1217 = vmatpush1.bf16.msra.mxu0 0
      %1218 = vmatprep.subr.bf16.mxu0 0
      %1219 = vmatpush1.bf16.msra.mxu0 0
      %1220 = vmatprep.subr.bf16.mxu0 0
      %1221 = vmatpush1.bf16.msra.mxu0 0
      %1222 = vmatprep.subr.bf16.mxu0 0
      %1223 = vmatpush1.bf16.msra.mxu0 0
      %1224 = vmatprep.subr.bf16.mxu0 0
      %1225 = vmatpush1.bf16.msra.mxu0 0
      %1226 = vmatprep.subr.bf16.mxu0 0
      %1227 = vmatpush1.bf16.msra.mxu0 %v1119
      %1228 = vmatprep.subr.bf16.mxu0 0
      %1229 = vmatpush1.bf16.msra.mxu0 %v1118
      %1230 = vmatprep.subr.bf16.mxu0 0
      %1231 = vmatpush2.bf16.msra.mxu0 0
      %1232 = vmatprep.subr.bf16.mxu0 0
      %1233 = vmatpush2.bf16.msra.mxu0 0
      %1234 = vmatprep.subr.bf16.mxu0 0
      %1235 = vmatpush2.bf16.msra.mxu0 0
      %1236 = vmatprep.subr.bf16.mxu0 0
      %1237 = vmatpush2.bf16.msra.mxu0 0
      %1238 = vmatprep.subr.bf16.mxu0 0
      %1239 = vmatpush2.bf16.msra.mxu0 0
      %1240 = vmatprep.subr.bf16.mxu0 0
      %1241 = vmatpush2.bf16.msra.mxu0 0
      %1242 = vmatprep.subr.bf16.mxu0 0
      %1243 = vmatpush2.bf16.msra.mxu0 0
      %1244 = vmatprep.subr.bf16.mxu0 0
      %1245 = vmatpush2.bf16.msra.mxu0 0
      %1246 = vmatprep.mubr.bf16.mxu0 0
      %1247 = vmatmul.mubr.bf16.gmra.mxu0 %v1212
      %v1248 = vpop.f32.mrf.mxu0
      %v1249 = vadd.f32 0.0, %v1248
      %v1250 = vpop.f32.mrf.mxu0
      %v1251 = vpop.f32.mrf.mxu0
      %v1252 = vadd.f32 0.0, %v1251
      %v1253 = vpop.f32.mrf.mxu0
      %1254 = vdwg.mxu0
      %v1256 = vsel %vm1122, %v1109, 0
      %1258 = vmatprep.subr.bf16.mxu0 0
      %1259 = vmatpush1.bf16.msra.mxu0 0
      %1260 = vmatprep.subr.bf16.mxu0 0
      %1261 = vmatpush1.bf16.msra.mxu0 0
      %1262 = vmatprep.subr.bf16.mxu0 0
      %1263 = vmatpush1.bf16.msra.mxu0 0
      %1264 = vmatprep.subr.bf16.mxu0 0
      %1265 = vmatpush1.bf16.msra.mxu0 0
      %1266 = vmatprep.subr.bf16.mxu0 0
      %1267 = vmatpush1.bf16.msra.mxu0 0
      %1268 = vmatprep.subr.bf16.mxu0 0
      %1269 = vmatpush1.bf16.msra.mxu0 0
      %1270 = vmatprep.subr.bf16.mxu0 0
      %1271 = vmatpush1.bf16.msra.mxu0 %v1119
      %1272 = vmatprep.subr.bf16.mxu0 0
      %1273 = vmatpush1.bf16.msra.mxu0 %v1118
      %1274 = vmatprep.subr.bf16.mxu0 0
      %1275 = vmatpush2.bf16.msra.mxu0 0
      %1276 = vmatprep.subr.bf16.mxu0 0
      %1277 = vmatpush2.bf16.msra.mxu0 0
      %1278 = vmatprep.subr.bf16.mxu0 0
      %1279 = vmatpush2.bf16.msra.mxu0 0
      %1280 = vmatprep.subr.bf16.mxu0 0
      %1281 = vmatpush2.bf16.msra.mxu0 0
      %1282 = vmatprep.subr.bf16.mxu0 0
      %1283 = vmatpush2.bf16.msra.mxu0 0
      %1284 = vmatprep.subr.bf16.mxu0 0
      %1285 = vmatpush2.bf16.msra.mxu0 0
      %1286 = vmatprep.subr.bf16.mxu0 0
      %1287 = vmatpush2.bf16.msra.mxu0 0
      %1288 = vmatprep.subr.bf16.mxu0 0
      %1289 = vmatpush2.bf16.msra.mxu0 0
      %1290 = vmatprep.mubr.bf16.mxu0 0
      %1291 = vmatmul.mubr.bf16.gmra.mxu0 %v1256
      %v1292 = vpop.f32.mrf.mxu0
      %v1293 = vadd.f32 0.0, %v1292
      %v1294 = vpop.f32.mrf.mxu0
      %v1295 = vpop.f32.mrf.mxu0
      %v1296 = vadd.f32 0.0, %v1295
      %v1297 = vpop.f32.mrf.mxu0
      %1298 = vdwg.mxu0
      %v1299 = vmax.f32 %v1161, 0.0
      %v1300 = vmax.f32 %v1164, 0.0
      %v1301 = vmax.f32 %v1205, 0.0
      %v1302 = vmax.f32 %v1208, 0.0
      %v1303 = vmax.f32 %v1249, 0.0
      %v1304 = vmax.f32 %v1252, 0.0
      %v1305 = vmax.f32 %v1293, 0.0
      %v1306 = vmax.f32 %v1296, 0.0
      %v1307 = vadd.f32 %v1299, %v804
      %v1308 = vadd.f32 %v1300, %v805
      %v1309 = vadd.f32 %v1301, %v806
      %v1310 = vadd.f32 %v1302, %v807
      %v1311 = vadd.f32 %v1303, %v808
      %v1312 = vadd.f32 %v1304, %v809
      %v1313 = vadd.f32 %v1305, %v810
      %v1314 = vadd.f32 %v1306, %v811
      %v1315 = vsel %vm1122, %v1307, 0.0
      %1316 = vadd.xlane.f32.xlu0 %v1315
      %v1317 = vpop.xlane.xlu0 %1316
      %vm1318 = vcmask 253952
      %v1319 = vsel %vm1318, %v1308, 0.0
      %1320 = vadd.xlane.f32.xlu0 %v1319
      %v1321 = vpop.xlane.xlu0 %1320
      %v1322 = vsel %vm1122, %v1309, 0.0
      %1323 = vadd.xlane.f32.xlu0 %v1322
      %v1324 = vpop.xlane.xlu0 %1323
      %v1325 = vsel %vm1318, %v1310, 0.0
      %1326 = vadd.xlane.f32.xlu0 %v1325
      %v1327 = vpop.xlane.xlu0 %1326
      %v1328 = vsel %vm1122, %v1311, 0.0
      %1329 = vadd.xlane.f32.xlu0 %v1328
      %v1330 = vpop.xlane.xlu0 %1329
      %v1331 = vsel %vm1318, %v1312, 0.0
      %1332 = vadd.xlane.f32.xlu0 %v1331
      %v1333 = vpop.xlane.xlu0 %1332
      %v1334 = vsel %vm1122, %v1313, 0.0
      %1335 = vadd.xlane.f32.xlu0 %v1334
      %v1336 = vpop.xlane.xlu0 %1335
      %v1337 = vsel %vm1318, %v1314, 0.0
      %1338 = vadd.xlane.f32.xlu0 %v1337
      %v1339 = vpop.xlane.xlu0 %1338
      %v1340 = vrcp.pop 32.0
      %v1341 = vmul.f32 %v1317, %v1340
      %v1342 = vmul.f32 %v1321, %v1340
      %v1343 = vmul.f32 %v1324, %v1340
      %v1344 = vmul.f32 %v1327, %v1340
      %v1345 = vmul.f32 %v1330, %v1340
      %v1346 = vmul.f32 %v1333, %v1340
      %v1347 = vmul.f32 %v1336, %v1340
      %v1348 = vmul.f32 %v1339, %v1340
      %v1349 = vsub.f32 %v1307, %v1341
      %v1350 = vsub.f32 %v1308, %v1342
      %v1351 = vsub.f32 %v1309, %v1343
      %v1352 = vsub.f32 %v1310, %v1344
      %v1353 = vsub.f32 %v1311, %v1345
      %v1354 = vsub.f32 %v1312, %v1346
      %v1355 = vsub.f32 %v1313, %v1347
      %v1356 = vsub.f32 %v1314, %v1348
      %v1357 = vmul.f32 %v1349, %v1349
      %v1358 = vmul.f32 %v1350, %v1350
      %v1359 = vmul.f32 %v1351, %v1351
      %v1360 = vmul.f32 %v1352, %v1352
      %v1361 = vmul.f32 %v1353, %v1353
      %v1362 = vmul.f32 %v1354, %v1354
      %v1363 = vmul.f32 %v1355, %v1355
      %v1364 = vmul.f32 %v1356, %v1356
      %v1365 = vsel %vm1122, %v1357, 0.0
      %1366 = vadd.xlane.f32.xlu0 %v1365
      %v1367 = vpop.xlane.xlu0 %1366
      %v1368 = vsel %vm1318, %v1358, 0.0
      %1369 = vadd.xlane.f32.xlu0 %v1368
      %v1370 = vpop.xlane.xlu0 %1369
      %v1371 = vsel %vm1122, %v1359, 0.0
      %1372 = vadd.xlane.f32.xlu0 %v1371
      %v1373 = vpop.xlane.xlu0 %1372
      %v1374 = vsel %vm1318, %v1360, 0.0
      %1375 = vadd.xlane.f32.xlu0 %v1374
      %v1376 = vpop.xlane.xlu0 %1375
      %v1377 = vsel %vm1122, %v1361, 0.0
      %1378 = vadd.xlane.f32.xlu0 %v1377
      %v1379 = vpop.xlane.xlu0 %1378
      %v1380 = vsel %vm1318, %v1362, 0.0
      %1381 = vadd.xlane.f32.xlu0 %v1380
      %v1382 = vpop.xlane.xlu0 %1381
      %v1383 = vsel %vm1122, %v1363, 0.0
      %1384 = vadd.xlane.f32.xlu0 %v1383
      %v1385 = vpop.xlane.xlu0 %1384
      %v1386 = vsel %vm1318, %v1364, 0.0
      %1387 = vadd.xlane.f32.xlu0 %v1386
      %v1388 = vpop.xlane.xlu0 %1387
      %v1389 = vmul.f32 %v1367, %v1340
      %v1390 = vmul.f32 %v1370, %v1340
      %v1391 = vmul.f32 %v1373, %v1340
      %v1392 = vmul.f32 %v1376, %v1340
      %v1393 = vmul.f32 %v1379, %v1340
      %v1394 = vmul.f32 %v1382, %v1340
      %v1395 = vmul.f32 %v1385, %v1340
      %v1396 = vmul.f32 %v1388, %v1340
      %v1397 = vadd.f32 %v1389, 1e-05
      %v1398 = vadd.f32 %v1390, 1e-05
      %v1399 = vadd.f32 %v1391, 1e-05
      %v1400 = vadd.f32 %v1392, 1e-05
      %v1401 = vadd.f32 %v1393, 1e-05
      %v1402 = vadd.f32 %v1394, 1e-05
      %v1403 = vadd.f32 %v1395, 1e-05
      %v1404 = vadd.f32 %v1396, 1e-05
      %v1405 = vrsqrt.pop %v1397
      %v1406 = vrsqrt.pop %v1398
      %v1407 = vrsqrt.pop %v1399
      %v1408 = vrsqrt.pop %v1400
      %v1409 = vrsqrt.pop %v1401
      %v1410 = vrsqrt.pop %v1402
      %v1411 = vrsqrt.pop %v1403
      %v1412 = vrsqrt.pop %v1404
      %v1413 = vmul.f32 %v1349, %v1405
      %v1414 = vmul.f32 %v1350, %v1406
      %v1415 = vmul.f32 %v1351, %v1407
      %v1416 = vmul.f32 %v1352, %v1408
      %v1417 = vmul.f32 %v1353, %v1409
      %v1418 = vmul.f32 %v1354, %v1410
      %v1419 = vmul.f32 %v1355, %v1411
      %v1420 = vmul.f32 %v1356, %v1412
      %v1421 = vpack.c.bf16 %v1414, %v1413
      %v1422 = vpack.c.bf16 %v1416, %v1415
      %v1423 = vpack.c.bf16 %v1418, %v1417
      %v1424 = vpack.c.bf16 %v1420, %v1419
      %v1429 = vunpack.c.l.b16 %v874
      %v1430 = vunpack.c.l.b16 %v875
      %v1431 = vunpack.c.l.b16 %v876
      %v1432 = vunpack.c.l.b16 %v877
      %v1433 = vpack.c.b16 %v1430, %v1429
      %v1434 = vpack.c.b16 %v1432, %v1431
      %v1438 = vsel %vm1122, %v1421, 0
      %1440 = vmatprep.subr.bf16.mxu0 0
      %1441 = vmatpush1.bf16.msra.mxu0 0
      %1442 = vmatprep.subr.bf16.mxu0 0
      %1443 = vmatpush1.bf16.msra.mxu0 0
      %1444 = vmatprep.subr.bf16.mxu0 0
      %1445 = vmatpush1.bf16.msra.mxu0 0
      %1446 = vmatprep.subr.bf16.mxu0 0
      %1447 = vmatpush1.bf16.msra.mxu0 0
      %1448 = vmatprep.subr.bf16.mxu0 0
      %1449 = vmatpush1.bf16.msra.mxu0 0
      %1450 = vmatprep.subr.bf16.mxu0 0
      %1451 = vmatpush1.bf16.msra.mxu0 0
      %1452 = vmatprep.subr.bf16.mxu0 0
      %1453 = vmatpush1.bf16.msra.mxu0 %v1434
      %1454 = vmatprep.subr.bf16.mxu0 0
      %1455 = vmatpush1.bf16.msra.mxu0 %v1433
      %1456 = vmatprep.subr.bf16.mxu0 0
      %1457 = vmatpush2.bf16.msra.mxu0 0
      %1458 = vmatprep.subr.bf16.mxu0 0
      %1459 = vmatpush2.bf16.msra.mxu0 0
      %1460 = vmatprep.subr.bf16.mxu0 0
      %1461 = vmatpush2.bf16.msra.mxu0 0
      %1462 = vmatprep.subr.bf16.mxu0 0
      %1463 = vmatpush2.bf16.msra.mxu0 0
      %1464 = vmatprep.subr.bf16.mxu0 0
      %1465 = vmatpush2.bf16.msra.mxu0 0
      %1466 = vmatprep.subr.bf16.mxu0 0
      %1467 = vmatpush2.bf16.msra.mxu0 0
      %1468 = vmatprep.subr.bf16.mxu0 0
      %1469 = vmatpush2.bf16.msra.mxu0 0
      %1470 = vmatprep.subr.bf16.mxu0 0
      %1471 = vmatpush2.bf16.msra.mxu0 0
      %1472 = vmatprep.mubr.bf16.mxu0 0
      %1473 = vmatmul.mubr.bf16.gmra.mxu0 %v1438
      %v1474 = vpop.f32.mrf.mxu0
      %v1475 = vadd.f32 0.0, %v1474
      %v1476 = vpop.f32.mrf.mxu0
      %v1477 = vpop.f32.mrf.mxu0
      %v1478 = vadd.f32 0.0, %v1477
      %v1479 = vpop.f32.mrf.mxu0
      %1480 = vdwg.mxu0
      %v1482 = vsel %vm1122, %v1422, 0
      %1484 = vmatprep.subr.bf16.mxu0 0
      %1485 = vmatpush1.bf16.msra.mxu0 0
      %1486 = vmatprep.subr.bf16.mxu0 0
      %1487 = vmatpush1.bf16.msra.mxu0 0
      %1488 = vmatprep.subr.bf16.mxu0 0
      %1489 = vmatpush1.bf16.msra.mxu0 0
      %1490 = vmatprep.subr.bf16.mxu0 0
      %1491 = vmatpush1.bf16.msra.mxu0 0
      %1492 = vmatprep.subr.bf16.mxu0 0
      %1493 = vmatpush1.bf16.msra.mxu0 0
      %1494 = vmatprep.subr.bf16.mxu0 0
      %1495 = vmatpush1.bf16.msra.mxu0 0
      %1496 = vmatprep.subr.bf16.mxu0 0
      %1497 = vmatpush1.bf16.msra.mxu0 %v1434
      %1498 = vmatprep.subr.bf16.mxu0 0
      %1499 = vmatpush1.bf16.msra.mxu0 %v1433
      %1500 = vmatprep.subr.bf16.mxu0 0
      %1501 = vmatpush2.bf16.msra.mxu0 0
      %1502 = vmatprep.subr.bf16.mxu0 0
      %1503 = vmatpush2.bf16.msra.mxu0 0
      %1504 = vmatprep.subr.bf16.mxu0 0
      %1505 = vmatpush2.bf16.msra.mxu0 0
      %1506 = vmatprep.subr.bf16.mxu0 0
      %1507 = vmatpush2.bf16.msra.mxu0 0
      %1508 = vmatprep.subr.bf16.mxu0 0
      %1509 = vmatpush2.bf16.msra.mxu0 0
      %1510 = vmatprep.subr.bf16.mxu0 0
      %1511 = vmatpush2.bf16.msra.mxu0 0
      %1512 = vmatprep.subr.bf16.mxu0 0
      %1513 = vmatpush2.bf16.msra.mxu0 0
      %1514 = vmatprep.subr.bf16.mxu0 0
      %1515 = vmatpush2.bf16.msra.mxu0 0
      %1516 = vmatprep.mubr.bf16.mxu0 0
      %1517 = vmatmul.mubr.bf16.gmra.mxu0 %v1482
      %v1518 = vpop.f32.mrf.mxu0
      %v1519 = vadd.f32 0.0, %v1518
      %v1520 = vpop.f32.mrf.mxu0
      %v1521 = vpop.f32.mrf.mxu0
      %v1522 = vadd.f32 0.0, %v1521
      %v1523 = vpop.f32.mrf.mxu0
      %1524 = vdwg.mxu0
      %v1526 = vsel %vm1122, %v1423, 0
      %1528 = vmatprep.subr.bf16.mxu0 0
      %1529 = vmatpush1.bf16.msra.mxu0 0
      %1530 = vmatprep.subr.bf16.mxu0 0
      %1531 = vmatpush1.bf16.msra.mxu0 0
      %1532 = vmatprep.subr.bf16.mxu0 0
      %1533 = vmatpush1.bf16.msra.mxu0 0
      %1534 = vmatprep.subr.bf16.mxu0 0
      %1535 = vmatpush1.bf16.msra.mxu0 0
      %1536 = vmatprep.subr.bf16.mxu0 0
      %1537 = vmatpush1.bf16.msra.mxu0 0
      %1538 = vmatprep.subr.bf16.mxu0 0
      %1539 = vmatpush1.bf16.msra.mxu0 0
      %1540 = vmatprep.subr.bf16.mxu0 0
      %1541 = vmatpush1.bf16.msra.mxu0 %v1434
      %1542 = vmatprep.subr.bf16.mxu0 0
      %1543 = vmatpush1.bf16.msra.mxu0 %v1433
      %1544 = vmatprep.subr.bf16.mxu0 0
      %1545 = vmatpush2.bf16.msra.mxu0 0
      %1546 = vmatprep.subr.bf16.mxu0 0
      %1547 = vmatpush2.bf16.msra.mxu0 0
      %1548 = vmatprep.subr.bf16.mxu0 0
      %1549 = vmatpush2.bf16.msra.mxu0 0
      %1550 = vmatprep.subr.bf16.mxu0 0
      %1551 = vmatpush2.bf16.msra.mxu0 0
      %1552 = vmatprep.subr.bf16.mxu0 0
      %1553 = vmatpush2.bf16.msra.mxu0 0
      %1554 = vmatprep.subr.bf16.mxu0 0
      %1555 = vmatpush2.bf16.msra.mxu0 0
      %1556 = vmatprep.subr.bf16.mxu0 0
      %1557 = vmatpush2.bf16.msra.mxu0 0
      %1558 = vmatprep.subr.bf16.mxu0 0
      %1559 = vmatpush2.bf16.msra.mxu0 0
      %1560 = vmatprep.mubr.bf16.mxu0 0
      %1561 = vmatmul.mubr.bf16.gmra.mxu0 %v1526
      %v1562 = vpop.f32.mrf.mxu0
      %v1563 = vadd.f32 0.0, %v1562
      %v1564 = vpop.f32.mrf.mxu0
      %v1565 = vpop.f32.mrf.mxu0
      %v1566 = vadd.f32 0.0, %v1565
      %v1567 = vpop.f32.mrf.mxu0
      %1568 = vdwg.mxu0
      %v1570 = vsel %vm1122, %v1424, 0
      %1572 = vmatprep.subr.bf16.mxu0 0
      %1573 = vmatpush1.bf16.msra.mxu0 0
      %1574 = vmatprep.subr.bf16.mxu0 0
      %1575 = vmatpush1.bf16.msra.mxu0 0
      %1576 = vmatprep.subr.bf16.mxu0 0
      %1577 = vmatpush1.bf16.msra.mxu0 0
      %1578 = vmatprep.subr.bf16.mxu0 0
      %1579 = vmatpush1.bf16.msra.mxu0 0
      %1580 = vmatprep.subr.bf16.mxu0 0
      %1581 = vmatpush1.bf16.msra.mxu0 0
      %1582 = vmatprep.subr.bf16.mxu0 0
      %1583 = vmatpush1.bf16.msra.mxu0 0
      %1584 = vmatprep.subr.bf16.mxu0 0
      %1585 = vmatpush1.bf16.msra.mxu0 %v1434
      %1586 = vmatprep.subr.bf16.mxu0 0
      %1587 = vmatpush1.bf16.msra.mxu0 %v1433
      %1588 = vmatprep.subr.bf16.mxu0 0
      %1589 = vmatpush2.bf16.msra.mxu0 0
      %1590 = vmatprep.subr.bf16.mxu0 0
      %1591 = vmatpush2.bf16.msra.mxu0 0
      %1592 = vmatprep.subr.bf16.mxu0 0
      %1593 = vmatpush2.bf16.msra.mxu0 0
      %1594 = vmatprep.subr.bf16.mxu0 0
      %1595 = vmatpush2.bf16.msra.mxu0 0
      %1596 = vmatprep.subr.bf16.mxu0 0
      %1597 = vmatpush2.bf16.msra.mxu0 0
      %1598 = vmatprep.subr.bf16.mxu0 0
      %1599 = vmatpush2.bf16.msra.mxu0 0
      %1600 = vmatprep.subr.bf16.mxu0 0
      %1601 = vmatpush2.bf16.msra.mxu0 0
      %1602 = vmatprep.subr.bf16.mxu0 0
      %1603 = vmatpush2.bf16.msra.mxu0 0
      %1604 = vmatprep.mubr.bf16.mxu0 0
      %1605 = vmatmul.mubr.bf16.gmra.mxu0 %v1570
      %v1606 = vpop.f32.mrf.mxu0
      %v1607 = vadd.f32 0.0, %v1606
      %v1608 = vpop.f32.mrf.mxu0
      %v1609 = vpop.f32.mrf.mxu0
      %v1610 = vadd.f32 0.0, %v1609
      %v1611 = vpop.f32.mrf.mxu0
      %1612 = vdwg.mxu0
      %v1613 = vmax.f32 %v1475, 0.0
      %v1614 = vmax.f32 %v1478, 0.0
      %v1615 = vmax.f32 %v1519, 0.0
      %v1616 = vmax.f32 %v1522, 0.0
      %v1617 = vmax.f32 %v1563, 0.0
      %v1618 = vmax.f32 %v1566, 0.0
      %v1619 = vmax.f32 %v1607, 0.0
      %v1620 = vmax.f32 %v1610, 0.0
      %v1621 = vpack.c.bf16 %v1614, %v1613
      %v1622 = vpack.c.bf16 %v1616, %v1615
      %v1623 = vpack.c.bf16 %v1618, %v1617
      %v1624 = vpack.c.bf16 %v1620, %v1619
      %v1629 = vunpack.c.l.b16 %v878
      %v1630 = vunpack.c.l.b16 %v879
      %v1631 = vunpack.c.l.b16 %v880
      %v1632 = vunpack.c.l.b16 %v881
      %v1633 = vpack.c.b16 %v1630, %v1629
      %v1634 = vpack.c.b16 %v1632, %v1631
      %v1638 = vsel %vm1122, %v1621, 0
      %1640 = vmatprep.subr.bf16.mxu0 0
      %1641 = vmatpush1.bf16.msra.mxu0 0
      %1642 = vmatprep.subr.bf16.mxu0 0
      %1643 = vmatpush1.bf16.msra.mxu0 0
      %1644 = vmatprep.subr.bf16.mxu0 0
      %1645 = vmatpush1.bf16.msra.mxu0 0
      %1646 = vmatprep.subr.bf16.mxu0 0
      %1647 = vmatpush1.bf16.msra.mxu0 0
      %1648 = vmatprep.subr.bf16.mxu0 0
      %1649 = vmatpush1.bf16.msra.mxu0 0
      %1650 = vmatprep.subr.bf16.mxu0 0
      %1651 = vmatpush1.bf16.msra.mxu0 0
      %1652 = vmatprep.subr.bf16.mxu0 0
      %1653 = vmatpush1.bf16.msra.mxu0 %v1634
      %1654 = vmatprep.subr.bf16.mxu0 0
      %1655 = vmatpush1.bf16.msra.mxu0 %v1633
      %1656 = vmatprep.subr.bf16.mxu0 0
      %1657 = vmatpush2.bf16.msra.mxu0 0
      %1658 = vmatprep.subr.bf16.mxu0 0
      %1659 = vmatpush2.bf16.msra.mxu0 0
      %1660 = vmatprep.subr.bf16.mxu0 0
      %1661 = vmatpush2.bf16.msra.mxu0 0
      %1662 = vmatprep.subr.bf16.mxu0 0
      %1663 = vmatpush2.bf16.msra.mxu0 0
      %1664 = vmatprep.subr.bf16.mxu0 0
      %1665 = vmatpush2.bf16.msra.mxu0 0
      %1666 = vmatprep.subr.bf16.mxu0 0
      %1667 = vmatpush2.bf16.msra.mxu0 0
      %1668 = vmatprep.subr.bf16.mxu0 0
      %1669 = vmatpush2.bf16.msra.mxu0 0
      %1670 = vmatprep.subr.bf16.mxu0 0
      %1671 = vmatpush2.bf16.msra.mxu0 0
      %1672 = vmatprep.mubr.bf16.mxu0 0
      %1673 = vmatmul.mubr.bf16.gmra.mxu0 %v1638
      %v1674 = vpop.f32.mrf.mxu0
      %v1675 = vadd.f32 0.0, %v1674
      %v1676 = vpop.f32.mrf.mxu0
      %v1677 = vpop.f32.mrf.mxu0
      %v1678 = vadd.f32 0.0, %v1677
      %v1679 = vpop.f32.mrf.mxu0
      %1680 = vdwg.mxu0
      %v1682 = vsel %vm1122, %v1622, 0
      %1684 = vmatprep.subr.bf16.mxu0 0
      %1685 = vmatpush1.bf16.msra.mxu0 0
      %1686 = vmatprep.subr.bf16.mxu0 0
      %1687 = vmatpush1.bf16.msra.mxu0 0
      %1688 = vmatprep.subr.bf16.mxu0 0
      %1689 = vmatpush1.bf16.msra.mxu0 0
      %1690 = vmatprep.subr.bf16.mxu0 0
      %1691 = vmatpush1.bf16.msra.mxu0 0
      %1692 = vmatprep.subr.bf16.mxu0 0
      %1693 = vmatpush1.bf16.msra.mxu0 0
      %1694 = vmatprep.subr.bf16.mxu0 0
      %1695 = vmatpush1.bf16.msra.mxu0 0
      %1696 = vmatprep.subr.bf16.mxu0 0
      %1697 = vmatpush1.bf16.msra.mxu0 %v1634
      %1698 = vmatprep.subr.bf16.mxu0 0
      %1699 = vmatpush1.bf16.msra.mxu0 %v1633
      %1700 = vmatprep.subr.bf16.mxu0 0
      %1701 = vmatpush2.bf16.msra.mxu0 0
      %1702 = vmatprep.subr.bf16.mxu0 0
      %1703 = vmatpush2.bf16.msra.mxu0 0
      %1704 = vmatprep.subr.bf16.mxu0 0
      %1705 = vmatpush2.bf16.msra.mxu0 0
      %1706 = vmatprep.subr.bf16.mxu0 0
      %1707 = vmatpush2.bf16.msra.mxu0 0
      %1708 = vmatprep.subr.bf16.mxu0 0
      %1709 = vmatpush2.bf16.msra.mxu0 0
      %1710 = vmatprep.subr.bf16.mxu0 0
      %1711 = vmatpush2.bf16.msra.mxu0 0
      %1712 = vmatprep.subr.bf16.mxu0 0
      %1713 = vmatpush2.bf16.msra.mxu0 0
      %1714 = vmatprep.subr.bf16.mxu0 0
      %1715 = vmatpush2.bf16.msra.mxu0 0
      %1716 = vmatprep.mubr.bf16.mxu0 0
      %1717 = vmatmul.mubr.bf16.gmra.mxu0 %v1682
      %v1718 = vpop.f32.mrf.mxu0
      %v1719 = vadd.f32 0.0, %v1718
      %v1720 = vpop.f32.mrf.mxu0
      %v1721 = vpop.f32.mrf.mxu0
      %v1722 = vadd.f32 0.0, %v1721
      %v1723 = vpop.f32.mrf.mxu0
      %1724 = vdwg.mxu0
      %v1726 = vsel %vm1122, %v1623, 0
      %1728 = vmatprep.subr.bf16.mxu0 0
      %1729 = vmatpush1.bf16.msra.mxu0 0
      %1730 = vmatprep.subr.bf16.mxu0 0
      %1731 = vmatpush1.bf16.msra.mxu0 0
      %1732 = vmatprep.subr.bf16.mxu0 0
      %1733 = vmatpush1.bf16.msra.mxu0 0
      %1734 = vmatprep.subr.bf16.mxu0 0
      %1735 = vmatpush1.bf16.msra.mxu0 0
      %1736 = vmatprep.subr.bf16.mxu0 0
      %1737 = vmatpush1.bf16.msra.mxu0 0
      %1738 = vmatprep.subr.bf16.mxu0 0
      %1739 = vmatpush1.bf16.msra.mxu0 0
      %1740 = vmatprep.subr.bf16.mxu0 0
      %1741 = vmatpush1.bf16.msra.mxu0 %v1634
      %1742 = vmatprep.subr.bf16.mxu0 0
      %1743 = vmatpush1.bf16.msra.mxu0 %v1633
      %1744 = vmatprep.subr.bf16.mxu0 0
      %1745 = vmatpush2.bf16.msra.mxu0 0
      %1746 = vmatprep.subr.bf16.mxu0 0
      %1747 = vmatpush2.bf16.msra.mxu0 0
      %1748 = vmatprep.subr.bf16.mxu0 0
      %1749 = vmatpush2.bf16.msra.mxu0 0
      %1750 = vmatprep.subr.bf16.mxu0 0
      %1751 = vmatpush2.bf16.msra.mxu0 0
      %1752 = vmatprep.subr.bf16.mxu0 0
      %1753 = vmatpush2.bf16.msra.mxu0 0
      %1754 = vmatprep.subr.bf16.mxu0 0
      %1755 = vmatpush2.bf16.msra.mxu0 0
      %1756 = vmatprep.subr.bf16.mxu0 0
      %1757 = vmatpush2.bf16.msra.mxu0 0
      %1758 = vmatprep.subr.bf16.mxu0 0
      %1759 = vmatpush2.bf16.msra.mxu0 0
      %1760 = vmatprep.mubr.bf16.mxu0 0
      %1761 = vmatmul.mubr.bf16.gmra.mxu0 %v1726
      %v1762 = vpop.f32.mrf.mxu0
      %v1763 = vadd.f32 0.0, %v1762
      %v1764 = vpop.f32.mrf.mxu0
      %v1765 = vpop.f32.mrf.mxu0
      %v1766 = vadd.f32 0.0, %v1765
      %v1767 = vpop.f32.mrf.mxu0
      %1768 = vdwg.mxu0
      %v1770 = vsel %vm1122, %v1624, 0
      %1772 = vmatprep.subr.bf16.mxu0 0
      %1773 = vmatpush1.bf16.msra.mxu0 0
      %1774 = vmatprep.subr.bf16.mxu0 0
      %1775 = vmatpush1.bf16.msra.mxu0 0
      %1776 = vmatprep.subr.bf16.mxu0 0
      %1777 = vmatpush1.bf16.msra.mxu0 0
      %1778 = vmatprep.subr.bf16.mxu0 0
      %1779 = vmatpush1.bf16.msra.mxu0 0
      %1780 = vmatprep.subr.bf16.mxu0 0
      %1781 = vmatpush1.bf16.msra.mxu0 0
      %1782 = vmatprep.subr.bf16.mxu0 0
      %1783 = vmatpush1.bf16.msra.mxu0 0
      %1784 = vmatprep.subr.bf16.mxu0 0
      %1785 = vmatpush1.bf16.msra.mxu0 %v1634
      %1786 = vmatprep.subr.bf16.mxu0 0
      %1787 = vmatpush1.bf16.msra.mxu0 %v1633
      %1788 = vmatprep.subr.bf16.mxu0 0
      %1789 = vmatpush2.bf16.msra.mxu0 0
      %1790 = vmatprep.subr.bf16.mxu0 0
      %1791 = vmatpush2.bf16.msra.mxu0 0
      %1792 = vmatprep.subr.bf16.mxu0 0
      %1793 = vmatpush2.bf16.msra.mxu0 0
      %1794 = vmatprep.subr.bf16.mxu0 0
      %1795 = vmatpush2.bf16.msra.mxu0 0
      %1796 = vmatprep.subr.bf16.mxu0 0
      %1797 = vmatpush2.bf16.msra.mxu0 0
      %1798 = vmatprep.subr.bf16.mxu0 0
      %1799 = vmatpush2.bf16.msra.mxu0 0
      %1800 = vmatprep.subr.bf16.mxu0 0
      %1801 = vmatpush2.bf16.msra.mxu0 0
      %1802 = vmatprep.subr.bf16.mxu0 0
      %1803 = vmatpush2.bf16.msra.mxu0 0
      %1804 = vmatprep.mubr.bf16.mxu0 0
      %1805 = vmatmul.mubr.bf16.gmra.mxu0 %v1770
      %v1806 = vpop.f32.mrf.mxu0
      %v1807 = vadd.f32 0.0, %v1806
      %v1808 = vpop.f32.mrf.mxu0
      %v1809 = vpop.f32.mrf.mxu0
      %v1810 = vadd.f32 0.0, %v1809
      %v1811 = vpop.f32.mrf.mxu0
      %1812 = vdwg.mxu0
      %v1813 = vadd.f32 %v1413, %v1675
      %v1814 = vadd.f32 %v1414, %v1678
      %v1815 = vadd.f32 %v1415, %v1719
      %v1816 = vadd.f32 %v1416, %v1722
      %v1817 = vadd.f32 %v1417, %v1763
      %v1818 = vadd.f32 %v1418, %v1766
      %v1819 = vadd.f32 %v1419, %v1807
      %v1820 = vadd.f32 %v1420, %v1810
      %s1821 = scalar_lea.vmem %s4, 16
      %v1822 = vld [vmem:[%s1821] sm:$0xf]
      %v1823 = vld [vmem:[%s1821 + $0x4] sm:$0xf]
      %v1824 = vld [vmem:[%s1821 + $0x8] sm:$0xf]
      %v1825 = vld [vmem:[%s1821 + $0xc] sm:$0xf]
      %s1826 = scalar_lea.vmem %s5, 16
      %v1827 = vld [vmem:[%s1826] sm:$0xf]
      %v1828 = vld [vmem:[%s1826 + $0x4] sm:$0xf]
      %v1829 = vld [vmem:[%s1826 + $0x8] sm:$0xf]
      %v1830 = vld [vmem:[%s1826 + $0xc] sm:$0xf]
      %s1831 = scalar_lea.vmem %s6, 16
      %v1832 = vld [vmem:[%s1831] sm:$0xf]
      %v1833 = vld [vmem:[%s1831 + $0x4] sm:$0xf]
      %v1834 = vld [vmem:[%s1831 + $0x8] sm:$0xf]
      %v1835 = vld [vmem:[%s1831 + $0xc] sm:$0xf]
      %v1836 = vpack.c.bf16 %v1814, %v1813
      %v1837 = vpack.c.bf16 %v1816, %v1815
      %v1838 = vpack.c.bf16 %v1818, %v1817
      %v1839 = vpack.c.bf16 %v1820, %v1819
      %v1841 = vand.u32 %v1836, %v897
      %1843 = vmatprep.subr.bf16.mxu0 0
      %1844 = vmatpush1.bf16.msra.mxu0 0
      %1845 = vmatprep.subr.bf16.mxu0 0
      %1846 = vmatpush1.bf16.msra.mxu0 0
      %1847 = vmatprep.subr.bf16.mxu0 0
      %1848 = vmatpush1.bf16.msra.mxu0 0
      %1849 = vmatprep.subr.bf16.mxu0 0
      %1850 = vmatpush1.bf16.msra.mxu0 0
      %1851 = vmatprep.subr.bf16.mxu0 0
      %1852 = vmatpush1.bf16.msra.mxu0 0
      %1853 = vmatprep.subr.bf16.mxu0 0
      %1854 = vmatpush1.bf16.msra.mxu0 0
      %1855 = vmatprep.subr.bf16.mxu0 0
      %1856 = vmatpush1.bf16.msra.mxu0 0
      %1857 = vmatprep.subr.bf16.mxu0 0
      %1858 = vmatpush1.bf16.msra.mxu0 %v1841
      %1859 = vmatprep.subr.bf16.mxu0 0
      %1860 = vmatpush2.bf16.msra.mxu0 0
      %1861 = vmatprep.subr.bf16.mxu0 0
      %1862 = vmatpush2.bf16.msra.mxu0 0
      %1863 = vmatprep.subr.bf16.mxu0 0
      %1864 = vmatpush2.bf16.msra.mxu0 0
      %1865 = vmatprep.subr.bf16.mxu0 0
      %1866 = vmatpush2.bf16.msra.mxu0 0
      %1867 = vmatprep.subr.bf16.mxu0 0
      %1868 = vmatpush2.bf16.msra.mxu0 0
      %1869 = vmatprep.subr.bf16.mxu0 0
      %1870 = vmatpush2.bf16.msra.mxu0 0
      %1871 = vmatprep.subr.bf16.mxu0 0
      %1872 = vmatpush2.bf16.msra.mxu0 0
      %1873 = vmatprep.subr.bf16.mxu0 0
      %1874 = vmatpush2.bf16.msra.mxu0 0
      %1875 = vmatprep.mubr.bf16.mxu0 0
      %1876 = vmatmul.mubr.bf16.gmra.mxu0 %v892
      %v1877 = vpop.f32.mrf.mxu0
      %v1878 = vadd.f32 0.0, %v1877
      %v1879 = vpop.f32.mrf.mxu0
      %v1880 = vpop.f32.mrf.mxu0
      %v1881 = vadd.f32 0.0, %v1880
      %v1882 = vpop.f32.mrf.mxu0
      %1883 = vdwg.mxu0
      %v1885 = vand.u32 %v1837, %v897
      %1887 = vmatprep.subr.bf16.mxu0 0
      %1888 = vmatpush1.bf16.msra.mxu0 0
      %1889 = vmatprep.subr.bf16.mxu0 0
      %1890 = vmatpush1.bf16.msra.mxu0 0
      %1891 = vmatprep.subr.bf16.mxu0 0
      %1892 = vmatpush1.bf16.msra.mxu0 0
      %1893 = vmatprep.subr.bf16.mxu0 0
      %1894 = vmatpush1.bf16.msra.mxu0 0
      %1895 = vmatprep.subr.bf16.mxu0 0
      %1896 = vmatpush1.bf16.msra.mxu0 0
      %1897 = vmatprep.subr.bf16.mxu0 0
      %1898 = vmatpush1.bf16.msra.mxu0 0
      %1899 = vmatprep.subr.bf16.mxu0 0
      %1900 = vmatpush1.bf16.msra.mxu0 0
      %1901 = vmatprep.subr.bf16.mxu0 0
      %1902 = vmatpush1.bf16.msra.mxu0 %v1885
      %1903 = vmatprep.subr.bf16.mxu0 0
      %1904 = vmatpush2.bf16.msra.mxu0 0
      %1905 = vmatprep.subr.bf16.mxu0 0
      %1906 = vmatpush2.bf16.msra.mxu0 0
      %1907 = vmatprep.subr.bf16.mxu0 0
      %1908 = vmatpush2.bf16.msra.mxu0 0
      %1909 = vmatprep.subr.bf16.mxu0 0
      %1910 = vmatpush2.bf16.msra.mxu0 0
      %1911 = vmatprep.subr.bf16.mxu0 0
      %1912 = vmatpush2.bf16.msra.mxu0 0
      %1913 = vmatprep.subr.bf16.mxu0 0
      %1914 = vmatpush2.bf16.msra.mxu0 0
      %1915 = vmatprep.subr.bf16.mxu0 0
      %1916 = vmatpush2.bf16.msra.mxu0 0
      %1917 = vmatprep.subr.bf16.mxu0 0
      %1918 = vmatpush2.bf16.msra.mxu0 0
      %1919 = vmatprep.mubr.bf16.mxu0 0
      %1920 = vmatmul.mubr.bf16.gmra.mxu0 %v948
      %v1921 = vpop.f32.mrf.mxu0
      %v1922 = vadd.f32 0.0, %v1921
      %v1923 = vpop.f32.mrf.mxu0
      %v1924 = vpop.f32.mrf.mxu0
      %v1925 = vadd.f32 0.0, %v1924
      %v1926 = vpop.f32.mrf.mxu0
      %1927 = vdwg.mxu0
      %v1929 = vand.u32 %v1838, %v897
      %1931 = vmatprep.subr.bf16.mxu0 0
      %1932 = vmatpush1.bf16.msra.mxu0 0
      %1933 = vmatprep.subr.bf16.mxu0 0
      %1934 = vmatpush1.bf16.msra.mxu0 0
      %1935 = vmatprep.subr.bf16.mxu0 0
      %1936 = vmatpush1.bf16.msra.mxu0 0
      %1937 = vmatprep.subr.bf16.mxu0 0
      %1938 = vmatpush1.bf16.msra.mxu0 0
      %1939 = vmatprep.subr.bf16.mxu0 0
      %1940 = vmatpush1.bf16.msra.mxu0 0
      %1941 = vmatprep.subr.bf16.mxu0 0
      %1942 = vmatpush1.bf16.msra.mxu0 0
      %1943 = vmatprep.subr.bf16.mxu0 0
      %1944 = vmatpush1.bf16.msra.mxu0 0
      %1945 = vmatprep.subr.bf16.mxu0 0
      %1946 = vmatpush1.bf16.msra.mxu0 %v1929
      %1947 = vmatprep.subr.bf16.mxu0 0
      %1948 = vmatpush2.bf16.msra.mxu0 0
      %1949 = vmatprep.subr.bf16.mxu0 0
      %1950 = vmatpush2.bf16.msra.mxu0 0
      %1951 = vmatprep.subr.bf16.mxu0 0
      %1952 = vmatpush2.bf16.msra.mxu0 0
      %1953 = vmatprep.subr.bf16.mxu0 0
      %1954 = vmatpush2.bf16.msra.mxu0 0
      %1955 = vmatprep.subr.bf16.mxu0 0
      %1956 = vmatpush2.bf16.msra.mxu0 0
      %1957 = vmatprep.subr.bf16.mxu0 0
      %1958 = vmatpush2.bf16.msra.mxu0 0
      %1959 = vmatprep.subr.bf16.mxu0 0
      %1960 = vmatpush2.bf16.msra.mxu0 0
      %1961 = vmatprep.subr.bf16.mxu0 0
      %1962 = vmatpush2.bf16.msra.mxu0 0
      %1963 = vmatprep.mubr.bf16.mxu0 0
      %1964 = vmatmul.mubr.bf16.gmra.mxu0 %v1000
      %v1965 = vpop.f32.mrf.mxu0
      %v1966 = vadd.f32 0.0, %v1965
      %v1967 = vpop.f32.mrf.mxu0
      %v1968 = vpop.f32.mrf.mxu0
      %v1969 = vadd.f32 0.0, %v1968
      %v1970 = vpop.f32.mrf.mxu0
      %1971 = vdwg.mxu0
      %v1973 = vand.u32 %v1839, %v897
      %1975 = vmatprep.subr.bf16.mxu0 0
      %1976 = vmatpush1.bf16.msra.mxu0 0
      %1977 = vmatprep.subr.bf16.mxu0 0
      %1978 = vmatpush1.bf16.msra.mxu0 0
      %1979 = vmatprep.subr.bf16.mxu0 0
      %1980 = vmatpush1.bf16.msra.mxu0 0
      %1981 = vmatprep.subr.bf16.mxu0 0
      %1982 = vmatpush1.bf16.msra.mxu0 0
      %1983 = vmatprep.subr.bf16.mxu0 0
      %1984 = vmatpush1.bf16.msra.mxu0 0
      %1985 = vmatprep.subr.bf16.mxu0 0
      %1986 = vmatpush1.bf16.msra.mxu0 0
      %1987 = vmatprep.subr.bf16.mxu0 0
      %1988 = vmatpush1.bf16.msra.mxu0 0
      %1989 = vmatprep.subr.bf16.mxu0 0
      %1990 = vmatpush1.bf16.msra.mxu0 %v1973
      %1991 = vmatprep.subr.bf16.mxu0 0
      %1992 = vmatpush2.bf16.msra.mxu0 0
      %1993 = vmatprep.subr.bf16.mxu0 0
      %1994 = vmatpush2.bf16.msra.mxu0 0
      %1995 = vmatprep.subr.bf16.mxu0 0
      %1996 = vmatpush2.bf16.msra.mxu0 0
      %1997 = vmatprep.subr.bf16.mxu0 0
      %1998 = vmatpush2.bf16.msra.mxu0 0
      %1999 = vmatprep.subr.bf16.mxu0 0
      %2000 = vmatpush2.bf16.msra.mxu0 0
      %2001 = vmatprep.subr.bf16.mxu0 0
      %2002 = vmatpush2.bf16.msra.mxu0 0
      %2003 = vmatprep.subr.bf16.mxu0 0
      %2004 = vmatpush2.bf16.msra.mxu0 0
      %2005 = vmatprep.subr.bf16.mxu0 0
      %2006 = vmatpush2.bf16.msra.mxu0 0
      %2007 = vmatprep.mubr.bf16.mxu0 0
      %2008 = vmatmul.mubr.bf16.gmra.mxu0 %v1052
      %v2009 = vpop.f32.mrf.mxu0
      %v2010 = vadd.f32 0.0, %v2009
      %v2011 = vpop.f32.mrf.mxu0
      %v2012 = vpop.f32.mrf.mxu0
      %v2013 = vadd.f32 0.0, %v2012
      %v2014 = vpop.f32.mrf.mxu0
      %2015 = vdwg.mxu0
      %v2016 = vmul.f32 %v1878, %v862
      %v2017 = vmul.f32 %v1881, %v863
      %v2018 = vmul.f32 %v1922, %v864
      %v2019 = vmul.f32 %v1925, %v865
      %v2020 = vmul.f32 %v1966, %v866
      %v2021 = vmul.f32 %v1969, %v867
      %v2022 = vmul.f32 %v2010, %v868
      %v2023 = vmul.f32 %v2013, %v869
      %v2024 = vpack.c.bf16 %v2017, %v2016
      %v2025 = vpack.c.bf16 %v2019, %v2018
      %v2026 = vpack.c.bf16 %v2021, %v2020
      %v2027 = vpack.c.bf16 %v2023, %v2022
      %v2032 = vunpack.c.l.b16 %v1822
      %v2033 = vunpack.c.l.b16 %v1823
      %v2034 = vunpack.c.l.b16 %v1824
      %v2035 = vunpack.c.l.b16 %v1825
      %v2036 = vpack.c.b16 %v2033, %v2032
      %v2037 = vpack.c.b16 %v2035, %v2034
      %v2041 = vsel %vm1122, %v2024, 0
      %2043 = vmatprep.subr.bf16.mxu0 0
      %2044 = vmatpush1.bf16.msra.mxu0 0
      %2045 = vmatprep.subr.bf16.mxu0 0
      %2046 = vmatpush1.bf16.msra.mxu0 0
      %2047 = vmatprep.subr.bf16.mxu0 0
      %2048 = vmatpush1.bf16.msra.mxu0 0
      %2049 = vmatprep.subr.bf16.mxu0 0
      %2050 = vmatpush1.bf16.msra.mxu0 0
      %2051 = vmatprep.subr.bf16.mxu0 0
      %2052 = vmatpush1.bf16.msra.mxu0 0
      %2053 = vmatprep.subr.bf16.mxu0 0
      %2054 = vmatpush1.bf16.msra.mxu0 0
      %2055 = vmatprep.subr.bf16.mxu0 0
      %2056 = vmatpush1.bf16.msra.mxu0 %v2037
      %2057 = vmatprep.subr.bf16.mxu0 0
      %2058 = vmatpush1.bf16.msra.mxu0 %v2036
      %2059 = vmatprep.subr.bf16.mxu0 0
      %2060 = vmatpush2.bf16.msra.mxu0 0
      %2061 = vmatprep.subr.bf16.mxu0 0
      %2062 = vmatpush2.bf16.msra.mxu0 0
      %2063 = vmatprep.subr.bf16.mxu0 0
      %2064 = vmatpush2.bf16.msra.mxu0 0
      %2065 = vmatprep.subr.bf16.mxu0 0
      %2066 = vmatpush2.bf16.msra.mxu0 0
      %2067 = vmatprep.subr.bf16.mxu0 0
      %2068 = vmatpush2.bf16.msra.mxu0 0
      %2069 = vmatprep.subr.bf16.mxu0 0
      %2070 = vmatpush2.bf16.msra.mxu0 0
      %2071 = vmatprep.subr.bf16.mxu0 0
      %2072 = vmatpush2.bf16.msra.mxu0 0
      %2073 = vmatprep.subr.bf16.mxu0 0
      %2074 = vmatpush2.bf16.msra.mxu0 0
      %2075 = vmatprep.mubr.bf16.mxu0 0
      %2076 = vmatmul.mubr.bf16.gmra.mxu0 %v2041
      %v2077 = vpop.f32.mrf.mxu0
      %v2078 = vadd.f32 0.0, %v2077
      %v2079 = vpop.f32.mrf.mxu0
      %v2080 = vpop.f32.mrf.mxu0
      %v2081 = vadd.f32 0.0, %v2080
      %v2082 = vpop.f32.mrf.mxu0
      %2083 = vdwg.mxu0
      %v2085 = vsel %vm1122, %v2025, 0
      %2087 = vmatprep.subr.bf16.mxu0 0
      %2088 = vmatpush1.bf16.msra.mxu0 0
      %2089 = vmatprep.subr.bf16.mxu0 0
      %2090 = vmatpush1.bf16.msra.mxu0 0
      %2091 = vmatprep.subr.bf16.mxu0 0
      %2092 = vmatpush1.bf16.msra.mxu0 0
      %2093 = vmatprep.subr.bf16.mxu0 0
      %2094 = vmatpush1.bf16.msra.mxu0 0
      %2095 = vmatprep.subr.bf16.mxu0 0
      %2096 = vmatpush1.bf16.msra.mxu0 0
      %2097 = vmatprep.subr.bf16.mxu0 0
      %2098 = vmatpush1.bf16.msra.mxu0 0
      %2099 = vmatprep.subr.bf16.mxu0 0
      %2100 = vmatpush1.bf16.msra.mxu0 %v2037
      %2101 = vmatprep.subr.bf16.mxu0 0
      %2102 = vmatpush1.bf16.msra.mxu0 %v2036
      %2103 = vmatprep.subr.bf16.mxu0 0
      %2104 = vmatpush2.bf16.msra.mxu0 0
      %2105 = vmatprep.subr.bf16.mxu0 0
      %2106 = vmatpush2.bf16.msra.mxu0 0
      %2107 = vmatprep.subr.bf16.mxu0 0
      %2108 = vmatpush2.bf16.msra.mxu0 0
      %2109 = vmatprep.subr.bf16.mxu0 0
      %2110 = vmatpush2.bf16.msra.mxu0 0
      %2111 = vmatprep.subr.bf16.mxu0 0
      %2112 = vmatpush2.bf16.msra.mxu0 0
      %2113 = vmatprep.subr.bf16.mxu0 0
      %2114 = vmatpush2.bf16.msra.mxu0 0
      %2115 = vmatprep.subr.bf16.mxu0 0
      %2116 = vmatpush2.bf16.msra.mxu0 0
      %2117 = vmatprep.subr.bf16.mxu0 0
      %2118 = vmatpush2.bf16.msra.mxu0 0
      %2119 = vmatprep.mubr.bf16.mxu0 0
      %2120 = vmatmul.mubr.bf16.gmra.mxu0 %v2085
      %v2121 = vpop.f32.mrf.mxu0
      %v2122 = vadd.f32 0.0, %v2121
      %v2123 = vpop.f32.mrf.mxu0
      %v2124 = vpop.f32.mrf.mxu0
      %v2125 = vadd.f32 0.0, %v2124
      %v2126 = vpop.f32.mrf.mxu0
      %2127 = vdwg.mxu0
      %v2129 = vsel %vm1122, %v2026, 0
      %2131 = vmatprep.subr.bf16.mxu0 0
      %2132 = vmatpush1.bf16.msra.mxu0 0
      %2133 = vmatprep.subr.bf16.mxu0 0
      %2134 = vmatpush1.bf16.msra.mxu0 0
      %2135 = vmatprep.subr.bf16.mxu0 0
      %2136 = vmatpush1.bf16.msra.mxu0 0
      %2137 = vmatprep.subr.bf16.mxu0 0
      %2138 = vmatpush1.bf16.msra.mxu0 0
      %2139 = vmatprep.subr.bf16.mxu0 0
      %2140 = vmatpush1.bf16.msra.mxu0 0
      %2141 = vmatprep.subr.bf16.mxu0 0
      %2142 = vmatpush1.bf16.msra.mxu0 0
      %2143 = vmatprep.subr.bf16.mxu0 0
      %2144 = vmatpush1.bf16.msra.mxu0 %v2037
      %2145 = vmatprep.subr.bf16.mxu0 0
      %2146 = vmatpush1.bf16.msra.mxu0 %v2036
      %2147 = vmatprep.subr.bf16.mxu0 0
      %2148 = vmatpush2.bf16.msra.mxu0 0
      %2149 = vmatprep.subr.bf16.mxu0 0
      %2150 = vmatpush2.bf16.msra.mxu0 0
      %2151 = vmatprep.subr.bf16.mxu0 0
      %2152 = vmatpush2.bf16.msra.mxu0 0
      %2153 = vmatprep.subr.bf16.mxu0 0
      %2154 = vmatpush2.bf16.msra.mxu0 0
      %2155 = vmatprep.subr.bf16.mxu0 0
      %2156 = vmatpush2.bf16.msra.mxu0 0
      %2157 = vmatprep.subr.bf16.mxu0 0
      %2158 = vmatpush2.bf16.msra.mxu0 0
      %2159 = vmatprep.subr.bf16.mxu0 0
      %2160 = vmatpush2.bf16.msra.mxu0 0
      %2161 = vmatprep.subr.bf16.mxu0 0
      %2162 = vmatpush2.bf16.msra.mxu0 0
      %2163 = vmatprep.mubr.bf16.mxu0 0
      %2164 = vmatmul.mubr.bf16.gmra.mxu0 %v2129
      %v2165 = vpop.f32.mrf.mxu0
      %v2166 = vadd.f32 0.0, %v2165
      %v2167 = vpop.f32.mrf.mxu0
      %v2168 = vpop.f32.mrf.mxu0
      %v2169 = vadd.f32 0.0, %v2168
      %v2170 = vpop.f32.mrf.mxu0
      %2171 = vdwg.mxu0
      %v2173 = vsel %vm1122, %v2027, 0
      %2175 = vmatprep.subr.bf16.mxu0 0
      %2176 = vmatpush1.bf16.msra.mxu0 0
      %2177 = vmatprep.subr.bf16.mxu0 0
      %2178 = vmatpush1.bf16.msra.mxu0 0
      %2179 = vmatprep.subr.bf16.mxu0 0
      %2180 = vmatpush1.bf16.msra.mxu0 0
      %2181 = vmatprep.subr.bf16.mxu0 0
      %2182 = vmatpush1.bf16.msra.mxu0 0
      %2183 = vmatprep.subr.bf16.mxu0 0
      %2184 = vmatpush1.bf16.msra.mxu0 0
      %2185 = vmatprep.subr.bf16.mxu0 0
      %2186 = vmatpush1.bf16.msra.mxu0 0
      %2187 = vmatprep.subr.bf16.mxu0 0
      %2188 = vmatpush1.bf16.msra.mxu0 %v2037
      %2189 = vmatprep.subr.bf16.mxu0 0
      %2190 = vmatpush1.bf16.msra.mxu0 %v2036
      %2191 = vmatprep.subr.bf16.mxu0 0
      %2192 = vmatpush2.bf16.msra.mxu0 0
      %2193 = vmatprep.subr.bf16.mxu0 0
      %2194 = vmatpush2.bf16.msra.mxu0 0
      %2195 = vmatprep.subr.bf16.mxu0 0
      %2196 = vmatpush2.bf16.msra.mxu0 0
      %2197 = vmatprep.subr.bf16.mxu0 0
      %2198 = vmatpush2.bf16.msra.mxu0 0
      %2199 = vmatprep.subr.bf16.mxu0 0
      %2200 = vmatpush2.bf16.msra.mxu0 0
      %2201 = vmatprep.subr.bf16.mxu0 0
      %2202 = vmatpush2.bf16.msra.mxu0 0
      %2203 = vmatprep.subr.bf16.mxu0 0
      %2204 = vmatpush2.bf16.msra.mxu0 0
      %2205 = vmatprep.subr.bf16.mxu0 0
      %2206 = vmatpush2.bf16.msra.mxu0 0
      %2207 = vmatprep.mubr.bf16.mxu0 0
      %2208 = vmatmul.mubr.bf16.gmra.mxu0 %v2173
      %v2209 = vpop.f32.mrf.mxu0
      %v2210 = vadd.f32 0.0, %v2209
      %v2211 = vpop.f32.mrf.mxu0
      %v2212 = vpop.f32.mrf.mxu0
      %v2213 = vadd.f32 0.0, %v2212
      %v2214 = vpop.f32.mrf.mxu0
      %2215 = vdwg.mxu0
      %v2216 = vmax.f32 %v2078, 0.0
      %v2217 = vmax.f32 %v2081, 0.0
      %v2218 = vmax.f32 %v2122, 0.0
      %v2219 = vmax.f32 %v2125, 0.0
      %v2220 = vmax.f32 %v2166, 0.0
      %v2221 = vmax.f32 %v2169, 0.0
      %v2222 = vmax.f32 %v2210, 0.0
      %v2223 = vmax.f32 %v2213, 0.0
      %v2224 = vadd.f32 %v2216, %v1813
      %v2225 = vadd.f32 %v2217, %v1814
      %v2226 = vadd.f32 %v2218, %v1815
      %v2227 = vadd.f32 %v2219, %v1816
      %v2228 = vadd.f32 %v2220, %v1817
      %v2229 = vadd.f32 %v2221, %v1818
      %v2230 = vadd.f32 %v2222, %v1819
      %v2231 = vadd.f32 %v2223, %v1820
      %v2232 = vsel %vm1122, %v2224, 0.0
      %2233 = vadd.xlane.f32.xlu0 %v2232
      %v2234 = vpop.xlane.xlu0 %2233
      %v2235 = vsel %vm1318, %v2225, 0.0
      %2236 = vadd.xlane.f32.xlu0 %v2235
      %v2237 = vpop.xlane.xlu0 %2236
      %v2238 = vsel %vm1122, %v2226, 0.0
      %2239 = vadd.xlane.f32.xlu0 %v2238
      %v2240 = vpop.xlane.xlu0 %2239
      %v2241 = vsel %vm1318, %v2227, 0.0
      %2242 = vadd.xlane.f32.xlu0 %v2241
      %v2243 = vpop.xlane.xlu0 %2242
      %v2244 = vsel %vm1122, %v2228, 0.0
      %2245 = vadd.xlane.f32.xlu0 %v2244
      %v2246 = vpop.xlane.xlu0 %2245
      %v2247 = vsel %vm1318, %v2229, 0.0
      %2248 = vadd.xlane.f32.xlu0 %v2247
      %v2249 = vpop.xlane.xlu0 %2248
      %v2250 = vsel %vm1122, %v2230, 0.0
      %2251 = vadd.xlane.f32.xlu0 %v2250
      %v2252 = vpop.xlane.xlu0 %2251
      %v2253 = vsel %vm1318, %v2231, 0.0
      %2254 = vadd.xlane.f32.xlu0 %v2253
      %v2255 = vpop.xlane.xlu0 %2254
      %v2256 = vmul.f32 %v2234, %v1340
      %v2257 = vmul.f32 %v2237, %v1340
      %v2258 = vmul.f32 %v2240, %v1340
      %v2259 = vmul.f32 %v2243, %v1340
      %v2260 = vmul.f32 %v2246, %v1340
      %v2261 = vmul.f32 %v2249, %v1340
      %v2262 = vmul.f32 %v2252, %v1340
      %v2263 = vmul.f32 %v2255, %v1340
      %v2264 = vsub.f32 %v2224, %v2256
      %v2265 = vsub.f32 %v2225, %v2257
      %v2266 = vsub.f32 %v2226, %v2258
      %v2267 = vsub.f32 %v2227, %v2259
      %v2268 = vsub.f32 %v2228, %v2260
      %v2269 = vsub.f32 %v2229, %v2261
      %v2270 = vsub.f32 %v2230, %v2262
      %v2271 = vsub.f32 %v2231, %v2263
      %v2272 = vmul.f32 %v2264, %v2264
      %v2273 = vmul.f32 %v2265, %v2265
      %v2274 = vmul.f32 %v2266, %v2266
      %v2275 = vmul.f32 %v2267, %v2267
      %v2276 = vmul.f32 %v2268, %v2268
      %v2277 = vmul.f32 %v2269, %v2269
      %v2278 = vmul.f32 %v2270, %v2270
      %v2279 = vmul.f32 %v2271, %v2271
      %v2280 = vsel %vm1122, %v2272, 0.0
      %2281 = vadd.xlane.f32.xlu0 %v2280
      %v2282 = vpop.xlane.xlu0 %2281
      %v2283 = vsel %vm1318, %v2273, 0.0
      %2284 = vadd.xlane.f32.xlu0 %v2283
      %v2285 = vpop.xlane.xlu0 %2284
      %v2286 = vsel %vm1122, %v2274, 0.0
      %2287 = vadd.xlane.f32.xlu0 %v2286
      %v2288 = vpop.xlane.xlu0 %2287
      %v2289 = vsel %vm1318, %v2275, 0.0
      %2290 = vadd.xlane.f32.xlu0 %v2289
      %v2291 = vpop.xlane.xlu0 %2290
      %v2292 = vsel %vm1122, %v2276, 0.0
      %2293 = vadd.xlane.f32.xlu0 %v2292
      %v2294 = vpop.xlane.xlu0 %2293
      %v2295 = vsel %vm1318, %v2277, 0.0
      %2296 = vadd.xlane.f32.xlu0 %v2295
      %v2297 = vpop.xlane.xlu0 %2296
      %v2298 = vsel %vm1122, %v2278, 0.0
      %2299 = vadd.xlane.f32.xlu0 %v2298
      %v2300 = vpop.xlane.xlu0 %2299
      %v2301 = vsel %vm1318, %v2279, 0.0
      %2302 = vadd.xlane.f32.xlu0 %v2301
      %v2303 = vpop.xlane.xlu0 %2302
      %v2304 = vmul.f32 %v2282, %v1340
      %v2305 = vmul.f32 %v2285, %v1340
      %v2306 = vmul.f32 %v2288, %v1340
      %v2307 = vmul.f32 %v2291, %v1340
      %v2308 = vmul.f32 %v2294, %v1340
      %v2309 = vmul.f32 %v2297, %v1340
      %v2310 = vmul.f32 %v2300, %v1340
      %v2311 = vmul.f32 %v2303, %v1340
      %v2312 = vadd.f32 %v2304, 1e-05
      %v2313 = vadd.f32 %v2305, 1e-05
      %v2314 = vadd.f32 %v2306, 1e-05
      %v2315 = vadd.f32 %v2307, 1e-05
      %v2316 = vadd.f32 %v2308, 1e-05
      %v2317 = vadd.f32 %v2309, 1e-05
      %v2318 = vadd.f32 %v2310, 1e-05
      %v2319 = vadd.f32 %v2311, 1e-05
      %v2320 = vrsqrt.pop %v2312
      %v2321 = vrsqrt.pop %v2313
      %v2322 = vrsqrt.pop %v2314
      %v2323 = vrsqrt.pop %v2315
      %v2324 = vrsqrt.pop %v2316
      %v2325 = vrsqrt.pop %v2317
      %v2326 = vrsqrt.pop %v2318
      %v2327 = vrsqrt.pop %v2319
      %v2328 = vmul.f32 %v2264, %v2320
      %v2329 = vmul.f32 %v2265, %v2321
      %v2330 = vmul.f32 %v2266, %v2322
      %v2331 = vmul.f32 %v2267, %v2323
      %v2332 = vmul.f32 %v2268, %v2324
      %v2333 = vmul.f32 %v2269, %v2325
      %v2334 = vmul.f32 %v2270, %v2326
      %v2335 = vmul.f32 %v2271, %v2327
      %v2336 = vpack.c.bf16 %v2329, %v2328
      %v2337 = vpack.c.bf16 %v2331, %v2330
      %v2338 = vpack.c.bf16 %v2333, %v2332
      %v2339 = vpack.c.bf16 %v2335, %v2334
      %v2344 = vunpack.c.l.b16 %v1827
      %v2345 = vunpack.c.l.b16 %v1828
      %v2346 = vunpack.c.l.b16 %v1829
      %v2347 = vunpack.c.l.b16 %v1830
      %v2348 = vpack.c.b16 %v2345, %v2344
      %v2349 = vpack.c.b16 %v2347, %v2346
      %v2353 = vsel %vm1122, %v2336, 0
      %2355 = vmatprep.subr.bf16.mxu0 0
      %2356 = vmatpush1.bf16.msra.mxu0 0
      %2357 = vmatprep.subr.bf16.mxu0 0
      %2358 = vmatpush1.bf16.msra.mxu0 0
      %2359 = vmatprep.subr.bf16.mxu0 0
      %2360 = vmatpush1.bf16.msra.mxu0 0
      %2361 = vmatprep.subr.bf16.mxu0 0
      %2362 = vmatpush1.bf16.msra.mxu0 0
      %2363 = vmatprep.subr.bf16.mxu0 0
      %2364 = vmatpush1.bf16.msra.mxu0 0
      %2365 = vmatprep.subr.bf16.mxu0 0
      %2366 = vmatpush1.bf16.msra.mxu0 0
      %2367 = vmatprep.subr.bf16.mxu0 0
      %2368 = vmatpush1.bf16.msra.mxu0 %v2349
      %2369 = vmatprep.subr.bf16.mxu0 0
      %2370 = vmatpush1.bf16.msra.mxu0 %v2348
      %2371 = vmatprep.subr.bf16.mxu0 0
      %2372 = vmatpush2.bf16.msra.mxu0 0
      %2373 = vmatprep.subr.bf16.mxu0 0
      %2374 = vmatpush2.bf16.msra.mxu0 0
      %2375 = vmatprep.subr.bf16.mxu0 0
      %2376 = vmatpush2.bf16.msra.mxu0 0
      %2377 = vmatprep.subr.bf16.mxu0 0
      %2378 = vmatpush2.bf16.msra.mxu0 0
      %2379 = vmatprep.subr.bf16.mxu0 0
      %2380 = vmatpush2.bf16.msra.mxu0 0
      %2381 = vmatprep.subr.bf16.mxu0 0
      %2382 = vmatpush2.bf16.msra.mxu0 0
      %2383 = vmatprep.subr.bf16.mxu0 0
      %2384 = vmatpush2.bf16.msra.mxu0 0
      %2385 = vmatprep.subr.bf16.mxu0 0
      %2386 = vmatpush2.bf16.msra.mxu0 0
      %2387 = vmatprep.mubr.bf16.mxu0 0
      %2388 = vmatmul.mubr.bf16.gmra.mxu0 %v2353
      %v2389 = vpop.f32.mrf.mxu0
      %v2390 = vadd.f32 0.0, %v2389
      %v2391 = vpop.f32.mrf.mxu0
      %v2392 = vpop.f32.mrf.mxu0
      %v2393 = vadd.f32 0.0, %v2392
      %v2394 = vpop.f32.mrf.mxu0
      %2395 = vdwg.mxu0
      %v2397 = vsel %vm1122, %v2337, 0
      %2399 = vmatprep.subr.bf16.mxu0 0
      %2400 = vmatpush1.bf16.msra.mxu0 0
      %2401 = vmatprep.subr.bf16.mxu0 0
      %2402 = vmatpush1.bf16.msra.mxu0 0
      %2403 = vmatprep.subr.bf16.mxu0 0
      %2404 = vmatpush1.bf16.msra.mxu0 0
      %2405 = vmatprep.subr.bf16.mxu0 0
      %2406 = vmatpush1.bf16.msra.mxu0 0
      %2407 = vmatprep.subr.bf16.mxu0 0
      %2408 = vmatpush1.bf16.msra.mxu0 0
      %2409 = vmatprep.subr.bf16.mxu0 0
      %2410 = vmatpush1.bf16.msra.mxu0 0
      %2411 = vmatprep.subr.bf16.mxu0 0
      %2412 = vmatpush1.bf16.msra.mxu0 %v2349
      %2413 = vmatprep.subr.bf16.mxu0 0
      %2414 = vmatpush1.bf16.msra.mxu0 %v2348
      %2415 = vmatprep.subr.bf16.mxu0 0
      %2416 = vmatpush2.bf16.msra.mxu0 0
      %2417 = vmatprep.subr.bf16.mxu0 0
      %2418 = vmatpush2.bf16.msra.mxu0 0
      %2419 = vmatprep.subr.bf16.mxu0 0
      %2420 = vmatpush2.bf16.msra.mxu0 0
      %2421 = vmatprep.subr.bf16.mxu0 0
      %2422 = vmatpush2.bf16.msra.mxu0 0
      %2423 = vmatprep.subr.bf16.mxu0 0
      %2424 = vmatpush2.bf16.msra.mxu0 0
      %2425 = vmatprep.subr.bf16.mxu0 0
      %2426 = vmatpush2.bf16.msra.mxu0 0
      %2427 = vmatprep.subr.bf16.mxu0 0
      %2428 = vmatpush2.bf16.msra.mxu0 0
      %2429 = vmatprep.subr.bf16.mxu0 0
      %2430 = vmatpush2.bf16.msra.mxu0 0
      %2431 = vmatprep.mubr.bf16.mxu0 0
      %2432 = vmatmul.mubr.bf16.gmra.mxu0 %v2397
      %v2433 = vpop.f32.mrf.mxu0
      %v2434 = vadd.f32 0.0, %v2433
      %v2435 = vpop.f32.mrf.mxu0
      %v2436 = vpop.f32.mrf.mxu0
      %v2437 = vadd.f32 0.0, %v2436
      %v2438 = vpop.f32.mrf.mxu0
      %2439 = vdwg.mxu0
      %v2441 = vsel %vm1122, %v2338, 0
      %2443 = vmatprep.subr.bf16.mxu0 0
      %2444 = vmatpush1.bf16.msra.mxu0 0
      %2445 = vmatprep.subr.bf16.mxu0 0
      %2446 = vmatpush1.bf16.msra.mxu0 0
      %2447 = vmatprep.subr.bf16.mxu0 0
      %2448 = vmatpush1.bf16.msra.mxu0 0
      %2449 = vmatprep.subr.bf16.mxu0 0
      %2450 = vmatpush1.bf16.msra.mxu0 0
      %2451 = vmatprep.subr.bf16.mxu0 0
      %2452 = vmatpush1.bf16.msra.mxu0 0
      %2453 = vmatprep.subr.bf16.mxu0 0
      %2454 = vmatpush1.bf16.msra.mxu0 0
      %2455 = vmatprep.subr.bf16.mxu0 0
      %2456 = vmatpush1.bf16.msra.mxu0 %v2349
      %2457 = vmatprep.subr.bf16.mxu0 0
      %2458 = vmatpush1.bf16.msra.mxu0 %v2348
      %2459 = vmatprep.subr.bf16.mxu0 0
      %2460 = vmatpush2.bf16.msra.mxu0 0
      %2461 = vmatprep.subr.bf16.mxu0 0
      %2462 = vmatpush2.bf16.msra.mxu0 0
      %2463 = vmatprep.subr.bf16.mxu0 0
      %2464 = vmatpush2.bf16.msra.mxu0 0
      %2465 = vmatprep.subr.bf16.mxu0 0
      %2466 = vmatpush2.bf16.msra.mxu0 0
      %2467 = vmatprep.subr.bf16.mxu0 0
      %2468 = vmatpush2.bf16.msra.mxu0 0
      %2469 = vmatprep.subr.bf16.mxu0 0
      %2470 = vmatpush2.bf16.msra.mxu0 0
      %2471 = vmatprep.subr.bf16.mxu0 0
      %2472 = vmatpush2.bf16.msra.mxu0 0
      %2473 = vmatprep.subr.bf16.mxu0 0
      %2474 = vmatpush2.bf16.msra.mxu0 0
      %2475 = vmatprep.mubr.bf16.mxu0 0
      %2476 = vmatmul.mubr.bf16.gmra.mxu0 %v2441
      %v2477 = vpop.f32.mrf.mxu0
      %v2478 = vadd.f32 0.0, %v2477
      %v2479 = vpop.f32.mrf.mxu0
      %v2480 = vpop.f32.mrf.mxu0
      %v2481 = vadd.f32 0.0, %v2480
      %v2482 = vpop.f32.mrf.mxu0
      %2483 = vdwg.mxu0
      %v2485 = vsel %vm1122, %v2339, 0
      %2487 = vmatprep.subr.bf16.mxu0 0
      %2488 = vmatpush1.bf16.msra.mxu0 0
      %2489 = vmatprep.subr.bf16.mxu0 0
      %2490 = vmatpush1.bf16.msra.mxu0 0
      %2491 = vmatprep.subr.bf16.mxu0 0
      %2492 = vmatpush1.bf16.msra.mxu0 0
      %2493 = vmatprep.subr.bf16.mxu0 0
      %2494 = vmatpush1.bf16.msra.mxu0 0
      %2495 = vmatprep.subr.bf16.mxu0 0
      %2496 = vmatpush1.bf16.msra.mxu0 0
      %2497 = vmatprep.subr.bf16.mxu0 0
      %2498 = vmatpush1.bf16.msra.mxu0 0
      %2499 = vmatprep.subr.bf16.mxu0 0
      %2500 = vmatpush1.bf16.msra.mxu0 %v2349
      %2501 = vmatprep.subr.bf16.mxu0 0
      %2502 = vmatpush1.bf16.msra.mxu0 %v2348
      %2503 = vmatprep.subr.bf16.mxu0 0
      %2504 = vmatpush2.bf16.msra.mxu0 0
      %2505 = vmatprep.subr.bf16.mxu0 0
      %2506 = vmatpush2.bf16.msra.mxu0 0
      %2507 = vmatprep.subr.bf16.mxu0 0
      %2508 = vmatpush2.bf16.msra.mxu0 0
      %2509 = vmatprep.subr.bf16.mxu0 0
      %2510 = vmatpush2.bf16.msra.mxu0 0
      %2511 = vmatprep.subr.bf16.mxu0 0
      %2512 = vmatpush2.bf16.msra.mxu0 0
      %2513 = vmatprep.subr.bf16.mxu0 0
      %2514 = vmatpush2.bf16.msra.mxu0 0
      %2515 = vmatprep.subr.bf16.mxu0 0
      %2516 = vmatpush2.bf16.msra.mxu0 0
      %2517 = vmatprep.subr.bf16.mxu0 0
      %2518 = vmatpush2.bf16.msra.mxu0 0
      %2519 = vmatprep.mubr.bf16.mxu0 0
      %2520 = vmatmul.mubr.bf16.gmra.mxu0 %v2485
      %v2521 = vpop.f32.mrf.mxu0
      %v2522 = vadd.f32 0.0, %v2521
      %v2523 = vpop.f32.mrf.mxu0
      %v2524 = vpop.f32.mrf.mxu0
      %v2525 = vadd.f32 0.0, %v2524
      %v2526 = vpop.f32.mrf.mxu0
      %2527 = vdwg.mxu0
      %v2528 = vmax.f32 %v2390, 0.0
      %v2529 = vmax.f32 %v2393, 0.0
      %v2530 = vmax.f32 %v2434, 0.0
      %v2531 = vmax.f32 %v2437, 0.0
      %v2532 = vmax.f32 %v2478, 0.0
      %v2533 = vmax.f32 %v2481, 0.0
      %v2534 = vmax.f32 %v2522, 0.0
      %v2535 = vmax.f32 %v2525, 0.0
      %v2536 = vpack.c.bf16 %v2529, %v2528
      %v2537 = vpack.c.bf16 %v2531, %v2530
      %v2538 = vpack.c.bf16 %v2533, %v2532
      %v2539 = vpack.c.bf16 %v2535, %v2534
      %v2544 = vunpack.c.l.b16 %v1832
      %v2545 = vunpack.c.l.b16 %v1833
      %v2546 = vunpack.c.l.b16 %v1834
      %v2547 = vunpack.c.l.b16 %v1835
      %v2548 = vpack.c.b16 %v2545, %v2544
      %v2549 = vpack.c.b16 %v2547, %v2546
      %v2553 = vsel %vm1122, %v2536, 0
      %2555 = vmatprep.subr.bf16.mxu0 0
      %2556 = vmatpush1.bf16.msra.mxu0 0
      %2557 = vmatprep.subr.bf16.mxu0 0
      %2558 = vmatpush1.bf16.msra.mxu0 0
      %2559 = vmatprep.subr.bf16.mxu0 0
      %2560 = vmatpush1.bf16.msra.mxu0 0
      %2561 = vmatprep.subr.bf16.mxu0 0
      %2562 = vmatpush1.bf16.msra.mxu0 0
      %2563 = vmatprep.subr.bf16.mxu0 0
      %2564 = vmatpush1.bf16.msra.mxu0 0
      %2565 = vmatprep.subr.bf16.mxu0 0
      %2566 = vmatpush1.bf16.msra.mxu0 0
      %2567 = vmatprep.subr.bf16.mxu0 0
      %2568 = vmatpush1.bf16.msra.mxu0 %v2549
      %2569 = vmatprep.subr.bf16.mxu0 0
      %2570 = vmatpush1.bf16.msra.mxu0 %v2548
      %2571 = vmatprep.subr.bf16.mxu0 0
      %2572 = vmatpush2.bf16.msra.mxu0 0
      %2573 = vmatprep.subr.bf16.mxu0 0
      %2574 = vmatpush2.bf16.msra.mxu0 0
      %2575 = vmatprep.subr.bf16.mxu0 0
      %2576 = vmatpush2.bf16.msra.mxu0 0
      %2577 = vmatprep.subr.bf16.mxu0 0
      %2578 = vmatpush2.bf16.msra.mxu0 0
      %2579 = vmatprep.subr.bf16.mxu0 0
      %2580 = vmatpush2.bf16.msra.mxu0 0
      %2581 = vmatprep.subr.bf16.mxu0 0
      %2582 = vmatpush2.bf16.msra.mxu0 0
      %2583 = vmatprep.subr.bf16.mxu0 0
      %2584 = vmatpush2.bf16.msra.mxu0 0
      %2585 = vmatprep.subr.bf16.mxu0 0
      %2586 = vmatpush2.bf16.msra.mxu0 0
      %2587 = vmatprep.mubr.bf16.mxu0 0
      %2588 = vmatmul.mubr.bf16.gmra.mxu0 %v2553
      %v2589 = vpop.f32.mrf.mxu0
      %v2590 = vadd.f32 0.0, %v2589
      %v2591 = vpop.f32.mrf.mxu0
      %v2592 = vpop.f32.mrf.mxu0
      %v2593 = vadd.f32 0.0, %v2592
      %v2594 = vpop.f32.mrf.mxu0
      %2595 = vdwg.mxu0
      %v2597 = vsel %vm1122, %v2537, 0
      %2599 = vmatprep.subr.bf16.mxu0 0
      %2600 = vmatpush1.bf16.msra.mxu0 0
      %2601 = vmatprep.subr.bf16.mxu0 0
      %2602 = vmatpush1.bf16.msra.mxu0 0
      %2603 = vmatprep.subr.bf16.mxu0 0
      %2604 = vmatpush1.bf16.msra.mxu0 0
      %2605 = vmatprep.subr.bf16.mxu0 0
      %2606 = vmatpush1.bf16.msra.mxu0 0
      %2607 = vmatprep.subr.bf16.mxu0 0
      %2608 = vmatpush1.bf16.msra.mxu0 0
      %2609 = vmatprep.subr.bf16.mxu0 0
      %2610 = vmatpush1.bf16.msra.mxu0 0
      %2611 = vmatprep.subr.bf16.mxu0 0
      %2612 = vmatpush1.bf16.msra.mxu0 %v2549
      %2613 = vmatprep.subr.bf16.mxu0 0
      %2614 = vmatpush1.bf16.msra.mxu0 %v2548
      %2615 = vmatprep.subr.bf16.mxu0 0
      %2616 = vmatpush2.bf16.msra.mxu0 0
      %2617 = vmatprep.subr.bf16.mxu0 0
      %2618 = vmatpush2.bf16.msra.mxu0 0
      %2619 = vmatprep.subr.bf16.mxu0 0
      %2620 = vmatpush2.bf16.msra.mxu0 0
      %2621 = vmatprep.subr.bf16.mxu0 0
      %2622 = vmatpush2.bf16.msra.mxu0 0
      %2623 = vmatprep.subr.bf16.mxu0 0
      %2624 = vmatpush2.bf16.msra.mxu0 0
      %2625 = vmatprep.subr.bf16.mxu0 0
      %2626 = vmatpush2.bf16.msra.mxu0 0
      %2627 = vmatprep.subr.bf16.mxu0 0
      %2628 = vmatpush2.bf16.msra.mxu0 0
      %2629 = vmatprep.subr.bf16.mxu0 0
      %2630 = vmatpush2.bf16.msra.mxu0 0
      %2631 = vmatprep.mubr.bf16.mxu0 0
      %2632 = vmatmul.mubr.bf16.gmra.mxu0 %v2597
      %v2633 = vpop.f32.mrf.mxu0
      %v2634 = vadd.f32 0.0, %v2633
      %v2635 = vpop.f32.mrf.mxu0
      %v2636 = vpop.f32.mrf.mxu0
      %v2637 = vadd.f32 0.0, %v2636
      %v2638 = vpop.f32.mrf.mxu0
      %2639 = vdwg.mxu0
      %v2641 = vsel %vm1122, %v2538, 0
      %2643 = vmatprep.subr.bf16.mxu0 0
      %2644 = vmatpush1.bf16.msra.mxu0 0
      %2645 = vmatprep.subr.bf16.mxu0 0
      %2646 = vmatpush1.bf16.msra.mxu0 0
      %2647 = vmatprep.subr.bf16.mxu0 0
      %2648 = vmatpush1.bf16.msra.mxu0 0
      %2649 = vmatprep.subr.bf16.mxu0 0
      %2650 = vmatpush1.bf16.msra.mxu0 0
      %2651 = vmatprep.subr.bf16.mxu0 0
      %2652 = vmatpush1.bf16.msra.mxu0 0
      %2653 = vmatprep.subr.bf16.mxu0 0
      %2654 = vmatpush1.bf16.msra.mxu0 0
      %2655 = vmatprep.subr.bf16.mxu0 0
      %2656 = vmatpush1.bf16.msra.mxu0 %v2549
      %2657 = vmatprep.subr.bf16.mxu0 0
      %2658 = vmatpush1.bf16.msra.mxu0 %v2548
      %2659 = vmatprep.subr.bf16.mxu0 0
      %2660 = vmatpush2.bf16.msra.mxu0 0
      %2661 = vmatprep.subr.bf16.mxu0 0
      %2662 = vmatpush2.bf16.msra.mxu0 0
      %2663 = vmatprep.subr.bf16.mxu0 0
      %2664 = vmatpush2.bf16.msra.mxu0 0
      %2665 = vmatprep.subr.bf16.mxu0 0
      %2666 = vmatpush2.bf16.msra.mxu0 0
      %2667 = vmatprep.subr.bf16.mxu0 0
      %2668 = vmatpush2.bf16.msra.mxu0 0
      %2669 = vmatprep.subr.bf16.mxu0 0
      %2670 = vmatpush2.bf16.msra.mxu0 0
      %2671 = vmatprep.subr.bf16.mxu0 0
      %2672 = vmatpush2.bf16.msra.mxu0 0
      %2673 = vmatprep.subr.bf16.mxu0 0
      %2674 = vmatpush2.bf16.msra.mxu0 0
      %2675 = vmatprep.mubr.bf16.mxu0 0
      %2676 = vmatmul.mubr.bf16.gmra.mxu0 %v2641
      %v2677 = vpop.f32.mrf.mxu0
      %v2678 = vadd.f32 0.0, %v2677
      %v2679 = vpop.f32.mrf.mxu0
      %v2680 = vpop.f32.mrf.mxu0
      %v2681 = vadd.f32 0.0, %v2680
      %v2682 = vpop.f32.mrf.mxu0
      %2683 = vdwg.mxu0
      %v2685 = vsel %vm1122, %v2539, 0
      %2687 = vmatprep.subr.bf16.mxu0 0
      %2688 = vmatpush1.bf16.msra.mxu0 0
      %2689 = vmatprep.subr.bf16.mxu0 0
      %2690 = vmatpush1.bf16.msra.mxu0 0
      %2691 = vmatprep.subr.bf16.mxu0 0
      %2692 = vmatpush1.bf16.msra.mxu0 0
      %2693 = vmatprep.subr.bf16.mxu0 0
      %2694 = vmatpush1.bf16.msra.mxu0 0
      %2695 = vmatprep.subr.bf16.mxu0 0
      %2696 = vmatpush1.bf16.msra.mxu0 0
      %2697 = vmatprep.subr.bf16.mxu0 0
      %2698 = vmatpush1.bf16.msra.mxu0 0
      %2699 = vmatprep.subr.bf16.mxu0 0
      %2700 = vmatpush1.bf16.msra.mxu0 %v2549
      %2701 = vmatprep.subr.bf16.mxu0 0
      %2702 = vmatpush1.bf16.msra.mxu0 %v2548
      %2703 = vmatprep.subr.bf16.mxu0 0
      %2704 = vmatpush2.bf16.msra.mxu0 0
      %2705 = vmatprep.subr.bf16.mxu0 0
      %2706 = vmatpush2.bf16.msra.mxu0 0
      %2707 = vmatprep.subr.bf16.mxu0 0
      %2708 = vmatpush2.bf16.msra.mxu0 0
      %2709 = vmatprep.subr.bf16.mxu0 0
      %2710 = vmatpush2.bf16.msra.mxu0 0
      %2711 = vmatprep.subr.bf16.mxu0 0
      %2712 = vmatpush2.bf16.msra.mxu0 0
      %2713 = vmatprep.subr.bf16.mxu0 0
      %2714 = vmatpush2.bf16.msra.mxu0 0
      %2715 = vmatprep.subr.bf16.mxu0 0
      %2716 = vmatpush2.bf16.msra.mxu0 0
      %2717 = vmatprep.subr.bf16.mxu0 0
      %2718 = vmatpush2.bf16.msra.mxu0 0
      %2719 = vmatprep.mubr.bf16.mxu0 0
      %2720 = vmatmul.mubr.bf16.gmra.mxu0 %v2685
      %v2721 = vpop.f32.mrf.mxu0
      %v2722 = vadd.f32 0.0, %v2721
      %v2723 = vpop.f32.mrf.mxu0
      %v2724 = vpop.f32.mrf.mxu0
      %v2725 = vadd.f32 0.0, %v2724
      %v2726 = vpop.f32.mrf.mxu0
      %2727 = vdwg.mxu0
      %v2728 = vadd.f32 %v2328, %v2590
      %v2729 = vadd.f32 %v2329, %v2593
      %v2730 = vadd.f32 %v2330, %v2634
      %v2731 = vadd.f32 %v2331, %v2637
      %v2732 = vadd.f32 %v2332, %v2678
      %v2733 = vadd.f32 %v2333, %v2681
      %v2734 = vadd.f32 %v2334, %v2722
      %v2735 = vadd.f32 %v2335, %v2725
      %v2736 = vld [vmem:[%s7] sm:$0x1]
      %v2738 = vlaneseq
      %v2739 = vshrl.u32 %v2738, 7
      %v2740 = vsub.s32 0, %v2739
      %v2741 = vrot.slane %v2736, %v2740
      %v2743 = vmul.f32 %v2728, %v2741
      %v2744 = vmul.f32 %v2729, %v2741
      %v2745 = vmul.f32 %v2730, %v2741
      %v2746 = vmul.f32 %v2731, %v2741
      %v2747 = vmul.f32 %v2732, %v2741
      %v2748 = vmul.f32 %v2733, %v2741
      %v2749 = vmul.f32 %v2734, %v2741
      %v2750 = vmul.f32 %v2735, %v2741
      %v2751 = vsel %vm1122, %v2743, 0.0
      %2752 = vadd.xlane.f32.xlu0 %v2751
      %v2753 = vpop.xlane.xlu0 %2752
      %v2754 = vsel %vm1318, %v2744, 0.0
      %2755 = vadd.xlane.f32.xlu0 %v2754
      %v2756 = vpop.xlane.xlu0 %2755
      %v2757 = vsel %vm1122, %v2745, 0.0
      %2758 = vadd.xlane.f32.xlu0 %v2757
      %v2759 = vpop.xlane.xlu0 %2758
      %v2760 = vsel %vm1318, %v2746, 0.0
      %2761 = vadd.xlane.f32.xlu0 %v2760
      %v2762 = vpop.xlane.xlu0 %2761
      %v2763 = vsel %vm1122, %v2747, 0.0
      %2764 = vadd.xlane.f32.xlu0 %v2763
      %v2765 = vpop.xlane.xlu0 %2764
      %v2766 = vsel %vm1318, %v2748, 0.0
      %2767 = vadd.xlane.f32.xlu0 %v2766
      %v2768 = vpop.xlane.xlu0 %2767
      %v2769 = vsel %vm1122, %v2749, 0.0
      %2770 = vadd.xlane.f32.xlu0 %v2769
      %v2771 = vpop.xlane.xlu0 %2770
      %v2772 = vsel %vm1318, %v2750, 0.0
      %2773 = vadd.xlane.f32.xlu0 %v2772
      %v2774 = vpop.xlane.xlu0 %2773
      %s2775 = sld [smem:[#allocation2]]
      %v2776 = vstv %s2775
      %v2777 = vadd.f32 %v2753, %v2776
      %v2778 = vadd.f32 %v2756, %v2776
      %v2779 = vadd.f32 %v2759, %v2776
      %v2780 = vadd.f32 %v2762, %v2776
      %v2781 = vadd.f32 %v2765, %v2776
      %v2782 = vadd.f32 %v2768, %v2776
      %v2783 = vadd.f32 %v2771, %v2776
      %v2784 = vadd.f32 %v2774, %v2776
      %v2785 = vxor.u32 %v2777, 2147483648
      %v2786 = vxor.u32 %v2778, 2147483648
      %v2787 = vxor.u32 %v2779, 2147483648
      %v2788 = vxor.u32 %v2780, 2147483648
      %v2789 = vxor.u32 %v2781, 2147483648
      %v2790 = vxor.u32 %v2782, 2147483648
      %v2791 = vxor.u32 %v2783, 2147483648
      %v2792 = vxor.u32 %v2784, 2147483648
      %v2793 = vmul.f32 %v2785, 1.442695
      %v2794 = vpow.pop %v2793
      %v2795 = vmul.f32 %v2786, 1.442695
      %v2796 = vpow.pop %v2795
      %v2797 = vmul.f32 %v2787, 1.442695
      %v2798 = vpow.pop %v2797
      %v2799 = vmul.f32 %v2788, 1.442695
      %v2800 = vpow.pop %v2799
      %v2801 = vmul.f32 %v2789, 1.442695
      %v2802 = vpow.pop %v2801
      %v2803 = vmul.f32 %v2790, 1.442695
      %v2804 = vpow.pop %v2803
      %v2805 = vmul.f32 %v2791, 1.442695
      %v2806 = vpow.pop %v2805
      %v2807 = vmul.f32 %v2792, 1.442695
      %v2808 = vpow.pop %v2807
      %v2809 = vadd.f32 %v2794, 1.0
      %v2810 = vadd.f32 %v2796, 1.0
      %v2811 = vadd.f32 %v2798, 1.0
      %v2812 = vadd.f32 %v2800, 1.0
      %v2813 = vadd.f32 %v2802, 1.0
      %v2814 = vadd.f32 %v2804, 1.0
      %v2815 = vadd.f32 %v2806, 1.0
      %v2816 = vadd.f32 %v2808, 1.0
      %v2817 = vrcp.pop %v2809
      %v2818 = vmul.f32 1.0, %v2817
      %v2819 = vrcp.pop %v2810
      %v2820 = vmul.f32 1.0, %v2819
      %v2821 = vrcp.pop %v2811
      %v2822 = vmul.f32 1.0, %v2821
      %v2823 = vrcp.pop %v2812
      %v2824 = vmul.f32 1.0, %v2823
      %v2825 = vrcp.pop %v2813
      %v2826 = vmul.f32 1.0, %v2825
      %v2827 = vrcp.pop %v2814
      %v2828 = vmul.f32 1.0, %v2827
      %v2829 = vrcp.pop %v2815
      %v2830 = vmul.f32 1.0, %v2829
      %v2831 = vrcp.pop %v2816
      %v2832 = vmul.f32 1.0, %v2831
      %vm2833 = vcmask 7168
      %2834 = vst.msk [vmem:[%s365] sm:$0xff] %vm2833, %v2818
      %vm2835 = vcmask 0
      %2836 = vst.msk [vmem:[%s365 + $0x8] sm:$0x1] %vm2835, %v2820
      %2837 = vst.msk [vmem:[%s365 + $0x10] sm:$0xff] %vm2833, %v2822
      %2838 = vst.msk [vmem:[%s365 + $0x18] sm:$0x1] %vm2835, %v2824
      %2839 = vst.msk [vmem:[%s365 + $0x20] sm:$0xff] %vm2833, %v2826
      %2840 = vst.msk [vmem:[%s365 + $0x28] sm:$0x1] %vm2835, %v2828
      %2841 = vst.msk [vmem:[%s365 + $0x30] sm:$0xff] %vm2833, %v2830
      %2842 = vst.msk [vmem:[%s365 + $0x38] sm:$0x1] %vm2835, %v2832
      %s2843 = smul.u32 4, %s21
      %p2844 = scmp.lt.s32.totalorder %s2843, 7
      %s2845 = scalar_select %p2844, %s2843, 7
      %s2846 = smul.addr %s2845, 2
      %s2847 = smul.addr %s2846, 8
      %s2848 = scalar_lea.vmem %s9, %s2847
      // Predicated region
      $region57: #{backbone_forward.1} parent=55 // pred_check
        %p2849 = pneg %p238
      $region58: #{backbone_forward.1} parent=55 // pred_check_branch
        %2851 = sbr.rel (%p2849) target = $region60
      $region59: #{backbone_forward.1} parent=55 // pred_region
        %s2852 = smul.u32 4, %s21
      $region60: #{backbone_forward.1} parent=55 // pred_fallthru
        _
    $region56: #{backbone_forward.1} parent=5 // pred_fallthru
      _
    %p2853 = scmp.le.s32.totalorder 2, %s16
    // Predicated region
    $region61: #{backbone_forward.1} parent=5 // pred_check
      %p2854 = pneg %p2853
    $region62: #{backbone_forward.1} parent=5 // pred_check_branch
      %2856 = sbr.rel (%p2854) target = $region64
    $region63: #{backbone_forward.1} parent=5 // pred_region
      %s2857 = ssub.s32 %s16, 2
      // Predicated region
      $region65: #{backbone_forward.1} parent=63 // pred_check
        %p2858 = pneg %p244
      $region66: #{backbone_forward.1} parent=63 // pred_check_branch
        %2860 = sbr.rel (%p2858) target = $region68
      $region67: #{backbone_forward.1} parent=63 // pred_region
        %s2861 = smul.u32 4, %s22
        %p2862 = scmp.lt.s32.totalorder %s2861, 7
        %s2863 = scalar_select %p2862, %s2861, 7
        %s2864 = smul.addr %s2863, 2
        %s2865 = smul.addr %s2864, 8
        %s2866 = scalar_lea.vmem %s9, %s2865
      $region68: #{backbone_forward.1} parent=63 // pred_fallthru
        _
    $region64: #{backbone_forward.1} parent=5 // pred_fallthru
      _
  $region6: #{backbone_forward.1} parent=0 // loop_footer
    %s20 = sadd.s32 1, %s16
  $region7: #{backbone_forward.1} parent=0 // loop_footer_branch
    %15 = sbr.rel target = $region3
  $region8: #{backbone_forward.1} parent=0 // loop_exit
    _

</llo_original>
